<compile_context>
chip_gen: v6e
topology: v6e:2x2x1
jax: 0.10.0
libtpu: 0.0.40
codegen_flags: <defaults>
</compile_context>

<pallas_src>
import jax
import jax.numpy as jnp
import numpy as np
from jax.experimental import pallas as pl
from jax.experimental.pallas import tpu as pltpu


_LAYER_CFG = [
    # (Cin, Cout, K, stride, pad)  -- from TrunkNet.__init__
    (1, 16, 12, 2, 5),
    (16, 16, 12, 2, 5),
    (16, 24, 9, 2, 4),
    (24, 24, 9, 2, 4),
    (24, 32, 6, 2, 2),
]

_SLAB_LANES = 32              # max Cout across layers (lane width of weight slab)
_MXU_DTYPE = jnp.float32      # jnp.bfloat16 -> 2x MXU on v6e/v7x (only at scale)


def _round_up(x, m):
    return (x + m - 1) // m * m


def _derive_geometry(L_in):
    """Static per-layer geometry + weight-slab row offsets."""
    layers, L, off = [], L_in, 0
    for (cin, cout, k, s, p) in _LAYER_CFG:
        lout = (L + 2 * p - k) // s + 1
        wrows = k * cin + 1                       # +1: folded bias row
        layers.append(dict(cin=cin, cout=cout, k=k, stride=s, pad=p,
                           lin=L, lout=lout,
                           rows=_round_up(L + 2 * p, 8),  # padded-activation rows
                           wrows=wrows, woff=off))
        off += _round_up(wrows, 8)                # keep slab offsets 8-aligned
        L = lout
    return layers, off


# ---------------------------------------------------------------------------
# Fused 5-layer kernel.
#   x_ref : (1, L_in, 1)          one batch element, (length, channel) layout
#   w_ref : (W_ROWS, 32)          all folded weight blocks + bias rows, packed
#   o_ref : (1, 32, L_final)      NCL output block
#   scratch: 5 padded-activation buffers (rows_l, cin_l) + one shared im2col
#            slab (max_lout, max(K*cin+1)).
# ---------------------------------------------------------------------------
def _make_fused_kernel(layers):
    n_layers = len(layers)

    def kernel(x_ref, w_ref, o_ref, *scratch):
        act = scratch[:n_layers]
        col = scratch[n_layers]

        # (1) Zero only the pad head / tail rows of every activation buffer.
        #     Interiors are fully overwritten below; the right-pad rows are
        #     read by the conv and must be zero every step.
        for li, ly in enumerate(layers):
            head, lin, rows, cin = ly["pad"], ly["lin"], ly["rows"], ly["cin"]
            if head > 0:
                act[li][0:head, :] = jnp.zeros((head, cin), jnp.float32)
            tail = rows - (head + lin)
            if tail > 0:
                act[li][head + lin:rows, :] = jnp.zeros((tail, cin), jnp.float32)

        # (2) Layer-0 input into the interior of its padded buffer.
        ly0 = layers[0]
        act[0][ly0["pad"]:ly0["pad"] + ly0["lin"], :] = x_ref[0]

        y = None
        for li, ly in enumerate(layers):
            cin, cout, K = ly["cin"], ly["cout"], ly["k"]
            stride, lout = ly["stride"], ly["lout"]
            kc = K * cin

            # (3a) im2col slab (lout, K*cin + 1): conv is evaluated only at the
            #      lout output rows via strided-sublane reads; the last column
            #      is all-ones and meets the folded bias row of the weights.
            for k in range(K):
                col[0:lout, k * cin:(k + 1) * cin] = (
                    act[li][pl.ds(k, lout, stride=stride), :])
            col[0:lout, kc:kc + 1] = jnp.ones((lout, 1), jnp.float32)

            # (3b) One MXU matmul per layer (BN scale folded into the weights,
            #      conv-bias + BN shift ride in the extra weight row).
            w = w_ref[ly["woff"]:ly["woff"] + ly["wrows"], 0:cout]
            y = jnp.dot(col[0:lout, 0:kc + 1].astype(_MXU_DTYPE),
                        w.astype(_MXU_DTYPE),
                        preferred_element_type=jnp.float32)
            y = jnp.maximum(y, 0.0)                       # ReLU epilogue (f32)

            # (3c) Stage activations for the next layer -- stays in VMEM.
            if li + 1 < n_layers:
                nxt = layers[li + 1]
                act[li + 1][nxt["pad"]:nxt["pad"] + nxt["lin"], :] = y

        # (4) Emit NCL directly: (L_final, C_final) -> (C_final, L_final).
        #     No separate XLA transpose kernel after the pallas_call.
        o_ref[0] = jnp.transpose(y).astype(o_ref.dtype)

    return kernel


def _build_call(N, L_in):
    layers, w_rows = _derive_geometry(L_in)
    L_f, C_f = layers[-1]["lout"], layers[-1]["cout"]
    max_lout = max(ly["lout"] for ly in layers)
    max_cols = max(ly["wrows"] for ly in layers)

    scratch = [pltpu.VMEM((ly["rows"], ly["cin"]), jnp.float32) for ly in layers]
    scratch.append(pltpu.VMEM((max_lout, max_cols), jnp.float32))   # im2col slab

    call = pl.pallas_call(
        _make_fused_kernel(layers),
        out_shape=jax.ShapeDtypeStruct((N, C_f, L_f), jnp.float32),
        grid=(N,),
        in_specs=[
            pl.BlockSpec((1, L_in, layers[0]["cin"]), lambda n: (n, 0, 0)),
            pl.BlockSpec((w_rows, _SLAB_LANES), lambda n: (0, 0)),   # resident
        ],
        out_specs=pl.BlockSpec((1, C_f, L_f), lambda n: (n, 0, 0)),
        scratch_shapes=scratch,
        compiler_params=pltpu.CompilerParams(
            dimension_semantics=("parallel",)),
    )
    return call, (L_f, C_f)


# ---------------------------------------------------------------------------
# Host-side parameter preparation: fold inference BatchNorm into the conv and
# pack all layers into one constant, zero-padded weight slab.
# ---------------------------------------------------------------------------
def pack_params(params, L_in, eps=1e-5):
    layers, w_rows = _derive_geometry(L_in)
    slab = np.zeros((w_rows, _SLAB_LANES), np.float32)
    for p, ly in zip(params, layers):
        w = np.asarray(p["w"], np.float32)                 # (cout, cin, k)
        b = np.asarray(p["b"], np.float32)
        gamma = np.asarray(p["gamma"], np.float32)
        beta = np.asarray(p["beta"], np.float32)
        rmean = np.asarray(p["rmean"], np.float32)
        rvar = np.asarray(p["rvar"], np.float32)

        scale = gamma / np.sqrt(rvar + eps)                # (cout,)
        # rows ordered as (tap, cin) to match the im2col column order
        w_mat = np.transpose(w, (2, 1, 0)).reshape(
            ly["k"] * ly["cin"], ly["cout"]) * scale[None, :]
        bias = (b - rmean) * scale + beta

        o = ly["woff"]
        slab[o:o + ly["k"] * ly["cin"], :ly["cout"]] = w_mat
        slab[o + ly["k"] * ly["cin"], :ly["cout"]] = bias  # folded-bias row
    return jnp.asarray(slab)


def trunknet_forward(x_ncl, w_slab):
    """x_ncl: (N, 1, L) PyTorch NCL layout -> (N, 32, L_out) NCL output."""
    N, _, L = x_ncl.shape
    # (N,1,L) -> (N,L,1): metadata-only reshape (channel dim is 1), no copy.
    x_nlc = jnp.reshape(x_ncl.astype(jnp.float32), (N, L, 1))
    call, _ = _build_call(N, L)
    return call(x_nlc, w_slab)


# ---------------------------------------------------------------------------
# Deterministic synthetic parameters (shapes from TrunkNet.__init__)
# ---------------------------------------------------------------------------
def init_params(key):
    params = []
    for (cin, cout, k, s, p) in _LAYER_CFG:
        key, k1, k2, k3, k4, k5, k6 = jax.random.split(key, 7)
        params.append(dict(
            w=jax.random.normal(k1, (cout, cin, k), jnp.float32) * 0.1,
            b=jax.random.normal(k2, (cout,), jnp.float32) * 0.1,
            gamma=1.0 + 0.1 * jax.random.normal(k3, (cout,), jnp.float32),
            beta=0.1 * jax.random.normal(k4, (cout,), jnp.float32),
            rmean=0.1 * jax.random.normal(k5, (cout,), jnp.float32),
            rvar=jnp.abs(jax.random.normal(k6, (cout,), jnp.float32)) + 0.5,
            stride=s, pad=p,
        ))
    return params


# ---------------------------------------------------------------------------
# Pure-JAX reference (correctness check only)
# ---------------------------------------------------------------------------
def ref_forward(x_ncl, params, eps=1e-5):
    y = x_ncl
    for p in params:
        z = jax.lax.conv_general_dilated(
            y, p["w"], window_strides=(p["stride"],),
            padding=[(p["pad"], p["pad"])],
            dimension_numbers=("NCH", "OIH", "NCH"))
        z = z + p["b"][None, :, None]
        z = (z - p["rmean"][None, :, None]) / jnp.sqrt(
            p["rvar"][None, :, None] + eps)
        z = z * p["gamma"][None, :, None] + p["beta"][None, :, None]
        y = jnp.maximum(z, 0.0)
    return y


if __name__ == "__main__":
    key = jax.random.PRNGKey(0)
    kx, kp = jax.random.split(key)

    # Small shapes: batch=2, 1 input channel, signal length 256.
    x = jax.random.normal(kx, (2, 1, 256), jnp.float32)
    params = init_params(kp)
    w_slab = pack_params(params, L_in=256)

    fwd = jax.jit(lambda xx: trunknet_forward(xx, w_slab))
    out = jax.block_until_ready(fwd(x))

    assert out.shape == (2, 32, 8), out.shape

    ref = ref_forward(x, params)
    np.testing.assert_allclose(np.asarray(out), np.asarray(ref),
                               rtol=1e-3, atol=1e-4)

    print("KERNEL_OK")
</pallas_src>

<mosaic_0001>
module attributes {stable_mosaic.version = 11 : i64} {
  func.func @kernel(%arg0: i32, %arg1: memref<1x256x1xf32, #tpu.memory_space<vmem>>, %arg2: memref<744x32xf32, #tpu.memory_space<vmem>>, %arg3: memref<1x32x8xf32, #tpu.memory_space<vmem>>, %arg4: memref<272x1xf32, #tpu.memory_space<vmem>>, %arg5: memref<144x16xf32, #tpu.memory_space<vmem>>, %arg6: memref<72x16xf32, #tpu.memory_space<vmem>>, %arg7: memref<40x24xf32, #tpu.memory_space<vmem>>, %arg8: memref<24x24xf32, #tpu.memory_space<vmem>>, %arg9: memref<128x217xf32, #tpu.memory_space<vmem>>) attributes {dimension_semantics = [#tpu.dimension_semantics<parallel>], iteration_bounds = array<i64: 2>, scalar_prefetch = 0 : i64, scratch_operands = 6 : i64, tpu.core_type = #tpu.core_type<tc>, window_params = [{transform_indices = @transform_0, window_bounds = array<i64: 1, 256, 1>}, {pipeline_mode = #tpu.pipeline_mode<synchronous>, transform_indices = @transform_1, window_bounds = array<i64: 744, 32>}, {transform_indices = @transform_2, window_bounds = array<i64: 1, 32, 8>}]} {
    %cst = arith.constant 0.000000e+00 : f32
    %0 = vector.broadcast %cst : f32 to vector<5x1xf32>
    %c0 = arith.constant 0 : index
    %c0_0 = arith.constant 0 : index
    %1 = vector.load %arg4[%c0, %c0_0] : memref<272x1xf32, #tpu.memory_space<vmem>>, vector<5x1xf32>
    tpu.vector_store %arg4[%c0, %c0_0], %0 {strides = array<i32>} : memref<272x1xf32, #tpu.memory_space<vmem>>, vector<5x1xf32>,
    %cst_1 = arith.constant 0.000000e+00 : f32
    %2 = vector.broadcast %cst_1 : f32 to vector<11x1xf32>
    %c261 = arith.constant 261 : index
    %c0_2 = arith.constant 0 : index
    %3 = vector.load %arg4[%c261, %c0_2] : memref<272x1xf32, #tpu.memory_space<vmem>>, vector<11x1xf32>
    tpu.vector_store %arg4[%c261, %c0_2], %2 {strides = array<i32>} : memref<272x1xf32, #tpu.memory_space<vmem>>, vector<11x1xf32>,
    %cst_3 = arith.constant 0.000000e+00 : f32
    %4 = vector.broadcast %cst_3 : f32 to vector<5x16xf32>
    %c0_4 = arith.constant 0 : index
    %c0_5 = arith.constant 0 : index
    %5 = vector.load %arg5[%c0_4, %c0_5] : memref<144x16xf32, #tpu.memory_space<vmem>>, vector<5x16xf32>
    tpu.vector_store %arg5[%c0_4, %c0_5], %4 {strides = array<i32>} : memref<144x16xf32, #tpu.memory_space<vmem>>, vector<5x16xf32>,
    %cst_6 = arith.constant 0.000000e+00 : f32
    %6 = vector.broadcast %cst_6 : f32 to vector<11x16xf32>
    %c133 = arith.constant 133 : index
    %c0_7 = arith.constant 0 : index
    %7 = vector.load %arg5[%c133, %c0_7] : memref<144x16xf32, #tpu.memory_space<vmem>>, vector<11x16xf32>
    tpu.vector_store %arg5[%c133, %c0_7], %6 {strides = array<i32>} : memref<144x16xf32, #tpu.memory_space<vmem>>, vector<11x16xf32>,
    %cst_8 = arith.constant 0.000000e+00 : f32
    %8 = vector.broadcast %cst_8 : f32 to vector<4x16xf32>
    %c0_9 = arith.constant 0 : index
    %c0_10 = arith.constant 0 : index
    %9 = vector.load %arg6[%c0_9, %c0_10] : memref<72x16xf32, #tpu.memory_space<vmem>>, vector<4x16xf32>
    tpu.vector_store %arg6[%c0_9, %c0_10], %8 {strides = array<i32>} : memref<72x16xf32, #tpu.memory_space<vmem>>, vector<4x16xf32>,
    %cst_11 = arith.constant 0.000000e+00 : f32
    %10 = vector.broadcast %cst_11 : f32 to vector<4x16xf32>
    %c68 = arith.constant 68 : index
    %c0_12 = arith.constant 0 : index
    %11 = vector.load %arg6[%c68, %c0_12] : memref<72x16xf32, #tpu.memory_space<vmem>>, vector<4x16xf32>
    tpu.vector_store %arg6[%c68, %c0_12], %10 {strides = array<i32>} : memref<72x16xf32, #tpu.memory_space<vmem>>, vector<4x16xf32>,
    %cst_13 = arith.constant 0.000000e+00 : f32
    %12 = vector.broadcast %cst_13 : f32 to vector<4x24xf32>
    %c0_14 = arith.constant 0 : index
    %c0_15 = arith.constant 0 : index
    %13 = vector.load %arg7[%c0_14, %c0_15] : memref<40x24xf32, #tpu.memory_space<vmem>>, vector<4x24xf32>
    tpu.vector_store %arg7[%c0_14, %c0_15], %12 {strides = array<i32>} : memref<40x24xf32, #tpu.memory_space<vmem>>, vector<4x24xf32>,
    %cst_16 = arith.constant 0.000000e+00 : f32
    %14 = vector.broadcast %cst_16 : f32 to vector<4x24xf32>
    %c36 = arith.constant 36 : index
    %c0_17 = arith.constant 0 : index
    %15 = vector.load %arg7[%c36, %c0_17] : memref<40x24xf32, #tpu.memory_space<vmem>>, vector<4x24xf32>
    tpu.vector_store %arg7[%c36, %c0_17], %14 {strides = array<i32>} : memref<40x24xf32, #tpu.memory_space<vmem>>, vector<4x24xf32>,
    %cst_18 = arith.constant 0.000000e+00 : f32
    %16 = vector.broadcast %cst_18 : f32 to vector<2x24xf32>
    %c0_19 = arith.constant 0 : index
    %c0_20 = arith.constant 0 : index
    %17 = vector.load %arg8[%c0_19, %c0_20] : memref<24x24xf32, #tpu.memory_space<vmem>>, vector<2x24xf32>
    tpu.vector_store %arg8[%c0_19, %c0_20], %16 {strides = array<i32>} : memref<24x24xf32, #tpu.memory_space<vmem>>, vector<2x24xf32>,
    %cst_21 = arith.constant 0.000000e+00 : f32
    %18 = vector.broadcast %cst_21 : f32 to vector<6x24xf32>
    %c18 = arith.constant 18 : index
    %c0_22 = arith.constant 0 : index
    %19 = vector.load %arg8[%c18, %c0_22] : memref<24x24xf32, #tpu.memory_space<vmem>>, vector<6x24xf32>
    tpu.vector_store %arg8[%c18, %c0_22], %18 {strides = array<i32>} : memref<24x24xf32, #tpu.memory_space<vmem>>, vector<6x24xf32>,
    %c0_23 = arith.constant 0 : index
    %c0_24 = arith.constant 0 : index
    %c0_25 = arith.constant 0 : index
    %20 = vector.load %arg1[%c0_23, %c0_24, %c0_25] : memref<1x256x1xf32, #tpu.memory_space<vmem>>, vector<1x256x1xf32>
    %21 = vector.shape_cast %20 : vector<1x256x1xf32> to vector<256x1xf32>
    %c5 = arith.constant 5 : index
    %c0_26 = arith.constant 0 : index
    %22 = vector.load %arg4[%c5, %c0_26] : memref<272x1xf32, #tpu.memory_space<vmem>>, vector<256x1xf32>
    tpu.vector_store %arg4[%c5, %c0_26], %21 {strides = array<i32>} : memref<272x1xf32, #tpu.memory_space<vmem>>, vector<256x1xf32>,
    %c0_27 = arith.constant 0 : index
    %c0_28 = arith.constant 0 : index
    %23 = tpu.strided_load %arg4[%c0_27, %c0_28] {strides = array<i32: 2, 1>} : memref<272x1xf32, #tpu.memory_space<vmem>>, vector<128x1xf32>
    %c0_29 = arith.constant 0 : index
    %c0_30 = arith.constant 0 : index
    %24 = vector.load %arg9[%c0_29, %c0_30] : memref<128x217xf32, #tpu.memory_space<vmem>>, vector<128x1xf32>
    tpu.vector_store %arg9[%c0_29, %c0_30], %23 {strides = array<i32>} : memref<128x217xf32, #tpu.memory_space<vmem>>, vector<128x1xf32>,
    %c1 = arith.constant 1 : index
    %c0_31 = arith.constant 0 : index
    %25 = tpu.strided_load %arg4[%c1, %c0_31] {strides = array<i32: 2, 1>} : memref<272x1xf32, #tpu.memory_space<vmem>>, vector<128x1xf32>
    %c0_32 = arith.constant 0 : index
    %c1_33 = arith.constant 1 : index
    %26 = vector.load %arg9[%c0_32, %c1_33] : memref<128x217xf32, #tpu.memory_space<vmem>>, vector<128x1xf32>
    tpu.vector_store %arg9[%c0_32, %c1_33], %25 {strides = array<i32>} : memref<128x217xf32, #tpu.memory_space<vmem>>, vector<128x1xf32>,
    %c2 = arith.constant 2 : index
    %c0_34 = arith.constant 0 : index
    %27 = tpu.strided_load %arg4[%c2, %c0_34] {strides = array<i32: 2, 1>} : memref<272x1xf32, #tpu.memory_space<vmem>>, vector<128x1xf32>
    %c0_35 = arith.constant 0 : index
    %c2_36 = arith.constant 2 : index
    %28 = vector.load %arg9[%c0_35, %c2_36] : memref<128x217xf32, #tpu.memory_space<vmem>>, vector<128x1xf32>
    tpu.vector_store %arg9[%c0_35, %c2_36], %27 {strides = array<i32>} : memref<128x217xf32, #tpu.memory_space<vmem>>, vector<128x1xf32>,
    %c3 = arith.constant 3 : index
    %c0_37 = arith.constant 0 : index
    %29 = tpu.strided_load %arg4[%c3, %c0_37] {strides = array<i32: 2, 1>} : memref<272x1xf32, #tpu.memory_space<vmem>>, vector<128x1xf32>
    %c0_38 = arith.constant 0 : index
    %c3_39 = arith.constant 3 : index
    %30 = vector.load %arg9[%c0_38, %c3_39] : memref<128x217xf32, #tpu.memory_space<vmem>>, vector<128x1xf32>
    tpu.vector_store %arg9[%c0_38, %c3_39], %29 {strides = array<i32>} : memref<128x217xf32, #tpu.memory_space<vmem>>, vector<128x1xf32>,
    %c4 = arith.constant 4 : index
    %c0_40 = arith.constant 0 : index
    %31 = tpu.strided_load %arg4[%c4, %c0_40] {strides = array<i32: 2, 1>} : memref<272x1xf32, #tpu.memory_space<vmem>>, vector<128x1xf32>
    %c0_41 = arith.constant 0 : index
    %c4_42 = arith.constant 4 : index
    %32 = vector.load %arg9[%c0_41, %c4_42] : memref<128x217xf32, #tpu.memory_space<vmem>>, vector<128x1xf32>
    tpu.vector_store %arg9[%c0_41, %c4_42], %31 {strides = array<i32>} : memref<128x217xf32, #tpu.memory_space<vmem>>, vector<128x1xf32>,
    %c5_43 = arith.constant 5 : index
    %c0_44 = arith.constant 0 : index
    %33 = tpu.strided_load %arg4[%c5_43, %c0_44] {strides = array<i32: 2, 1>} : memref<272x1xf32, #tpu.memory_space<vmem>>, vector<128x1xf32>
    %c0_45 = arith.constant 0 : index
    %c5_46 = arith.constant 5 : index
    %34 = vector.load %arg9[%c0_45, %c5_46] : memref<128x217xf32, #tpu.memory_space<vmem>>, vector<128x1xf32>
    tpu.vector_store %arg9[%c0_45, %c5_46], %33 {strides = array<i32>} : memref<128x217xf32, #tpu.memory_space<vmem>>, vector<128x1xf32>,
    %c6 = arith.constant 6 : index
    %c0_47 = arith.constant 0 : index
    %35 = tpu.strided_load %arg4[%c6, %c0_47] {strides = array<i32: 2, 1>} : memref<272x1xf32, #tpu.memory_space<vmem>>, vector<128x1xf32>
    %c0_48 = arith.constant 0 : index
    %c6_49 = arith.constant 6 : index
    %36 = vector.load %arg9[%c0_48, %c6_49] : memref<128x217xf32, #tpu.memory_space<vmem>>, vector<128x1xf32>
    tpu.vector_store %arg9[%c0_48, %c6_49], %35 {strides = array<i32>} : memref<128x217xf32, #tpu.memory_space<vmem>>, vector<128x1xf32>,
    %c7 = arith.constant 7 : index
    %c0_50 = arith.constant 0 : index
    %37 = tpu.strided_load %arg4[%c7, %c0_50] {strides = array<i32: 2, 1>} : memref<272x1xf32, #tpu.memory_space<vmem>>, vector<128x1xf32>
    %c0_51 = arith.constant 0 : index
    %c7_52 = arith.constant 7 : index
    %38 = vector.load %arg9[%c0_51, %c7_52] : memref<128x217xf32, #tpu.memory_space<vmem>>, vector<128x1xf32>
    tpu.vector_store %arg9[%c0_51, %c7_52], %37 {strides = array<i32>} : memref<128x217xf32, #tpu.memory_space<vmem>>, vector<128x1xf32>,
    %c8 = arith.constant 8 : index
    %c0_53 = arith.constant 0 : index
    %39 = tpu.strided_load %arg4[%c8, %c0_53] {strides = array<i32: 2, 1>} : memref<272x1xf32, #tpu.memory_space<vmem>>, vector<128x1xf32>
    %c0_54 = arith.constant 0 : index
    %c8_55 = arith.constant 8 : index
    %40 = vector.load %arg9[%c0_54, %c8_55] : memref<128x217xf32, #tpu.memory_space<vmem>>, vector<128x1xf32>
    tpu.vector_store %arg9[%c0_54, %c8_55], %39 {strides = array<i32>} : memref<128x217xf32, #tpu.memory_space<vmem>>, vector<128x1xf32>,
    %c9 = arith.constant 9 : index
    %c0_56 = arith.constant 0 : index
    %41 = tpu.strided_load %arg4[%c9, %c0_56] {strides = array<i32: 2, 1>} : memref<272x1xf32, #tpu.memory_space<vmem>>, vector<128x1xf32>
    %c0_57 = arith.constant 0 : index
    %c9_58 = arith.constant 9 : index
    %42 = vector.load %arg9[%c0_57, %c9_58] : memref<128x217xf32, #tpu.memory_space<vmem>>, vector<128x1xf32>
    tpu.vector_store %arg9[%c0_57, %c9_58], %41 {strides = array<i32>} : memref<128x217xf32, #tpu.memory_space<vmem>>, vector<128x1xf32>,
    %c10 = arith.constant 10 : index
    %c0_59 = arith.constant 0 : index
    %43 = tpu.strided_load %arg4[%c10, %c0_59] {strides = array<i32: 2, 1>} : memref<272x1xf32, #tpu.memory_space<vmem>>, vector<128x1xf32>
    %c0_60 = arith.constant 0 : index
    %c10_61 = arith.constant 10 : index
    %44 = vector.load %arg9[%c0_60, %c10_61] : memref<128x217xf32, #tpu.memory_space<vmem>>, vector<128x1xf32>
    tpu.vector_store %arg9[%c0_60, %c10_61], %43 {strides = array<i32>} : memref<128x217xf32, #tpu.memory_space<vmem>>, vector<128x1xf32>,
    %c11 = arith.constant 11 : index
    %c0_62 = arith.constant 0 : index
    %45 = tpu.strided_load %arg4[%c11, %c0_62] {strides = array<i32: 2, 1>} : memref<272x1xf32, #tpu.memory_space<vmem>>, vector<128x1xf32>
    %c0_63 = arith.constant 0 : index
    %c11_64 = arith.constant 11 : index
    %46 = vector.load %arg9[%c0_63, %c11_64] : memref<128x217xf32, #tpu.memory_space<vmem>>, vector<128x1xf32>
    tpu.vector_store %arg9[%c0_63, %c11_64], %45 {strides = array<i32>} : memref<128x217xf32, #tpu.memory_space<vmem>>, vector<128x1xf32>,
    %cst_65 = arith.constant 1.000000e+00 : f32
    %47 = vector.broadcast %cst_65 : f32 to vector<128x1xf32>
    %c0_66 = arith.constant 0 : index
    %c12 = arith.constant 12 : index
    %48 = vector.load %arg9[%c0_66, %c12] : memref<128x217xf32, #tpu.memory_space<vmem>>, vector<128x1xf32>
    tpu.vector_store %arg9[%c0_66, %c12], %47 {strides = array<i32>} : memref<128x217xf32, #tpu.memory_space<vmem>>, vector<128x1xf32>,
    %c0_67 = arith.constant 0 : index
    %c0_68 = arith.constant 0 : index
    %49 = vector.load %arg2[%c0_67, %c0_68] : memref<744x32xf32, #tpu.memory_space<vmem>>, vector<13x16xf32>
    %c0_69 = arith.constant 0 : index
    %c0_70 = arith.constant 0 : index
    %50 = vector.load %arg9[%c0_69, %c0_70] : memref<128x217xf32, #tpu.memory_space<vmem>>, vector<128x13xf32>
    %cst_71 = arith.constant dense<0.000000e+00> : vector<128x16xf32>
    %51 = tpu.matmul %50, %49, %cst_71 {dimension_numbers = #tpu.dot_dimension_numbers<[1], [0], [0], [1], [0, 0, 1, 1], [], []>} : vector<128x13xf32>, vector<13x16xf32>, vector<128x16xf32> -> vector<128x16xf32>
    %cst_72 = arith.constant 0.000000e+00 : f32
    %52 = vector.broadcast %cst_72 : f32 to vector<128x16xf32>
    %53 = arith.maximumf %51, %52 : vector<128x16xf32>
    %c5_73 = arith.constant 5 : index
    %c0_74 = arith.constant 0 : index
    %54 = vector.load %arg5[%c5_73, %c0_74] : memref<144x16xf32, #tpu.memory_space<vmem>>, vector<128x16xf32>
    tpu.vector_store %arg5[%c5_73, %c0_74], %53 {strides = array<i32>} : memref<144x16xf32, #tpu.memory_space<vmem>>, vector<128x16xf32>,
    %c0_75 = arith.constant 0 : index
    %c0_76 = arith.constant 0 : index
    %55 = tpu.strided_load %arg5[%c0_75, %c0_76] {strides = array<i32: 2, 1>} : memref<144x16xf32, #tpu.memory_space<vmem>>, vector<64x16xf32>
    %c0_77 = arith.constant 0 : index
    %c0_78 = arith.constant 0 : index
    %56 = vector.load %arg9[%c0_77, %c0_78] : memref<128x217xf32, #tpu.memory_space<vmem>>, vector<64x16xf32>
    tpu.vector_store %arg9[%c0_77, %c0_78], %55 {strides = array<i32>} : memref<128x217xf32, #tpu.memory_space<vmem>>, vector<64x16xf32>,
    %c1_79 = arith.constant 1 : index
    %c0_80 = arith.constant 0 : index
    %57 = tpu.strided_load %arg5[%c1_79, %c0_80] {strides = array<i32: 2, 1>} : memref<144x16xf32, #tpu.memory_space<vmem>>, vector<64x16xf32>
    %c0_81 = arith.constant 0 : index
    %c16 = arith.constant 16 : index
    %58 = vector.load %arg9[%c0_81, %c16] : memref<128x217xf32, #tpu.memory_space<vmem>>, vector<64x16xf32>
    tpu.vector_store %arg9[%c0_81, %c16], %57 {strides = array<i32>} : memref<128x217xf32, #tpu.memory_space<vmem>>, vector<64x16xf32>,
    %c2_82 = arith.constant 2 : index
    %c0_83 = arith.constant 0 : index
    %59 = tpu.strided_load %arg5[%c2_82, %c0_83] {strides = array<i32: 2, 1>} : memref<144x16xf32, #tpu.memory_space<vmem>>, vector<64x16xf32>
    %c0_84 = arith.constant 0 : index
    %c32 = arith.constant 32 : index
    %60 = vector.load %arg9[%c0_84, %c32] : memref<128x217xf32, #tpu.memory_space<vmem>>, vector<64x16xf32>
    tpu.vector_store %arg9[%c0_84, %c32], %59 {strides = array<i32>} : memref<128x217xf32, #tpu.memory_space<vmem>>, vector<64x16xf32>,
    %c3_85 = arith.constant 3 : index
    %c0_86 = arith.constant 0 : index
    %61 = tpu.strided_load %arg5[%c3_85, %c0_86] {strides = array<i32: 2, 1>} : memref<144x16xf32, #tpu.memory_space<vmem>>, vector<64x16xf32>
    %c0_87 = arith.constant 0 : index
    %c48 = arith.constant 48 : index
    %62 = vector.load %arg9[%c0_87, %c48] : memref<128x217xf32, #tpu.memory_space<vmem>>, vector<64x16xf32>
    tpu.vector_store %arg9[%c0_87, %c48], %61 {strides = array<i32>} : memref<128x217xf32, #tpu.memory_space<vmem>>, vector<64x16xf32>,
    %c4_88 = arith.constant 4 : index
    %c0_89 = arith.constant 0 : index
    %63 = tpu.strided_load %arg5[%c4_88, %c0_89] {strides = array<i32: 2, 1>} : memref<144x16xf32, #tpu.memory_space<vmem>>, vector<64x16xf32>
    %c0_90 = arith.constant 0 : index
    %c64 = arith.constant 64 : index
    %64 = vector.load %arg9[%c0_90, %c64] : memref<128x217xf32, #tpu.memory_space<vmem>>, vector<64x16xf32>
    tpu.vector_store %arg9[%c0_90, %c64], %63 {strides = array<i32>} : memref<128x217xf32, #tpu.memory_space<vmem>>, vector<64x16xf32>,
    %c5_91 = arith.constant 5 : index
    %c0_92 = arith.constant 0 : index
    %65 = tpu.strided_load %arg5[%c5_91, %c0_92] {strides = array<i32: 2, 1>} : memref<144x16xf32, #tpu.memory_space<vmem>>, vector<64x16xf32>
    %c0_93 = arith.constant 0 : index
    %c80 = arith.constant 80 : index
    %66 = vector.load %arg9[%c0_93, %c80] : memref<128x217xf32, #tpu.memory_space<vmem>>, vector<64x16xf32>
    tpu.vector_store %arg9[%c0_93, %c80], %65 {strides = array<i32>} : memref<128x217xf32, #tpu.memory_space<vmem>>, vector<64x16xf32>,
    %c6_94 = arith.constant 6 : index
    %c0_95 = arith.constant 0 : index
    %67 = tpu.strided_load %arg5[%c6_94, %c0_95] {strides = array<i32: 2, 1>} : memref<144x16xf32, #tpu.memory_space<vmem>>, vector<64x16xf32>
    %c0_96 = arith.constant 0 : index
    %c96 = arith.constant 96 : index
    %68 = vector.load %arg9[%c0_96, %c96] : memref<128x217xf32, #tpu.memory_space<vmem>>, vector<64x16xf32>
    tpu.vector_store %arg9[%c0_96, %c96], %67 {strides = array<i32>} : memref<128x217xf32, #tpu.memory_space<vmem>>, vector<64x16xf32>,
    %c7_97 = arith.constant 7 : index
    %c0_98 = arith.constant 0 : index
    %69 = tpu.strided_load %arg5[%c7_97, %c0_98] {strides = array<i32: 2, 1>} : memref<144x16xf32, #tpu.memory_space<vmem>>, vector<64x16xf32>
    %c0_99 = arith.constant 0 : index
    %c112 = arith.constant 112 : index
    %70 = vector.load %arg9[%c0_99, %c112] : memref<128x217xf32, #tpu.memory_space<vmem>>, vector<64x16xf32>
    tpu.vector_store %arg9[%c0_99, %c112], %69 {strides = array<i32>} : memref<128x217xf32, #tpu.memory_space<vmem>>, vector<64x16xf32>,
    %c8_100 = arith.constant 8 : index
    %c0_101 = arith.constant 0 : index
    %71 = tpu.strided_load %arg5[%c8_100, %c0_101] {strides = array<i32: 2, 1>} : memref<144x16xf32, #tpu.memory_space<vmem>>, vector<64x16xf32>
    %c0_102 = arith.constant 0 : index
    %c128 = arith.constant 128 : index
    %72 = vector.load %arg9[%c0_102, %c128] : memref<128x217xf32, #tpu.memory_space<vmem>>, vector<64x16xf32>
    tpu.vector_store %arg9[%c0_102, %c128], %71 {strides = array<i32>} : memref<128x217xf32, #tpu.memory_space<vmem>>, vector<64x16xf32>,
    %c9_103 = arith.constant 9 : index
    %c0_104 = arith.constant 0 : index
    %73 = tpu.strided_load %arg5[%c9_103, %c0_104] {strides = array<i32: 2, 1>} : memref<144x16xf32, #tpu.memory_space<vmem>>, vector<64x16xf32>
    %c0_105 = arith.constant 0 : index
    %c144 = arith.constant 144 : index
    %74 = vector.load %arg9[%c0_105, %c144] : memref<128x217xf32, #tpu.memory_space<vmem>>, vector<64x16xf32>
    tpu.vector_store %arg9[%c0_105, %c144], %73 {strides = array<i32>} : memref<128x217xf32, #tpu.memory_space<vmem>>, vector<64x16xf32>,
    %c10_106 = arith.constant 10 : index
    %c0_107 = arith.constant 0 : index
    %75 = tpu.strided_load %arg5[%c10_106, %c0_107] {strides = array<i32: 2, 1>} : memref<144x16xf32, #tpu.memory_space<vmem>>, vector<64x16xf32>
    %c0_108 = arith.constant 0 : index
    %c160 = arith.constant 160 : index
    %76 = vector.load %arg9[%c0_108, %c160] : memref<128x217xf32, #tpu.memory_space<vmem>>, vector<64x16xf32>
    tpu.vector_store %arg9[%c0_108, %c160], %75 {strides = array<i32>} : memref<128x217xf32, #tpu.memory_space<vmem>>, vector<64x16xf32>,
    %c11_109 = arith.constant 11 : index
    %c0_110 = arith.constant 0 : index
    %77 = tpu.strided_load %arg5[%c11_109, %c0_110] {strides = array<i32: 2, 1>} : memref<144x16xf32, #tpu.memory_space<vmem>>, vector<64x16xf32>
    %c0_111 = arith.constant 0 : index
    %c176 = arith.constant 176 : index
    %78 = vector.load %arg9[%c0_111, %c176] : memref<128x217xf32, #tpu.memory_space<vmem>>, vector<64x16xf32>
    tpu.vector_store %arg9[%c0_111, %c176], %77 {strides = array<i32>} : memref<128x217xf32, #tpu.memory_space<vmem>>, vector<64x16xf32>,
    %cst_112 = arith.constant 1.000000e+00 : f32
    %79 = vector.broadcast %cst_112 : f32 to vector<64x1xf32>
    %c0_113 = arith.constant 0 : index
    %c192 = arith.constant 192 : index
    %80 = vector.load %arg9[%c0_113, %c192] : memref<128x217xf32, #tpu.memory_space<vmem>>, vector<64x1xf32>
    tpu.vector_store %arg9[%c0_113, %c192], %79 {strides = array<i32>} : memref<128x217xf32, #tpu.memory_space<vmem>>, vector<64x1xf32>,
    %c16_114 = arith.constant 16 : index
    %c0_115 = arith.constant 0 : index
    %81 = vector.load %arg2[%c16_114, %c0_115] : memref<744x32xf32, #tpu.memory_space<vmem>>, vector<193x16xf32>
    %c0_116 = arith.constant 0 : index
    %c0_117 = arith.constant 0 : index
    %82 = vector.load %arg9[%c0_116, %c0_117] : memref<128x217xf32, #tpu.memory_space<vmem>>, vector<64x193xf32>
    %cst_118 = arith.constant dense<0.000000e+00> : vector<64x16xf32>
    %83 = tpu.matmul %82, %81, %cst_118 {dimension_numbers = #tpu.dot_dimension_numbers<[1], [0], [0], [1], [0, 0, 1, 1], [], []>} : vector<64x193xf32>, vector<193x16xf32>, vector<64x16xf32> -> vector<64x16xf32>
    %cst_119 = arith.constant 0.000000e+00 : f32
    %84 = vector.broadcast %cst_119 : f32 to vector<64x16xf32>
    %85 = arith.maximumf %83, %84 : vector<64x16xf32>
    %c4_120 = arith.constant 4 : index
    %c0_121 = arith.constant 0 : index
    %86 = vector.load %arg6[%c4_120, %c0_121] : memref<72x16xf32, #tpu.memory_space<vmem>>, vector<64x16xf32>
    tpu.vector_store %arg6[%c4_120, %c0_121], %85 {strides = array<i32>} : memref<72x16xf32, #tpu.memory_space<vmem>>, vector<64x16xf32>,
    %c0_122 = arith.constant 0 : index
    %c0_123 = arith.constant 0 : index
    %87 = tpu.strided_load %arg6[%c0_122, %c0_123] {strides = array<i32: 2, 1>} : memref<72x16xf32, #tpu.memory_space<vmem>>, vector<32x16xf32>
    %c0_124 = arith.constant 0 : index
    %c0_125 = arith.constant 0 : index
    %88 = vector.load %arg9[%c0_124, %c0_125] : memref<128x217xf32, #tpu.memory_space<vmem>>, vector<32x16xf32>
    tpu.vector_store %arg9[%c0_124, %c0_125], %87 {strides = array<i32>} : memref<128x217xf32, #tpu.memory_space<vmem>>, vector<32x16xf32>,
    %c1_126 = arith.constant 1 : index
    %c0_127 = arith.constant 0 : index
    %89 = tpu.strided_load %arg6[%c1_126, %c0_127] {strides = array<i32: 2, 1>} : memref<72x16xf32, #tpu.memory_space<vmem>>, vector<32x16xf32>
    %c0_128 = arith.constant 0 : index
    %c16_129 = arith.constant 16 : index
    %90 = vector.load %arg9[%c0_128, %c16_129] : memref<128x217xf32, #tpu.memory_space<vmem>>, vector<32x16xf32>
    tpu.vector_store %arg9[%c0_128, %c16_129], %89 {strides = array<i32>} : memref<128x217xf32, #tpu.memory_space<vmem>>, vector<32x16xf32>,
    %c2_130 = arith.constant 2 : index
    %c0_131 = arith.constant 0 : index
    %91 = tpu.strided_load %arg6[%c2_130, %c0_131] {strides = array<i32: 2, 1>} : memref<72x16xf32, #tpu.memory_space<vmem>>, vector<32x16xf32>
    %c0_132 = arith.constant 0 : index
    %c32_133 = arith.constant 32 : index
    %92 = vector.load %arg9[%c0_132, %c32_133] : memref<128x217xf32, #tpu.memory_space<vmem>>, vector<32x16xf32>
    tpu.vector_store %arg9[%c0_132, %c32_133], %91 {strides = array<i32>} : memref<128x217xf32, #tpu.memory_space<vmem>>, vector<32x16xf32>,
    %c3_134 = arith.constant 3 : index
    %c0_135 = arith.constant 0 : index
    %93 = tpu.strided_load %arg6[%c3_134, %c0_135] {strides = array<i32: 2, 1>} : memref<72x16xf32, #tpu.memory_space<vmem>>, vector<32x16xf32>
    %c0_136 = arith.constant 0 : index
    %c48_137 = arith.constant 48 : index
    %94 = vector.load %arg9[%c0_136, %c48_137] : memref<128x217xf32, #tpu.memory_space<vmem>>, vector<32x16xf32>
    tpu.vector_store %arg9[%c0_136, %c48_137], %93 {strides = array<i32>} : memref<128x217xf32, #tpu.memory_space<vmem>>, vector<32x16xf32>,
    %c4_138 = arith.constant 4 : index
    %c0_139 = arith.constant 0 : index
    %95 = tpu.strided_load %arg6[%c4_138, %c0_139] {strides = array<i32: 2, 1>} : memref<72x16xf32, #tpu.memory_space<vmem>>, vector<32x16xf32>
    %c0_140 = arith.constant 0 : index
    %c64_141 = arith.constant 64 : index
    %96 = vector.load %arg9[%c0_140, %c64_141] : memref<128x217xf32, #tpu.memory_space<vmem>>, vector<32x16xf32>
    tpu.vector_store %arg9[%c0_140, %c64_141], %95 {strides = array<i32>} : memref<128x217xf32, #tpu.memory_space<vmem>>, vector<32x16xf32>,
    %c5_142 = arith.constant 5 : index
    %c0_143 = arith.constant 0 : index
    %97 = tpu.strided_load %arg6[%c5_142, %c0_143] {strides = array<i32: 2, 1>} : memref<72x16xf32, #tpu.memory_space<vmem>>, vector<32x16xf32>
    %c0_144 = arith.constant 0 : index
    %c80_145 = arith.constant 80 : index
    %98 = vector.load %arg9[%c0_144, %c80_145] : memref<128x217xf32, #tpu.memory_space<vmem>>, vector<32x16xf32>
    tpu.vector_store %arg9[%c0_144, %c80_145], %97 {strides = array<i32>} : memref<128x217xf32, #tpu.memory_space<vmem>>, vector<32x16xf32>,
    %c6_146 = arith.constant 6 : index
    %c0_147 = arith.constant 0 : index
    %99 = tpu.strided_load %arg6[%c6_146, %c0_147] {strides = array<i32: 2, 1>} : memref<72x16xf32, #tpu.memory_space<vmem>>, vector<32x16xf32>
    %c0_148 = arith.constant 0 : index
    %c96_149 = arith.constant 96 : index
    %100 = vector.load %arg9[%c0_148, %c96_149] : memref<128x217xf32, #tpu.memory_space<vmem>>, vector<32x16xf32>
    tpu.vector_store %arg9[%c0_148, %c96_149], %99 {strides = array<i32>} : memref<128x217xf32, #tpu.memory_space<vmem>>, vector<32x16xf32>,
    %c7_150 = arith.constant 7 : index
    %c0_151 = arith.constant 0 : index
    %101 = tpu.strided_load %arg6[%c7_150, %c0_151] {strides = array<i32: 2, 1>} : memref<72x16xf32, #tpu.memory_space<vmem>>, vector<32x16xf32>
    %c0_152 = arith.constant 0 : index
    %c112_153 = arith.constant 112 : index
    %102 = vector.load %arg9[%c0_152, %c112_153] : memref<128x217xf32, #tpu.memory_space<vmem>>, vector<32x16xf32>
    tpu.vector_store %arg9[%c0_152, %c112_153], %101 {strides = array<i32>} : memref<128x217xf32, #tpu.memory_space<vmem>>, vector<32x16xf32>,
    %c8_154 = arith.constant 8 : index
    %c0_155 = arith.constant 0 : index
    %103 = tpu.strided_load %arg6[%c8_154, %c0_155] {strides = array<i32: 2, 1>} : memref<72x16xf32, #tpu.memory_space<vmem>>, vector<32x16xf32>
    %c0_156 = arith.constant 0 : index
    %c128_157 = arith.constant 128 : index
    %104 = vector.load %arg9[%c0_156, %c128_157] : memref<128x217xf32, #tpu.memory_space<vmem>>, vector<32x16xf32>
    tpu.vector_store %arg9[%c0_156, %c128_157], %103 {strides = array<i32>} : memref<128x217xf32, #tpu.memory_space<vmem>>, vector<32x16xf32>,
    %cst_158 = arith.constant 1.000000e+00 : f32
    %105 = vector.broadcast %cst_158 : f32 to vector<32x1xf32>
    %c0_159 = arith.constant 0 : index
    %c144_160 = arith.constant 144 : index
    %106 = vector.load %arg9[%c0_159, %c144_160] : memref<128x217xf32, #tpu.memory_space<vmem>>, vector<32x1xf32>
    tpu.vector_store %arg9[%c0_159, %c144_160], %105 {strides = array<i32>} : memref<128x217xf32, #tpu.memory_space<vmem>>, vector<32x1xf32>,
    %c216 = arith.constant 216 : index
    %c0_161 = arith.constant 0 : index
    %107 = vector.load %arg2[%c216, %c0_161] : memref<744x32xf32, #tpu.memory_space<vmem>>, vector<145x24xf32>
    %c0_162 = arith.constant 0 : index
    %c0_163 = arith.constant 0 : index
    %108 = vector.load %arg9[%c0_162, %c0_163] : memref<128x217xf32, #tpu.memory_space<vmem>>, vector<32x145xf32>
    %cst_164 = arith.constant dense<0.000000e+00> : vector<32x24xf32>
    %109 = tpu.matmul %108, %107, %cst_164 {dimension_numbers = #tpu.dot_dimension_numbers<[1], [0], [0], [1], [0, 0, 1, 1], [], []>} : vector<32x145xf32>, vector<145x24xf32>, vector<32x24xf32> -> vector<32x24xf32>
    %cst_165 = arith.constant 0.000000e+00 : f32
    %110 = vector.broadcast %cst_165 : f32 to vector<32x24xf32>
    %111 = arith.maximumf %109, %110 : vector<32x24xf32>
    %c4_166 = arith.constant 4 : index
    %c0_167 = arith.constant 0 : index
    %112 = vector.load %arg7[%c4_166, %c0_167] : memref<40x24xf32, #tpu.memory_space<vmem>>, vector<32x24xf32>
    tpu.vector_store %arg7[%c4_166, %c0_167], %111 {strides = array<i32>} : memref<40x24xf32, #tpu.memory_space<vmem>>, vector<32x24xf32>,
    %c0_168 = arith.constant 0 : index
    %c0_169 = arith.constant 0 : index
    %113 = tpu.strided_load %arg7[%c0_168, %c0_169] {strides = array<i32: 2, 1>} : memref<40x24xf32, #tpu.memory_space<vmem>>, vector<16x24xf32>
    %c0_170 = arith.constant 0 : index
    %c0_171 = arith.constant 0 : index
    %114 = vector.load %arg9[%c0_170, %c0_171] : memref<128x217xf32, #tpu.memory_space<vmem>>, vector<16x24xf32>
    tpu.vector_store %arg9[%c0_170, %c0_171], %113 {strides = array<i32>} : memref<128x217xf32, #tpu.memory_space<vmem>>, vector<16x24xf32>,
    %c1_172 = arith.constant 1 : index
    %c0_173 = arith.constant 0 : index
    %115 = tpu.strided_load %arg7[%c1_172, %c0_173] {strides = array<i32: 2, 1>} : memref<40x24xf32, #tpu.memory_space<vmem>>, vector<16x24xf32>
    %c0_174 = arith.constant 0 : index
    %c24 = arith.constant 24 : index
    %116 = vector.load %arg9[%c0_174, %c24] : memref<128x217xf32, #tpu.memory_space<vmem>>, vector<16x24xf32>
    tpu.vector_store %arg9[%c0_174, %c24], %115 {strides = array<i32>} : memref<128x217xf32, #tpu.memory_space<vmem>>, vector<16x24xf32>,
    %c2_175 = arith.constant 2 : index
    %c0_176 = arith.constant 0 : index
    %117 = tpu.strided_load %arg7[%c2_175, %c0_176] {strides = array<i32: 2, 1>} : memref<40x24xf32, #tpu.memory_space<vmem>>, vector<16x24xf32>
    %c0_177 = arith.constant 0 : index
    %c48_178 = arith.constant 48 : index
    %118 = vector.load %arg9[%c0_177, %c48_178] : memref<128x217xf32, #tpu.memory_space<vmem>>, vector<16x24xf32>
    tpu.vector_store %arg9[%c0_177, %c48_178], %117 {strides = array<i32>} : memref<128x217xf32, #tpu.memory_space<vmem>>, vector<16x24xf32>,
    %c3_179 = arith.constant 3 : index
    %c0_180 = arith.constant 0 : index
    %119 = tpu.strided_load %arg7[%c3_179, %c0_180] {strides = array<i32: 2, 1>} : memref<40x24xf32, #tpu.memory_space<vmem>>, vector<16x24xf32>
    %c0_181 = arith.constant 0 : index
    %c72 = arith.constant 72 : index
    %120 = vector.load %arg9[%c0_181, %c72] : memref<128x217xf32, #tpu.memory_space<vmem>>, vector<16x24xf32>
    tpu.vector_store %arg9[%c0_181, %c72], %119 {strides = array<i32>} : memref<128x217xf32, #tpu.memory_space<vmem>>, vector<16x24xf32>,
    %c4_182 = arith.constant 4 : index
    %c0_183 = arith.constant 0 : index
    %121 = tpu.strided_load %arg7[%c4_182, %c0_183] {strides = array<i32: 2, 1>} : memref<40x24xf32, #tpu.memory_space<vmem>>, vector<16x24xf32>
    %c0_184 = arith.constant 0 : index
    %c96_185 = arith.constant 96 : index
    %122 = vector.load %arg9[%c0_184, %c96_185] : memref<128x217xf32, #tpu.memory_space<vmem>>, vector<16x24xf32>
    tpu.vector_store %arg9[%c0_184, %c96_185], %121 {strides = array<i32>} : memref<128x217xf32, #tpu.memory_space<vmem>>, vector<16x24xf32>,
    %c5_186 = arith.constant 5 : index
    %c0_187 = arith.constant 0 : index
    %123 = tpu.strided_load %arg7[%c5_186, %c0_187] {strides = array<i32: 2, 1>} : memref<40x24xf32, #tpu.memory_space<vmem>>, vector<16x24xf32>
    %c0_188 = arith.constant 0 : index
    %c120 = arith.constant 120 : index
    %124 = vector.load %arg9[%c0_188, %c120] : memref<128x217xf32, #tpu.memory_space<vmem>>, vector<16x24xf32>
    tpu.vector_store %arg9[%c0_188, %c120], %123 {strides = array<i32>} : memref<128x217xf32, #tpu.memory_space<vmem>>, vector<16x24xf32>,
    %c6_189 = arith.constant 6 : index
    %c0_190 = arith.constant 0 : index
    %125 = tpu.strided_load %arg7[%c6_189, %c0_190] {strides = array<i32: 2, 1>} : memref<40x24xf32, #tpu.memory_space<vmem>>, vector<16x24xf32>
    %c0_191 = arith.constant 0 : index
    %c144_192 = arith.constant 144 : index
    %126 = vector.load %arg9[%c0_191, %c144_192] : memref<128x217xf32, #tpu.memory_space<vmem>>, vector<16x24xf32>
    tpu.vector_store %arg9[%c0_191, %c144_192], %125 {strides = array<i32>} : memref<128x217xf32, #tpu.memory_space<vmem>>, vector<16x24xf32>,
    %c7_193 = arith.constant 7 : index
    %c0_194 = arith.constant 0 : index
    %127 = tpu.strided_load %arg7[%c7_193, %c0_194] {strides = array<i32: 2, 1>} : memref<40x24xf32, #tpu.memory_space<vmem>>, vector<16x24xf32>
    %c0_195 = arith.constant 0 : index
    %c168 = arith.constant 168 : index
    %128 = vector.load %arg9[%c0_195, %c168] : memref<128x217xf32, #tpu.memory_space<vmem>>, vector<16x24xf32>
    tpu.vector_store %arg9[%c0_195, %c168], %127 {strides = array<i32>} : memref<128x217xf32, #tpu.memory_space<vmem>>, vector<16x24xf32>,
    %c8_196 = arith.constant 8 : index
    %c0_197 = arith.constant 0 : index
    %129 = tpu.strided_load %arg7[%c8_196, %c0_197] {strides = array<i32: 2, 1>} : memref<40x24xf32, #tpu.memory_space<vmem>>, vector<16x24xf32>
    %c0_198 = arith.constant 0 : index
    %c192_199 = arith.constant 192 : index
    %130 = vector.load %arg9[%c0_198, %c192_199] : memref<128x217xf32, #tpu.memory_space<vmem>>, vector<16x24xf32>
    tpu.vector_store %arg9[%c0_198, %c192_199], %129 {strides = array<i32>} : memref<128x217xf32, #tpu.memory_space<vmem>>, vector<16x24xf32>,
    %cst_200 = arith.constant 1.000000e+00 : f32
    %131 = vector.broadcast %cst_200 : f32 to vector<16x1xf32>
    %c0_201 = arith.constant 0 : index
    %c216_202 = arith.constant 216 : index
    %132 = vector.load %arg9[%c0_201, %c216_202] : memref<128x217xf32, #tpu.memory_space<vmem>>, vector<16x1xf32>
    tpu.vector_store %arg9[%c0_201, %c216_202], %131 {strides = array<i32>} : memref<128x217xf32, #tpu.memory_space<vmem>>, vector<16x1xf32>,
    %c368 = arith.constant 368 : index
    %c0_203 = arith.constant 0 : index
    %133 = vector.load %arg2[%c368, %c0_203] : memref<744x32xf32, #tpu.memory_space<vmem>>, vector<217x24xf32>
    %c0_204 = arith.constant 0 : index
    %c0_205 = arith.constant 0 : index
    %134 = vector.load %arg9[%c0_204, %c0_205] : memref<128x217xf32, #tpu.memory_space<vmem>>, vector<16x217xf32>
    %cst_206 = arith.constant dense<0.000000e+00> : vector<16x24xf32>
    %135 = tpu.matmul %134, %133, %cst_206 {dimension_numbers = #tpu.dot_dimension_numbers<[1], [0], [0], [1], [0, 0, 1, 1], [], []>} : vector<16x217xf32>, vector<217x24xf32>, vector<16x24xf32> -> vector<16x24xf32>
    %cst_207 = arith.constant 0.000000e+00 : f32
    %136 = vector.broadcast %cst_207 : f32 to vector<16x24xf32>
    %137 = arith.maximumf %135, %136 : vector<16x24xf32>
    %c2_208 = arith.constant 2 : index
    %c0_209 = arith.constant 0 : index
    %138 = vector.load %arg8[%c2_208, %c0_209] : memref<24x24xf32, #tpu.memory_space<vmem>>, vector<16x24xf32>
    tpu.vector_store %arg8[%c2_208, %c0_209], %137 {strides = array<i32>} : memref<24x24xf32, #tpu.memory_space<vmem>>, vector<16x24xf32>,
    %c0_210 = arith.constant 0 : index
    %c0_211 = arith.constant 0 : index
    %139 = tpu.strided_load %arg8[%c0_210, %c0_211] {strides = array<i32: 2, 1>} : memref<24x24xf32, #tpu.memory_space<vmem>>, vector<8x24xf32>
    %c0_212 = arith.constant 0 : index
    %c0_213 = arith.constant 0 : index
    %140 = vector.load %arg9[%c0_212, %c0_213] : memref<128x217xf32, #tpu.memory_space<vmem>>, vector<8x24xf32>
    tpu.vector_store %arg9[%c0_212, %c0_213], %139 {strides = array<i32>} : memref<128x217xf32, #tpu.memory_space<vmem>>, vector<8x24xf32>,
    %c1_214 = arith.constant 1 : index
    %c0_215 = arith.constant 0 : index
    %141 = tpu.strided_load %arg8[%c1_214, %c0_215] {strides = array<i32: 2, 1>} : memref<24x24xf32, #tpu.memory_space<vmem>>, vector<8x24xf32>
    %c0_216 = arith.constant 0 : index
    %c24_217 = arith.constant 24 : index
    %142 = vector.load %arg9[%c0_216, %c24_217] : memref<128x217xf32, #tpu.memory_space<vmem>>, vector<8x24xf32>
    tpu.vector_store %arg9[%c0_216, %c24_217], %141 {strides = array<i32>} : memref<128x217xf32, #tpu.memory_space<vmem>>, vector<8x24xf32>,
    %c2_218 = arith.constant 2 : index
    %c0_219 = arith.constant 0 : index
    %143 = tpu.strided_load %arg8[%c2_218, %c0_219] {strides = array<i32: 2, 1>} : memref<24x24xf32, #tpu.memory_space<vmem>>, vector<8x24xf32>
    %c0_220 = arith.constant 0 : index
    %c48_221 = arith.constant 48 : index
    %144 = vector.load %arg9[%c0_220, %c48_221] : memref<128x217xf32, #tpu.memory_space<vmem>>, vector<8x24xf32>
    tpu.vector_store %arg9[%c0_220, %c48_221], %143 {strides = array<i32>} : memref<128x217xf32, #tpu.memory_space<vmem>>, vector<8x24xf32>,
    %c3_222 = arith.constant 3 : index
    %c0_223 = arith.constant 0 : index
    %145 = tpu.strided_load %arg8[%c3_222, %c0_223] {strides = array<i32: 2, 1>} : memref<24x24xf32, #tpu.memory_space<vmem>>, vector<8x24xf32>
    %c0_224 = arith.constant 0 : index
    %c72_225 = arith.constant 72 : index
    %146 = vector.load %arg9[%c0_224, %c72_225] : memref<128x217xf32, #tpu.memory_space<vmem>>, vector<8x24xf32>
    tpu.vector_store %arg9[%c0_224, %c72_225], %145 {strides = array<i32>} : memref<128x217xf32, #tpu.memory_space<vmem>>, vector<8x24xf32>,
    %c4_226 = arith.constant 4 : index
    %c0_227 = arith.constant 0 : index
    %147 = tpu.strided_load %arg8[%c4_226, %c0_227] {strides = array<i32: 2, 1>} : memref<24x24xf32, #tpu.memory_space<vmem>>, vector<8x24xf32>
    %c0_228 = arith.constant 0 : index
    %c96_229 = arith.constant 96 : index
    %148 = vector.load %arg9[%c0_228, %c96_229] : memref<128x217xf32, #tpu.memory_space<vmem>>, vector<8x24xf32>
    tpu.vector_store %arg9[%c0_228, %c96_229], %147 {strides = array<i32>} : memref<128x217xf32, #tpu.memory_space<vmem>>, vector<8x24xf32>,
    %c5_230 = arith.constant 5 : index
    %c0_231 = arith.constant 0 : index
    %149 = tpu.strided_load %arg8[%c5_230, %c0_231] {strides = array<i32: 2, 1>} : memref<24x24xf32, #tpu.memory_space<vmem>>, vector<8x24xf32>
    %c0_232 = arith.constant 0 : index
    %c120_233 = arith.constant 120 : index
    %150 = vector.load %arg9[%c0_232, %c120_233] : memref<128x217xf32, #tpu.memory_space<vmem>>, vector<8x24xf32>
    tpu.vector_store %arg9[%c0_232, %c120_233], %149 {strides = array<i32>} : memref<128x217xf32, #tpu.memory_space<vmem>>, vector<8x24xf32>,
    %cst_234 = arith.constant 1.000000e+00 : f32
    %151 = vector.broadcast %cst_234 : f32 to vector<8x1xf32>
    %c0_235 = arith.constant 0 : index
    %c144_236 = arith.constant 144 : index
    %152 = vector.load %arg9[%c0_235, %c144_236] : memref<128x217xf32, #tpu.memory_space<vmem>>, vector<8x1xf32>
    tpu.vector_store %arg9[%c0_235, %c144_236], %151 {strides = array<i32>} : memref<128x217xf32, #tpu.memory_space<vmem>>, vector<8x1xf32>,
    %c592 = arith.constant 592 : index
    %c0_237 = arith.constant 0 : index
    %153 = vector.load %arg2[%c592, %c0_237] : memref<744x32xf32, #tpu.memory_space<vmem>>, vector<145x32xf32>
    %c0_238 = arith.constant 0 : index
    %c0_239 = arith.constant 0 : index
    %154 = vector.load %arg9[%c0_238, %c0_239] : memref<128x217xf32, #tpu.memory_space<vmem>>, vector<8x145xf32>
    %cst_240 = arith.constant dense<0.000000e+00> : vector<8x32xf32>
    %155 = tpu.matmul %154, %153, %cst_240 {dimension_numbers = #tpu.dot_dimension_numbers<[1], [0], [0], [1], [0, 0, 1, 1], [], []>} : vector<8x145xf32>, vector<145x32xf32>, vector<8x32xf32> -> vector<8x32xf32>
    %cst_241 = arith.constant 0.000000e+00 : f32
    %156 = vector.broadcast %cst_241 : f32 to vector<8x32xf32>
    %157 = arith.maximumf %155, %156 : vector<8x32xf32>
    %158 = tpu.transpose %157, [1, 0] : vector<8x32xf32> -> vector<32x8xf32>
    %c0_242 = arith.constant 0 : index
    %c0_243 = arith.constant 0 : index
    %c0_244 = arith.constant 0 : index
    %159 = vector.load %arg3[%c0_242, %c0_243, %c0_244] : memref<1x32x8xf32, #tpu.memory_space<vmem>>, vector<1x32x8xf32>
    %160 = vector.shape_cast %159 : vector<1x32x8xf32> to vector<32x8xf32>
    %161 = vector.shape_cast %158 : vector<32x8xf32> to vector<1x32x8xf32>
    tpu.vector_store %arg3[%c0_242, %c0_243, %c0_244], %161 {strides = array<i32>} : memref<1x32x8xf32, #tpu.memory_space<vmem>>, vector<1x32x8xf32>,
    return
  }
  func.func @transform_0(%arg0: i32) -> (i32, i32, i32) {
    %c0_i32 = arith.constant 0 : i32
    %c0_i32_0 = arith.constant 0 : i32
    %c0_i32_1 = arith.constant 0 : i32
    return %arg0, %c0_i32, %c0_i32_0 : i32, i32, i32
  }
  func.func @transform_1(%arg0: i32) -> (i32, i32) {
    %c0_i32 = arith.constant 0 : i32
    %c0_i32_0 = arith.constant 0 : i32
    %c0_i32_1 = arith.constant 0 : i32
    return %c0_i32, %c0_i32_0 : i32, i32
  }
  func.func @transform_2(%arg0: i32) -> (i32, i32, i32) {
    %c0_i32 = arith.constant 0 : i32
    %c0_i32_0 = arith.constant 0 : i32
    %c0_i32_1 = arith.constant 0 : i32
    return %arg0, %c0_i32, %c0_i32_0 : i32, i32, i32
  }
}

</mosaic_0001>

<llo_original>
// kernel: _lambda_.1
$region0: #{_lambda_.1}
  #allocation0 [shape = 'u32[]', space=smem, size = 0x4, offset = 0x4, fixed_abs, tag = 'smem constant byte address 0x4 - core index']
  #allocation1 [shape = 'u32[144,128]{1,0:T(1,128)}', space=vmem, size = 0x12000, scoped, tag = 'internal scratch']
  #allocation2 [shape = 'f32[272,1]{1,0:T(8,128)}', space=vmem, size = 0x22000, scoped, tag = 'scratch operand']
  #allocation3 [shape = 'f32[144,16]{1,0:T(8,128)}', space=vmem, size = 0x12000, scoped, tag = 'scratch operand']
  #allocation4 [shape = 'f32[72,16]{1,0:T(8,128)}', space=vmem, size = 0x9000, scoped, tag = 'scratch operand']
  #allocation5 [shape = 'f32[40,24]{1,0:T(8,128)}', space=vmem, size = 0x5000, scoped, tag = 'scratch operand']
  #allocation6 [shape = 'f32[24,24]{1,0:T(8,128)}', space=vmem, size = 0x3000, scoped, tag = 'scratch operand']
  #allocation7 [shape = 'f32[128,217]{1,0:T(8,128)}', space=vmem, size = 0x20000, scoped, tag = 'scratch operand']
  %s0 = inlined_call_operand.vmem [shape: f32[2,256,1], index: 0, kind: input, shape index: {}]
  %s1 = inlined_call_operand.hbm [shape: f32[744,32], index: 1, kind: input, shape index: {}]
  %s2 = inlined_call_operand.vmem [shape: f32[2,32,8], index: 2, kind: output, shape index: {}]
  %s3 = sld [smem:[#allocation0]]
  $region45: #{_lambda_.1} parent=0
    _
  %s5 = ssub.s32 1, %s3
  %s6 = scalar_select 0, %s5, %s3
  $region1: #{_lambda_.1} parent=0
    #allocation8 [shape = 'u8[380928]{0}', space=vmem, size = 0x5d000, scoped, tag = 'input window, operand 1, single buffered']
    #allocation9 [shape = 's32[2]{0}', space=sflag, size = 0x8, scoped, tag = 'scoped memory for _lambda_.1']
    %7 = vsyncpa [#allocation9], 0
    loop: start=0, step=1, limit=4
    $region2: #{_lambda_.1} parent=1 // loop_pre_header
      _
    $region3: #{_lambda_.1} parent=1 // loop_header
      %s9 = sphi 0, %s13
      %p10 = scmp.ge.s32.totalorder %s9, 4
      %s19 = sphi 0, %s21
      %s22 = sphi 0, %s19
      %s23 = sphi 0, %s22
      %s39 = sphi 0, %s23
      %s43 = sphi 0, %s43
      %s45 = sphi 0, %s43
      %s46 = sphi 0, %s45
      %s60 = sphi 0, %s46
      %s66 = sphi 0, %s68
      %s69 = sphi 0, %s66
      %s70 = sphi 0, %s69
      %s86 = sphi 0, %s70
    $region4: #{_lambda_.1} parent=1 // loop_header_branch
      %12 = sbr.rel (%p10) target = $region8
    $region5: #{_lambda_.1} parent=1 // loop_body
      %s14 = ssub.s32 %s9, 1
      %s15 = ssub.s32 %s9, 2
      %s16 = sadd.s32 %s9, 1
      %s17 = ssub.s32 %s9, %s16
      %p18 = scmp.eq.s32.totalorder %s17, 0
      %s20 = sadd.s32 %s19, 1
      %s21 = scalar_select %p18, %s19, %s20
      %p24 = pneg %p18
      %p25 = scmp.eq.s32.totalorder %s9, 1
      %p26 = por %p24, %p25
      %p27 = scmp.ne.s32.totalorder %s19, %s22
      %p28 = scmp.eq.s32.totalorder %s9, 0
      %p29 = por %p27, %p28
      %p30 = scmp.ne.s32.totalorder %s19, %s22
      %p31 = scmp.eq.s32.totalorder %s14, 1
      %p32 = por %p30, %p31
      %p33 = scmp.ne.s32.totalorder %s22, %s23
      %p34 = scmp.eq.s32.totalorder %s14, 0
      %p35 = por %p33, %p34
      %p36 = scmp.ne.s32.totalorder %s22, %s23
      %p37 = scmp.eq.s32.totalorder %s15, 1
      %p38 = por %p36, %p37
      %p40 = scmp.ne.s32.totalorder %s23, %s39
      %p41 = scmp.eq.s32.totalorder %s15, 0
      %p42 = por %p40, %p41
      %s44 = sadd.s32 %s43, 1
      %p47 = scmp.eq.s32.totalorder %s9, 1
      %p48 = scmp.ne.s32.totalorder %s43, %s45
      %p49 = scmp.eq.s32.totalorder %s9, 0
      %p50 = por %p48, %p49
      %p51 = scmp.ne.s32.totalorder %s43, %s45
      %p52 = scmp.eq.s32.totalorder %s14, 1
      %p53 = por %p51, %p52
      %p54 = scmp.ne.s32.totalorder %s45, %s46
      %p55 = scmp.eq.s32.totalorder %s14, 0
      %p56 = por %p54, %p55
      %p57 = scmp.ne.s32.totalorder %s45, %s46
      %p58 = scmp.eq.s32.totalorder %s15, 1
      %p59 = por %p57, %p58
      %p61 = scmp.ne.s32.totalorder %s46, %s60
      %p62 = scmp.eq.s32.totalorder %s15, 0
      %p63 = por %p61, %p62
      %s64 = ssub.s32 %s9, %s16
      %p65 = scmp.eq.s32.totalorder %s64, 0
      %s67 = sadd.s32 %s66, 1
      %s68 = scalar_select %p65, %s66, %s67
      %p71 = pneg %p65
      %p72 = scmp.eq.s32.totalorder %s9, 1
      %p73 = por %p71, %p72
      %p74 = scmp.ne.s32.totalorder %s66, %s69
      %p75 = scmp.eq.s32.totalorder %s9, 0
      %p76 = por %p74, %p75
      %p77 = scmp.ne.s32.totalorder %s66, %s69
      %p78 = scmp.eq.s32.totalorder %s14, 1
      %p79 = por %p77, %p78
      %p80 = scmp.ne.s32.totalorder %s69, %s70
      %p81 = scmp.eq.s32.totalorder %s14, 0
      %p82 = por %p80, %p81
      %p83 = scmp.ne.s32.totalorder %s69, %s70
      %p84 = scmp.eq.s32.totalorder %s15, 1
      %p85 = por %p83, %p84
      %p87 = scmp.ne.s32.totalorder %s70, %s86
      %p88 = scmp.eq.s32.totalorder %s15, 0
      %p89 = por %p87, %p88
      %p90 = scmp.le.s32.totalorder 1, %s9
      %p91 = scmp.lt.s32.totalorder %s9, 3
      %p92 = pnand %p90, %p91
      %p93 = pneg %p92
      // Predicated region
      $region9: #{_lambda_.1} parent=5 // pred_check
        _
      $region10: #{_lambda_.1} parent=5 // pred_check_branch
        %95 = sbr.rel (%p92) target = $region12
      $region11: #{_lambda_.1} parent=5 // pred_region
        %s96 = ssub.s32 %s9, 1
        // Predicated region
        $region13: #{_lambda_.1} parent=11 // pred_check
          %p97 = pneg %p56
        $region14: #{_lambda_.1} parent=11 // pred_check_branch
          %99 = sbr.rel (%p97) target = $region16
        $region15: #{_lambda_.1} parent=11 // pred_region
          %s101 = ssub.s32 11904, 11904
          %102 = vsyncadd [#allocation9], %s101
          %s103 = sshll.u32 [#allocation8], 4
          %s104 = int_to_ptr.vmem [resolvable:$true] %s103
          %109 = dma.hbm_to_vmem [thread:$0]  %s1, 11904, %s104, [#allocation9], 128, 128, 8
        $region16: #{_lambda_.1} parent=11 // pred_fallthru
          _
      $region12: #{_lambda_.1} parent=5 // pred_fallthru
        _
      %p110 = scmp.lt.s32.totalorder %s9, 2
      // Predicated region
      $region17: #{_lambda_.1} parent=5 // pred_check
        %p111 = pneg %p110
      $region18: #{_lambda_.1} parent=5 // pred_check_branch
        %113 = sbr.rel (%p111) target = $region20
      $region19: #{_lambda_.1} parent=5 // pred_region
        // Predicated region
        $region21: #{_lambda_.1} parent=19 // pred_check
          %p114 = pneg %p29
        $region22: #{_lambda_.1} parent=19 // pred_check_branch
          %116 = sbr.rel (%p114) target = $region24
        $region23: #{_lambda_.1} parent=19 // pred_region
          %p117 = scmp.lt.s32.totalorder %s9, 1
          %s118 = scalar_select %p117, %s9, 1
          %s119 = smul.addr %s118, 32
          %s120 = smul.addr %s119, 8
          %s121 = scalar_lea.vmem %s0, %s120
        $region24: #{_lambda_.1} parent=19 // pred_fallthru
          _
      $region20: #{_lambda_.1} parent=5 // pred_fallthru
        _
      %p122 = scmp.le.s32.totalorder 1, %s9
      %p123 = scmp.lt.s32.totalorder %s9, 3
      %p124 = pnand %p122, %p123
      %p125 = pneg %p124
      // Predicated region
      $region25: #{_lambda_.1} parent=5 // pred_check
        _
      $region26: #{_lambda_.1} parent=5 // pred_check_branch
        %127 = sbr.rel (%p124) target = $region28
      $region27: #{_lambda_.1} parent=5 // pred_region
        %s128 = ssub.s32 %s9, 1
        // Predicated region
        $region29: #{_lambda_.1} parent=27 // pred_check
          %p129 = pneg %p56
        $region30: #{_lambda_.1} parent=27 // pred_check_branch
          %131 = sbr.rel (%p129) target = $region32
        $region31: #{_lambda_.1} parent=27 // pred_region
          %132 = dma.done [#allocation9], 11904
        $region32: #{_lambda_.1} parent=27 // pred_fallthru
          _
        %p133 = scmp.lt.s32.totalorder %s14, 1
        %s134 = scalar_select %p133, %s14, 1
        %s135 = smul.addr %s134, 32
        %s136 = smul.addr %s135, 8
        %s137 = scalar_lea.vmem %s0, %s136
        %p138 = pneg %p35
        %p139 = pneg %p32
        %p140 = pneg %p56
        %p141 = pneg %p53
        %p142 = pneg %p82
        %p143 = pneg %p79
        %p144 = scmp.lt.s32.totalorder %s14, 1
        %s145 = scalar_select %p144, %s14, 1
        %s146 = smul.addr %s145, 4
        %s147 = smul.addr %s146, 8
        %s148 = scalar_lea.vmem %s2, %s147
        %p149 = scmp.lt.s32.totalorder %s14, 1
        %s150 = scalar_select %p149, %s14, 1
        %s151 = smul.addr %s150, 32
        %s152 = smul.addr %s151, 8
        %s153 = scalar_lea.vmem %s0, %s152
        %p154 = scmp.lt.s32.totalorder %s14, 1
        %s155 = scalar_select %p154, %s14, 1
        %s156 = smul.addr %s155, 4
        %s157 = smul.addr %s156, 8
        %s158 = scalar_lea.vmem %s2, %s157
        %vm159 = vcmask 4096
        %160 = vst.msk [vmem:[#allocation2] sm:$0x1f] %vm159, 0.0
        %vm161 = vcmask 7168
        %162 = vst.msk [vmem:[#allocation2 + $0x105] sm:$0xff] %vm161, 0.0
        %vm163 = vcmask 2048
        %164 = vst.msk [vmem:[#allocation2 + $0x10d] sm:$0x7] %vm163, 0.0
        %vm165 = vcmask 126976
        %166 = vst.msk [vmem:[#allocation3] sm:$0x1f] %vm165, 0.0
        %vm167 = vcmask 130048
        %168 = vst.msk [vmem:[#allocation3 + $0x85] sm:$0xff] %vm167, 0.0
        %vm169 = vcmask 124928
        %170 = vst.msk [vmem:[#allocation3 + $0x8d] sm:$0x7] %vm169, 0.0
        %vm171 = vcmask 125952
        %172 = vst.msk [vmem:[#allocation4] sm:$0xf] %vm171, 0.0
        %173 = vst.msk [vmem:[#allocation4 + $0x44] sm:$0xf] %vm171, 0.0
        %vm174 = vcmask 191488
        %175 = vst.msk [vmem:[#allocation5] sm:$0xf] %vm174, 0.0
        %176 = vst.msk [vmem:[#allocation5 + $0x24] sm:$0xf] %vm174, 0.0
        %vm177 = vcmask 189440
        %178 = vst.msk [vmem:[#allocation6] sm:$0x3] %vm177, 0.0
        %vm179 = vcmask 193536
        %180 = vst.msk [vmem:[#allocation6 + $0x12] sm:$0x3f] %vm179, 0.0
        %v181 = vld [vmem:[%s153] sm:$0xff]
        %v182 = vld [vmem:[%s153 + $0x8] sm:$0xff]
        %v183 = vld [vmem:[%s153 + $0x10] sm:$0xff]
        %v184 = vld [vmem:[%s153 + $0x18] sm:$0xff]
        %v185 = vld [vmem:[%s153 + $0x20] sm:$0xff]
        %v186 = vld [vmem:[%s153 + $0x28] sm:$0xff]
        %v187 = vld [vmem:[%s153 + $0x30] sm:$0xff]
        %v188 = vld [vmem:[%s153 + $0x38] sm:$0xff]
        %v189 = vld [vmem:[%s153 + $0x40] sm:$0xff]
        %v190 = vld [vmem:[%s153 + $0x48] sm:$0xff]
        %v191 = vld [vmem:[%s153 + $0x50] sm:$0xff]
        %v192 = vld [vmem:[%s153 + $0x58] sm:$0xff]
        %v193 = vld [vmem:[%s153 + $0x60] sm:$0xff]
        %v194 = vld [vmem:[%s153 + $0x68] sm:$0xff]
        %v195 = vld [vmem:[%s153 + $0x70] sm:$0xff]
        %v196 = vld [vmem:[%s153 + $0x78] sm:$0xff]
        %v197 = vld [vmem:[%s153 + $0x80] sm:$0xff]
        %v198 = vld [vmem:[%s153 + $0x88] sm:$0xff]
        %v199 = vld [vmem:[%s153 + $0x90] sm:$0xff]
        %v200 = vld [vmem:[%s153 + $0x98] sm:$0xff]
        %v201 = vld [vmem:[%s153 + $0xa0] sm:$0xff]
        %v202 = vld [vmem:[%s153 + $0xa8] sm:$0xff]
        %v203 = vld [vmem:[%s153 + $0xb0] sm:$0xff]
        %v204 = vld [vmem:[%s153 + $0xb8] sm:$0xff]
        %v205 = vld [vmem:[%s153 + $0xc0] sm:$0xff]
        %v206 = vld [vmem:[%s153 + $0xc8] sm:$0xff]
        %v207 = vld [vmem:[%s153 + $0xd0] sm:$0xff]
        %v208 = vld [vmem:[%s153 + $0xd8] sm:$0xff]
        %v209 = vld [vmem:[%s153 + $0xe0] sm:$0xff]
        %v210 = vld [vmem:[%s153 + $0xe8] sm:$0xff]
        %v211 = vld [vmem:[%s153 + $0xf0] sm:$0xff]
        %v212 = vld [vmem:[%s153 + $0xf8] sm:$0xff]
        %213 = vst.msk [vmem:[#allocation2 + $0x5] sm:$0xff] %vm161, %v181
        %214 = vst.msk [vmem:[#allocation2 + $0xd] sm:$0xff] %vm161, %v182
        %215 = vst.msk [vmem:[#allocation2 + $0x15] sm:$0xff] %vm161, %v183
        %216 = vst.msk [vmem:[#allocation2 + $0x1d] sm:$0xff] %vm161, %v184
        %217 = vst.msk [vmem:[#allocation2 + $0x25] sm:$0xff] %vm161, %v185
        %218 = vst.msk [vmem:[#allocation2 + $0x2d] sm:$0xff] %vm161, %v186
        %219 = vst.msk [vmem:[#allocation2 + $0x35] sm:$0xff] %vm161, %v187
        %220 = vst.msk [vmem:[#allocation2 + $0x3d] sm:$0xff] %vm161, %v188
        %221 = vst.msk [vmem:[#allocation2 + $0x45] sm:$0xff] %vm161, %v189
        %222 = vst.msk [vmem:[#allocation2 + $0x4d] sm:$0xff] %vm161, %v190
        %223 = vst.msk [vmem:[#allocation2 + $0x55] sm:$0xff] %vm161, %v191
        %224 = vst.msk [vmem:[#allocation2 + $0x5d] sm:$0xff] %vm161, %v192
        %225 = vst.msk [vmem:[#allocation2 + $0x65] sm:$0xff] %vm161, %v193
        %226 = vst.msk [vmem:[#allocation2 + $0x6d] sm:$0xff] %vm161, %v194
        %227 = vst.msk [vmem:[#allocation2 + $0x75] sm:$0xff] %vm161, %v195
        %228 = vst.msk [vmem:[#allocation2 + $0x7d] sm:$0xff] %vm161, %v196
        %229 = vst.msk [vmem:[#allocation2 + $0x85] sm:$0xff] %vm161, %v197
        %230 = vst.msk [vmem:[#allocation2 + $0x8d] sm:$0xff] %vm161, %v198
        %231 = vst.msk [vmem:[#allocation2 + $0x95] sm:$0xff] %vm161, %v199
        %232 = vst.msk [vmem:[#allocation2 + $0x9d] sm:$0xff] %vm161, %v200
        %233 = vst.msk [vmem:[#allocation2 + $0xa5] sm:$0xff] %vm161, %v201
        %234 = vst.msk [vmem:[#allocation2 + $0xad] sm:$0xff] %vm161, %v202
        %235 = vst.msk [vmem:[#allocation2 + $0xb5] sm:$0xff] %vm161, %v203
        %236 = vst.msk [vmem:[#allocation2 + $0xbd] sm:$0xff] %vm161, %v204
        %237 = vst.msk [vmem:[#allocation2 + $0xc5] sm:$0xff] %vm161, %v205
        %238 = vst.msk [vmem:[#allocation2 + $0xcd] sm:$0xff] %vm161, %v206
        %239 = vst.msk [vmem:[#allocation2 + $0xd5] sm:$0xff] %vm161, %v207
        %240 = vst.msk [vmem:[#allocation2 + $0xdd] sm:$0xff] %vm161, %v208
        %241 = vst.msk [vmem:[#allocation2 + $0xe5] sm:$0xff] %vm161, %v209
        %242 = vst.msk [vmem:[#allocation2 + $0xed] sm:$0xff] %vm161, %v210
        %243 = vst.msk [vmem:[#allocation2 + $0xf5] sm:$0xff] %vm161, %v211
        %244 = vst.msk [vmem:[#allocation2 + $0xfd] sm:$0xff] %vm161, %v212
        %v245 = vld [vmem:[#allocation2] ss:$2 sm:$0xff]
        %s246 = scalar_lea.vmem [#allocation2], 16
        %v247 = vld [vmem:[%s246] ss:$2 sm:$0xff]
        %s248 = scalar_lea.vmem [#allocation2], 32
        %v249 = vld [vmem:[%s248] ss:$2 sm:$0xff]
        %s250 = scalar_lea.vmem [#allocation2], 48
        %v251 = vld [vmem:[%s250] ss:$2 sm:$0xff]
        %s252 = scalar_lea.vmem [#allocation2], 64
        %v253 = vld [vmem:[%s252] ss:$2 sm:$0xff]
        %s254 = scalar_lea.vmem [#allocation2], 80
        %v255 = vld [vmem:[%s254] ss:$2 sm:$0xff]
        %s256 = scalar_lea.vmem [#allocation2], 96
        %v257 = vld [vmem:[%s256] ss:$2 sm:$0xff]
        %s258 = scalar_lea.vmem [#allocation2], 112
        %v259 = vld [vmem:[%s258] ss:$2 sm:$0xff]
        %s260 = scalar_lea.vmem [#allocation2], 128
        %v261 = vld [vmem:[%s260] ss:$2 sm:$0xff]
        %s262 = scalar_lea.vmem [#allocation2], 144
        %v263 = vld [vmem:[%s262] ss:$2 sm:$0xff]
        %s264 = scalar_lea.vmem [#allocation2], 160
        %v265 = vld [vmem:[%s264] ss:$2 sm:$0xff]
        %s266 = scalar_lea.vmem [#allocation2], 176
        %v267 = vld [vmem:[%s266] ss:$2 sm:$0xff]
        %s268 = scalar_lea.vmem [#allocation2], 192
        %v269 = vld [vmem:[%s268] ss:$2 sm:$0xff]
        %s270 = scalar_lea.vmem [#allocation2], 208
        %v271 = vld [vmem:[%s270] ss:$2 sm:$0xff]
        %s272 = scalar_lea.vmem [#allocation2], 224
        %v273 = vld [vmem:[%s272] ss:$2 sm:$0xff]
        %s274 = scalar_lea.vmem [#allocation2], 240
        %v275 = vld [vmem:[%s274] ss:$2 sm:$0xff]
        %276 = vst.msk [vmem:[#allocation7] sm:$0xff] %vm161, %v245
        %277 = vst.msk [vmem:[#allocation7 + $0x10] sm:$0xff] %vm161, %v247
        %278 = vst.msk [vmem:[#allocation7 + $0x20] sm:$0xff] %vm161, %v249
        %279 = vst.msk [vmem:[#allocation7 + $0x30] sm:$0xff] %vm161, %v251
        %280 = vst.msk [vmem:[#allocation7 + $0x40] sm:$0xff] %vm161, %v253
        %281 = vst.msk [vmem:[#allocation7 + $0x50] sm:$0xff] %vm161, %v255
        %282 = vst.msk [vmem:[#allocation7 + $0x60] sm:$0xff] %vm161, %v257
        %283 = vst.msk [vmem:[#allocation7 + $0x70] sm:$0xff] %vm161, %v259
        %284 = vst.msk [vmem:[#allocation7 + $0x80] sm:$0xff] %vm161, %v261
        %285 = vst.msk [vmem:[#allocation7 + $0x90] sm:$0xff] %vm161, %v263
        %286 = vst.msk [vmem:[#allocation7 + $0xa0] sm:$0xff] %vm161, %v265
        %287 = vst.msk [vmem:[#allocation7 + $0xb0] sm:$0xff] %vm161, %v267
        %288 = vst.msk [vmem:[#allocation7 + $0xc0] sm:$0xff] %vm161, %v269
        %289 = vst.msk [vmem:[#allocation7 + $0xd0] sm:$0xff] %vm161, %v271
        %290 = vst.msk [vmem:[#allocation7 + $0xe0] sm:$0xff] %vm161, %v273
        %291 = vst.msk [vmem:[#allocation7 + $0xf0] sm:$0xff] %vm161, %v275
        %s292 = scalar_lea.vmem [#allocation2], 1
        %v293 = vld [vmem:[%s292] ss:$2 sm:$0xff]
        %s294 = scalar_lea.vmem [#allocation2], 17
        %v295 = vld [vmem:[%s294] ss:$2 sm:$0xff]
        %s296 = scalar_lea.vmem [#allocation2], 33
        %v297 = vld [vmem:[%s296] ss:$2 sm:$0xff]
        %s298 = scalar_lea.vmem [#allocation2], 49
        %v299 = vld [vmem:[%s298] ss:$2 sm:$0xff]
        %s300 = scalar_lea.vmem [#allocation2], 65
        %v301 = vld [vmem:[%s300] ss:$2 sm:$0xff]
        %s302 = scalar_lea.vmem [#allocation2], 81
        %v303 = vld [vmem:[%s302] ss:$2 sm:$0xff]
        %s304 = scalar_lea.vmem [#allocation2], 97
        %v305 = vld [vmem:[%s304] ss:$2 sm:$0xff]
        %s306 = scalar_lea.vmem [#allocation2], 113
        %v307 = vld [vmem:[%s306] ss:$2 sm:$0xff]
        %s308 = scalar_lea.vmem [#allocation2], 129
        %v309 = vld [vmem:[%s308] ss:$2 sm:$0xff]
        %s310 = scalar_lea.vmem [#allocation2], 145
        %v311 = vld [vmem:[%s310] ss:$2 sm:$0xff]
        %s312 = scalar_lea.vmem [#allocation2], 161
        %v313 = vld [vmem:[%s312] ss:$2 sm:$0xff]
        %s314 = scalar_lea.vmem [#allocation2], 177
        %v315 = vld [vmem:[%s314] ss:$2 sm:$0xff]
        %s316 = scalar_lea.vmem [#allocation2], 193
        %v317 = vld [vmem:[%s316] ss:$2 sm:$0xff]
        %s318 = scalar_lea.vmem [#allocation2], 209
        %v319 = vld [vmem:[%s318] ss:$2 sm:$0xff]
        %s320 = scalar_lea.vmem [#allocation2], 225
        %v321 = vld [vmem:[%s320] ss:$2 sm:$0xff]
        %s322 = scalar_lea.vmem [#allocation2], 241
        %v323 = vld [vmem:[%s322] ss:$2 sm:$0xff]
        %340 = vrot.lane.b32.xlu0 %v293, 1
        %v341 = vpop.permute.xlu0 %340
        %342 = vrot.lane.b32.xlu0 %v295, 1
        %v343 = vpop.permute.xlu0 %342
        %344 = vrot.lane.b32.xlu0 %v297, 1
        %v345 = vpop.permute.xlu0 %344
        %346 = vrot.lane.b32.xlu0 %v299, 1
        %v347 = vpop.permute.xlu0 %346
        %348 = vrot.lane.b32.xlu0 %v301, 1
        %v349 = vpop.permute.xlu0 %348
        %350 = vrot.lane.b32.xlu0 %v303, 1
        %v351 = vpop.permute.xlu0 %350
        %352 = vrot.lane.b32.xlu0 %v305, 1
        %v353 = vpop.permute.xlu0 %352
        %354 = vrot.lane.b32.xlu0 %v307, 1
        %v355 = vpop.permute.xlu0 %354
        %356 = vrot.lane.b32.xlu0 %v309, 1
        %v357 = vpop.permute.xlu0 %356
        %358 = vrot.lane.b32.xlu0 %v311, 1
        %v359 = vpop.permute.xlu0 %358
        %360 = vrot.lane.b32.xlu0 %v313, 1
        %v361 = vpop.permute.xlu0 %360
        %362 = vrot.lane.b32.xlu0 %v315, 1
        %v363 = vpop.permute.xlu0 %362
        %364 = vrot.lane.b32.xlu0 %v317, 1
        %v365 = vpop.permute.xlu0 %364
        %366 = vrot.lane.b32.xlu0 %v319, 1
        %v367 = vpop.permute.xlu0 %366
        %368 = vrot.lane.b32.xlu0 %v321, 1
        %v369 = vpop.permute.xlu0 %368
        %370 = vrot.lane.b32.xlu0 %v323, 1
        %v371 = vpop.permute.xlu0 %370
        %vm388 = vcmask 15368
        %389 = vst.msk [vmem:[#allocation7] sm:$0xff] %vm388, %v341
        %390 = vst.msk [vmem:[#allocation7 + $0x10] sm:$0xff] %vm388, %v343
        %391 = vst.msk [vmem:[#allocation7 + $0x20] sm:$0xff] %vm388, %v345
        %392 = vst.msk [vmem:[#allocation7 + $0x30] sm:$0xff] %vm388, %v347
        %393 = vst.msk [vmem:[#allocation7 + $0x40] sm:$0xff] %vm388, %v349
        %394 = vst.msk [vmem:[#allocation7 + $0x50] sm:$0xff] %vm388, %v351
        %395 = vst.msk [vmem:[#allocation7 + $0x60] sm:$0xff] %vm388, %v353
        %396 = vst.msk [vmem:[#allocation7 + $0x70] sm:$0xff] %vm388, %v355
        %397 = vst.msk [vmem:[#allocation7 + $0x80] sm:$0xff] %vm388, %v357
        %398 = vst.msk [vmem:[#allocation7 + $0x90] sm:$0xff] %vm388, %v359
        %399 = vst.msk [vmem:[#allocation7 + $0xa0] sm:$0xff] %vm388, %v361
        %400 = vst.msk [vmem:[#allocation7 + $0xb0] sm:$0xff] %vm388, %v363
        %401 = vst.msk [vmem:[#allocation7 + $0xc0] sm:$0xff] %vm388, %v365
        %402 = vst.msk [vmem:[#allocation7 + $0xd0] sm:$0xff] %vm388, %v367
        %403 = vst.msk [vmem:[#allocation7 + $0xe0] sm:$0xff] %vm388, %v369
        %404 = vst.msk [vmem:[#allocation7 + $0xf0] sm:$0xff] %vm388, %v371
        %s405 = scalar_lea.vmem [#allocation2], 2
        %v406 = vld [vmem:[%s405] ss:$2 sm:$0xff]
        %s407 = scalar_lea.vmem [#allocation2], 18
        %v408 = vld [vmem:[%s407] ss:$2 sm:$0xff]
        %s409 = scalar_lea.vmem [#allocation2], 34
        %v410 = vld [vmem:[%s409] ss:$2 sm:$0xff]
        %s411 = scalar_lea.vmem [#allocation2], 50
        %v412 = vld [vmem:[%s411] ss:$2 sm:$0xff]
        %s413 = scalar_lea.vmem [#allocation2], 66
        %v414 = vld [vmem:[%s413] ss:$2 sm:$0xff]
        %s415 = scalar_lea.vmem [#allocation2], 82
        %v416 = vld [vmem:[%s415] ss:$2 sm:$0xff]
        %s417 = scalar_lea.vmem [#allocation2], 98
        %v418 = vld [vmem:[%s417] ss:$2 sm:$0xff]
        %s419 = scalar_lea.vmem [#allocation2], 114
        %v420 = vld [vmem:[%s419] ss:$2 sm:$0xff]
        %s421 = scalar_lea.vmem [#allocation2], 130
        %v422 = vld [vmem:[%s421] ss:$2 sm:$0xff]
        %s423 = scalar_lea.vmem [#allocation2], 146
        %v424 = vld [vmem:[%s423] ss:$2 sm:$0xff]
        %s425 = scalar_lea.vmem [#allocation2], 162
        %v426 = vld [vmem:[%s425] ss:$2 sm:$0xff]
        %s427 = scalar_lea.vmem [#allocation2], 178
        %v428 = vld [vmem:[%s427] ss:$2 sm:$0xff]
        %s429 = scalar_lea.vmem [#allocation2], 194
        %v430 = vld [vmem:[%s429] ss:$2 sm:$0xff]
        %s431 = scalar_lea.vmem [#allocation2], 210
        %v432 = vld [vmem:[%s431] ss:$2 sm:$0xff]
        %s433 = scalar_lea.vmem [#allocation2], 226
        %v434 = vld [vmem:[%s433] ss:$2 sm:$0xff]
        %s435 = scalar_lea.vmem [#allocation2], 242
        %v436 = vld [vmem:[%s435] ss:$2 sm:$0xff]
        %453 = vrot.lane.b32.xlu0 %v406, 2
        %v454 = vpop.permute.xlu0 %453
        %455 = vrot.lane.b32.xlu0 %v408, 2
        %v456 = vpop.permute.xlu0 %455
        %457 = vrot.lane.b32.xlu0 %v410, 2
        %v458 = vpop.permute.xlu0 %457
        %459 = vrot.lane.b32.xlu0 %v412, 2
        %v460 = vpop.permute.xlu0 %459
        %461 = vrot.lane.b32.xlu0 %v414, 2
        %v462 = vpop.permute.xlu0 %461
        %463 = vrot.lane.b32.xlu0 %v416, 2
        %v464 = vpop.permute.xlu0 %463
        %465 = vrot.lane.b32.xlu0 %v418, 2
        %v466 = vpop.permute.xlu0 %465
        %467 = vrot.lane.b32.xlu0 %v420, 2
        %v468 = vpop.permute.xlu0 %467
        %469 = vrot.lane.b32.xlu0 %v422, 2
        %v470 = vpop.permute.xlu0 %469
        %471 = vrot.lane.b32.xlu0 %v424, 2
        %v472 = vpop.permute.xlu0 %471
        %473 = vrot.lane.b32.xlu0 %v426, 2
        %v474 = vpop.permute.xlu0 %473
        %475 = vrot.lane.b32.xlu0 %v428, 2
        %v476 = vpop.permute.xlu0 %475
        %477 = vrot.lane.b32.xlu0 %v430, 2
        %v478 = vpop.permute.xlu0 %477
        %479 = vrot.lane.b32.xlu0 %v432, 2
        %v480 = vpop.permute.xlu0 %479
        %481 = vrot.lane.b32.xlu0 %v434, 2
        %v482 = vpop.permute.xlu0 %481
        %483 = vrot.lane.b32.xlu0 %v436, 2
        %v484 = vpop.permute.xlu0 %483
        %vm501 = vcmask 23568
        %502 = vst.msk [vmem:[#allocation7] sm:$0xff] %vm501, %v454
        %503 = vst.msk [vmem:[#allocation7 + $0x10] sm:$0xff] %vm501, %v456
        %504 = vst.msk [vmem:[#allocation7 + $0x20] sm:$0xff] %vm501, %v458
        %505 = vst.msk [vmem:[#allocation7 + $0x30] sm:$0xff] %vm501, %v460
        %506 = vst.msk [vmem:[#allocation7 + $0x40] sm:$0xff] %vm501, %v462
        %507 = vst.msk [vmem:[#allocation7 + $0x50] sm:$0xff] %vm501, %v464
        %508 = vst.msk [vmem:[#allocation7 + $0x60] sm:$0xff] %vm501, %v466
        %509 = vst.msk [vmem:[#allocation7 + $0x70] sm:$0xff] %vm501, %v468
        %510 = vst.msk [vmem:[#allocation7 + $0x80] sm:$0xff] %vm501, %v470
        %511 = vst.msk [vmem:[#allocation7 + $0x90] sm:$0xff] %vm501, %v472
        %512 = vst.msk [vmem:[#allocation7 + $0xa0] sm:$0xff] %vm501, %v474
        %513 = vst.msk [vmem:[#allocation7 + $0xb0] sm:$0xff] %vm501, %v476
        %514 = vst.msk [vmem:[#allocation7 + $0xc0] sm:$0xff] %vm501, %v478
        %515 = vst.msk [vmem:[#allocation7 + $0xd0] sm:$0xff] %vm501, %v480
        %516 = vst.msk [vmem:[#allocation7 + $0xe0] sm:$0xff] %vm501, %v482
        %517 = vst.msk [vmem:[#allocation7 + $0xf0] sm:$0xff] %vm501, %v484
        %s518 = scalar_lea.vmem [#allocation2], 3
        %v519 = vld [vmem:[%s518] ss:$2 sm:$0xff]
        %s520 = scalar_lea.vmem [#allocation2], 19
        %v521 = vld [vmem:[%s520] ss:$2 sm:$0xff]
        %s522 = scalar_lea.vmem [#allocation2], 35
        %v523 = vld [vmem:[%s522] ss:$2 sm:$0xff]
        %s524 = scalar_lea.vmem [#allocation2], 51
        %v525 = vld [vmem:[%s524] ss:$2 sm:$0xff]
        %s526 = scalar_lea.vmem [#allocation2], 67
        %v527 = vld [vmem:[%s526] ss:$2 sm:$0xff]
        %s528 = scalar_lea.vmem [#allocation2], 83
        %v529 = vld [vmem:[%s528] ss:$2 sm:$0xff]
        %s530 = scalar_lea.vmem [#allocation2], 99
        %v531 = vld [vmem:[%s530] ss:$2 sm:$0xff]
        %s532 = scalar_lea.vmem [#allocation2], 115
        %v533 = vld [vmem:[%s532] ss:$2 sm:$0xff]
        %s534 = scalar_lea.vmem [#allocation2], 131
        %v535 = vld [vmem:[%s534] ss:$2 sm:$0xff]
        %s536 = scalar_lea.vmem [#allocation2], 147
        %v537 = vld [vmem:[%s536] ss:$2 sm:$0xff]
        %s538 = scalar_lea.vmem [#allocation2], 163
        %v539 = vld [vmem:[%s538] ss:$2 sm:$0xff]
        %s540 = scalar_lea.vmem [#allocation2], 179
        %v541 = vld [vmem:[%s540] ss:$2 sm:$0xff]
        %s542 = scalar_lea.vmem [#allocation2], 195
        %v543 = vld [vmem:[%s542] ss:$2 sm:$0xff]
        %s544 = scalar_lea.vmem [#allocation2], 211
        %v545 = vld [vmem:[%s544] ss:$2 sm:$0xff]
        %s546 = scalar_lea.vmem [#allocation2], 227
        %v547 = vld [vmem:[%s546] ss:$2 sm:$0xff]
        %s548 = scalar_lea.vmem [#allocation2], 243
        %v549 = vld [vmem:[%s548] ss:$2 sm:$0xff]
        %566 = vrot.lane.b32.xlu0 %v519, 3
        %v567 = vpop.permute.xlu0 %566
        %568 = vrot.lane.b32.xlu0 %v521, 3
        %v569 = vpop.permute.xlu0 %568
        %570 = vrot.lane.b32.xlu0 %v523, 3
        %v571 = vpop.permute.xlu0 %570
        %572 = vrot.lane.b32.xlu0 %v525, 3
        %v573 = vpop.permute.xlu0 %572
        %574 = vrot.lane.b32.xlu0 %v527, 3
        %v575 = vpop.permute.xlu0 %574
        %576 = vrot.lane.b32.xlu0 %v529, 3
        %v577 = vpop.permute.xlu0 %576
        %578 = vrot.lane.b32.xlu0 %v531, 3
        %v579 = vpop.permute.xlu0 %578
        %580 = vrot.lane.b32.xlu0 %v533, 3
        %v581 = vpop.permute.xlu0 %580
        %582 = vrot.lane.b32.xlu0 %v535, 3
        %v583 = vpop.permute.xlu0 %582
        %584 = vrot.lane.b32.xlu0 %v537, 3
        %v585 = vpop.permute.xlu0 %584
        %586 = vrot.lane.b32.xlu0 %v539, 3
        %v587 = vpop.permute.xlu0 %586
        %588 = vrot.lane.b32.xlu0 %v541, 3
        %v589 = vpop.permute.xlu0 %588
        %590 = vrot.lane.b32.xlu0 %v543, 3
        %v591 = vpop.permute.xlu0 %590
        %592 = vrot.lane.b32.xlu0 %v545, 3
        %v593 = vpop.permute.xlu0 %592
        %594 = vrot.lane.b32.xlu0 %v547, 3
        %v595 = vpop.permute.xlu0 %594
        %596 = vrot.lane.b32.xlu0 %v549, 3
        %v597 = vpop.permute.xlu0 %596
        %vm614 = vcmask 31768
        %615 = vst.msk [vmem:[#allocation7] sm:$0xff] %vm614, %v567
        %616 = vst.msk [vmem:[#allocation7 + $0x10] sm:$0xff] %vm614, %v569
        %617 = vst.msk [vmem:[#allocation7 + $0x20] sm:$0xff] %vm614, %v571
        %618 = vst.msk [vmem:[#allocation7 + $0x30] sm:$0xff] %vm614, %v573
        %619 = vst.msk [vmem:[#allocation7 + $0x40] sm:$0xff] %vm614, %v575
        %620 = vst.msk [vmem:[#allocation7 + $0x50] sm:$0xff] %vm614, %v577
        %621 = vst.msk [vmem:[#allocation7 + $0x60] sm:$0xff] %vm614, %v579
        %622 = vst.msk [vmem:[#allocation7 + $0x70] sm:$0xff] %vm614, %v581
        %623 = vst.msk [vmem:[#allocation7 + $0x80] sm:$0xff] %vm614, %v583
        %624 = vst.msk [vmem:[#allocation7 + $0x90] sm:$0xff] %vm614, %v585
        %625 = vst.msk [vmem:[#allocation7 + $0xa0] sm:$0xff] %vm614, %v587
        %626 = vst.msk [vmem:[#allocation7 + $0xb0] sm:$0xff] %vm614, %v589
        %627 = vst.msk [vmem:[#allocation7 + $0xc0] sm:$0xff] %vm614, %v591
        %628 = vst.msk [vmem:[#allocation7 + $0xd0] sm:$0xff] %vm614, %v593
        %629 = vst.msk [vmem:[#allocation7 + $0xe0] sm:$0xff] %vm614, %v595
        %630 = vst.msk [vmem:[#allocation7 + $0xf0] sm:$0xff] %vm614, %v597
        %s631 = scalar_lea.vmem [#allocation2], 4
        %v632 = vld [vmem:[%s631] ss:$2 sm:$0xff]
        %s633 = scalar_lea.vmem [#allocation2], 20
        %v634 = vld [vmem:[%s633] ss:$2 sm:$0xff]
        %s635 = scalar_lea.vmem [#allocation2], 36
        %v636 = vld [vmem:[%s635] ss:$2 sm:$0xff]
        %s637 = scalar_lea.vmem [#allocation2], 52
        %v638 = vld [vmem:[%s637] ss:$2 sm:$0xff]
        %s639 = scalar_lea.vmem [#allocation2], 68
        %v640 = vld [vmem:[%s639] ss:$2 sm:$0xff]
        %s641 = scalar_lea.vmem [#allocation2], 84
        %v642 = vld [vmem:[%s641] ss:$2 sm:$0xff]
        %s643 = scalar_lea.vmem [#allocation2], 100
        %v644 = vld [vmem:[%s643] ss:$2 sm:$0xff]
        %s645 = scalar_lea.vmem [#allocation2], 116
        %v646 = vld [vmem:[%s645] ss:$2 sm:$0xff]
        %s647 = scalar_lea.vmem [#allocation2], 132
        %v648 = vld [vmem:[%s647] ss:$2 sm:$0xff]
        %s649 = scalar_lea.vmem [#allocation2], 148
        %v650 = vld [vmem:[%s649] ss:$2 sm:$0xff]
        %s651 = scalar_lea.vmem [#allocation2], 164
        %v652 = vld [vmem:[%s651] ss:$2 sm:$0xff]
        %s653 = scalar_lea.vmem [#allocation2], 180
        %v654 = vld [vmem:[%s653] ss:$2 sm:$0xff]
        %s655 = scalar_lea.vmem [#allocation2], 196
        %v656 = vld [vmem:[%s655] ss:$2 sm:$0xff]
        %s657 = scalar_lea.vmem [#allocation2], 212
        %v658 = vld [vmem:[%s657] ss:$2 sm:$0xff]
        %s659 = scalar_lea.vmem [#allocation2], 228
        %v660 = vld [vmem:[%s659] ss:$2 sm:$0xff]
        %s661 = scalar_lea.vmem [#allocation2], 244
        %v662 = vld [vmem:[%s661] ss:$2 sm:$0xff]
        %679 = vrot.lane.b32.xlu0 %v632, 4
        %v680 = vpop.permute.xlu0 %679
        %681 = vrot.lane.b32.xlu0 %v634, 4
        %v682 = vpop.permute.xlu0 %681
        %683 = vrot.lane.b32.xlu0 %v636, 4
        %v684 = vpop.permute.xlu0 %683
        %685 = vrot.lane.b32.xlu0 %v638, 4
        %v686 = vpop.permute.xlu0 %685
        %687 = vrot.lane.b32.xlu0 %v640, 4
        %v688 = vpop.permute.xlu0 %687
        %689 = vrot.lane.b32.xlu0 %v642, 4
        %v690 = vpop.permute.xlu0 %689
        %691 = vrot.lane.b32.xlu0 %v644, 4
        %v692 = vpop.permute.xlu0 %691
        %693 = vrot.lane.b32.xlu0 %v646, 4
        %v694 = vpop.permute.xlu0 %693
        %695 = vrot.lane.b32.xlu0 %v648, 4
        %v696 = vpop.permute.xlu0 %695
        %697 = vrot.lane.b32.xlu0 %v650, 4
        %v698 = vpop.permute.xlu0 %697
        %699 = vrot.lane.b32.xlu0 %v652, 4
        %v700 = vpop.permute.xlu0 %699
        %701 = vrot.lane.b32.xlu0 %v654, 4
        %v702 = vpop.permute.xlu0 %701
        %703 = vrot.lane.b32.xlu0 %v656, 4
        %v704 = vpop.permute.xlu0 %703
        %705 = vrot.lane.b32.xlu0 %v658, 4
        %v706 = vpop.permute.xlu0 %705
        %707 = vrot.lane.b32.xlu0 %v660, 4
        %v708 = vpop.permute.xlu0 %707
        %709 = vrot.lane.b32.xlu0 %v662, 4
        %v710 = vpop.permute.xlu0 %709
        %vm727 = vcmask 39968
        %728 = vst.msk [vmem:[#allocation7] sm:$0xff] %vm727, %v680
        %729 = vst.msk [vmem:[#allocation7 + $0x10] sm:$0xff] %vm727, %v682
        %730 = vst.msk [vmem:[#allocation7 + $0x20] sm:$0xff] %vm727, %v684
        %731 = vst.msk [vmem:[#allocation7 + $0x30] sm:$0xff] %vm727, %v686
        %732 = vst.msk [vmem:[#allocation7 + $0x40] sm:$0xff] %vm727, %v688
        %733 = vst.msk [vmem:[#allocation7 + $0x50] sm:$0xff] %vm727, %v690
        %734 = vst.msk [vmem:[#allocation7 + $0x60] sm:$0xff] %vm727, %v692
        %735 = vst.msk [vmem:[#allocation7 + $0x70] sm:$0xff] %vm727, %v694
        %736 = vst.msk [vmem:[#allocation7 + $0x80] sm:$0xff] %vm727, %v696
        %737 = vst.msk [vmem:[#allocation7 + $0x90] sm:$0xff] %vm727, %v698
        %738 = vst.msk [vmem:[#allocation7 + $0xa0] sm:$0xff] %vm727, %v700
        %739 = vst.msk [vmem:[#allocation7 + $0xb0] sm:$0xff] %vm727, %v702
        %740 = vst.msk [vmem:[#allocation7 + $0xc0] sm:$0xff] %vm727, %v704
        %741 = vst.msk [vmem:[#allocation7 + $0xd0] sm:$0xff] %vm727, %v706
        %742 = vst.msk [vmem:[#allocation7 + $0xe0] sm:$0xff] %vm727, %v708
        %743 = vst.msk [vmem:[#allocation7 + $0xf0] sm:$0xff] %vm727, %v710
        %s744 = scalar_lea.vmem [#allocation2], 5
        %v745 = vld [vmem:[%s744] ss:$2 sm:$0xff]
        %s746 = scalar_lea.vmem [#allocation2], 21
        %v747 = vld [vmem:[%s746] ss:$2 sm:$0xff]
        %s748 = scalar_lea.vmem [#allocation2], 37
        %v749 = vld [vmem:[%s748] ss:$2 sm:$0xff]
        %s750 = scalar_lea.vmem [#allocation2], 53
        %v751 = vld [vmem:[%s750] ss:$2 sm:$0xff]
        %s752 = scalar_lea.vmem [#allocation2], 69
        %v753 = vld [vmem:[%s752] ss:$2 sm:$0xff]
        %s754 = scalar_lea.vmem [#allocation2], 85
        %v755 = vld [vmem:[%s754] ss:$2 sm:$0xff]
        %s756 = scalar_lea.vmem [#allocation2], 101
        %v757 = vld [vmem:[%s756] ss:$2 sm:$0xff]
        %s758 = scalar_lea.vmem [#allocation2], 117
        %v759 = vld [vmem:[%s758] ss:$2 sm:$0xff]
        %s760 = scalar_lea.vmem [#allocation2], 133
        %v761 = vld [vmem:[%s760] ss:$2 sm:$0xff]
        %s762 = scalar_lea.vmem [#allocation2], 149
        %v763 = vld [vmem:[%s762] ss:$2 sm:$0xff]
        %s764 = scalar_lea.vmem [#allocation2], 165
        %v765 = vld [vmem:[%s764] ss:$2 sm:$0xff]
        %s766 = scalar_lea.vmem [#allocation2], 181
        %v767 = vld [vmem:[%s766] ss:$2 sm:$0xff]
        %s768 = scalar_lea.vmem [#allocation2], 197
        %v769 = vld [vmem:[%s768] ss:$2 sm:$0xff]
        %s770 = scalar_lea.vmem [#allocation2], 213
        %v771 = vld [vmem:[%s770] ss:$2 sm:$0xff]
        %s772 = scalar_lea.vmem [#allocation2], 229
        %v773 = vld [vmem:[%s772] ss:$2 sm:$0xff]
        %s774 = scalar_lea.vmem [#allocation2], 245
        %v775 = vld [vmem:[%s774] ss:$2 sm:$0xff]
        %792 = vrot.lane.b32.xlu0 %v745, 5
        %v793 = vpop.permute.xlu0 %792
        %794 = vrot.lane.b32.xlu0 %v747, 5
        %v795 = vpop.permute.xlu0 %794
        %796 = vrot.lane.b32.xlu0 %v749, 5
        %v797 = vpop.permute.xlu0 %796
        %798 = vrot.lane.b32.xlu0 %v751, 5
        %v799 = vpop.permute.xlu0 %798
        %800 = vrot.lane.b32.xlu0 %v753, 5
        %v801 = vpop.permute.xlu0 %800
        %802 = vrot.lane.b32.xlu0 %v755, 5
        %v803 = vpop.permute.xlu0 %802
        %804 = vrot.lane.b32.xlu0 %v757, 5
        %v805 = vpop.permute.xlu0 %804
        %806 = vrot.lane.b32.xlu0 %v759, 5
        %v807 = vpop.permute.xlu0 %806
        %808 = vrot.lane.b32.xlu0 %v761, 5
        %v809 = vpop.permute.xlu0 %808
        %810 = vrot.lane.b32.xlu0 %v763, 5
        %v811 = vpop.permute.xlu0 %810
        %812 = vrot.lane.b32.xlu0 %v765, 5
        %v813 = vpop.permute.xlu0 %812
        %814 = vrot.lane.b32.xlu0 %v767, 5
        %v815 = vpop.permute.xlu0 %814
        %816 = vrot.lane.b32.xlu0 %v769, 5
        %v817 = vpop.permute.xlu0 %816
        %818 = vrot.lane.b32.xlu0 %v771, 5
        %v819 = vpop.permute.xlu0 %818
        %820 = vrot.lane.b32.xlu0 %v773, 5
        %v821 = vpop.permute.xlu0 %820
        %822 = vrot.lane.b32.xlu0 %v775, 5
        %v823 = vpop.permute.xlu0 %822
        %vm840 = vcmask 48168
        %841 = vst.msk [vmem:[#allocation7] sm:$0xff] %vm840, %v793
        %842 = vst.msk [vmem:[#allocation7 + $0x10] sm:$0xff] %vm840, %v795
        %843 = vst.msk [vmem:[#allocation7 + $0x20] sm:$0xff] %vm840, %v797
        %844 = vst.msk [vmem:[#allocation7 + $0x30] sm:$0xff] %vm840, %v799
        %845 = vst.msk [vmem:[#allocation7 + $0x40] sm:$0xff] %vm840, %v801
        %846 = vst.msk [vmem:[#allocation7 + $0x50] sm:$0xff] %vm840, %v803
        %847 = vst.msk [vmem:[#allocation7 + $0x60] sm:$0xff] %vm840, %v805
        %848 = vst.msk [vmem:[#allocation7 + $0x70] sm:$0xff] %vm840, %v807
        %849 = vst.msk [vmem:[#allocation7 + $0x80] sm:$0xff] %vm840, %v809
        %850 = vst.msk [vmem:[#allocation7 + $0x90] sm:$0xff] %vm840, %v811
        %851 = vst.msk [vmem:[#allocation7 + $0xa0] sm:$0xff] %vm840, %v813
        %852 = vst.msk [vmem:[#allocation7 + $0xb0] sm:$0xff] %vm840, %v815
        %853 = vst.msk [vmem:[#allocation7 + $0xc0] sm:$0xff] %vm840, %v817
        %854 = vst.msk [vmem:[#allocation7 + $0xd0] sm:$0xff] %vm840, %v819
        %855 = vst.msk [vmem:[#allocation7 + $0xe0] sm:$0xff] %vm840, %v821
        %856 = vst.msk [vmem:[#allocation7 + $0xf0] sm:$0xff] %vm840, %v823
        %s857 = scalar_lea.vmem [#allocation2], 6
        %v858 = vld [vmem:[%s857] ss:$2 sm:$0xff]
        %s859 = scalar_lea.vmem [#allocation2], 22
        %v860 = vld [vmem:[%s859] ss:$2 sm:$0xff]
        %s861 = scalar_lea.vmem [#allocation2], 38
        %v862 = vld [vmem:[%s861] ss:$2 sm:$0xff]
        %s863 = scalar_lea.vmem [#allocation2], 54
        %v864 = vld [vmem:[%s863] ss:$2 sm:$0xff]
        %s865 = scalar_lea.vmem [#allocation2], 70
        %v866 = vld [vmem:[%s865] ss:$2 sm:$0xff]
        %s867 = scalar_lea.vmem [#allocation2], 86
        %v868 = vld [vmem:[%s867] ss:$2 sm:$0xff]
        %s869 = scalar_lea.vmem [#allocation2], 102
        %v870 = vld [vmem:[%s869] ss:$2 sm:$0xff]
        %s871 = scalar_lea.vmem [#allocation2], 118
        %v872 = vld [vmem:[%s871] ss:$2 sm:$0xff]
        %s873 = scalar_lea.vmem [#allocation2], 134
        %v874 = vld [vmem:[%s873] ss:$2 sm:$0xff]
        %s875 = scalar_lea.vmem [#allocation2], 150
        %v876 = vld [vmem:[%s875] ss:$2 sm:$0xff]
        %s877 = scalar_lea.vmem [#allocation2], 166
        %v878 = vld [vmem:[%s877] ss:$2 sm:$0xff]
        %s879 = scalar_lea.vmem [#allocation2], 182
        %v880 = vld [vmem:[%s879] ss:$2 sm:$0xff]
        %s881 = scalar_lea.vmem [#allocation2], 198
        %v882 = vld [vmem:[%s881] ss:$2 sm:$0xff]
        %s883 = scalar_lea.vmem [#allocation2], 214
        %v884 = vld [vmem:[%s883] ss:$2 sm:$0xff]
        %s885 = scalar_lea.vmem [#allocation2], 230
        %v886 = vld [vmem:[%s885] ss:$2 sm:$0xff]
        %s887 = scalar_lea.vmem [#allocation2], 246
        %v888 = vld [vmem:[%s887] ss:$2 sm:$0xff]
        %905 = vrot.lane.b32.xlu0 %v858, 6
        %v906 = vpop.permute.xlu0 %905
        %907 = vrot.lane.b32.xlu0 %v860, 6
        %v908 = vpop.permute.xlu0 %907
        %909 = vrot.lane.b32.xlu0 %v862, 6
        %v910 = vpop.permute.xlu0 %909
        %911 = vrot.lane.b32.xlu0 %v864, 6
        %v912 = vpop.permute.xlu0 %911
        %913 = vrot.lane.b32.xlu0 %v866, 6
        %v914 = vpop.permute.xlu0 %913
        %915 = vrot.lane.b32.xlu0 %v868, 6
        %v916 = vpop.permute.xlu0 %915
        %917 = vrot.lane.b32.xlu0 %v870, 6
        %v918 = vpop.permute.xlu0 %917
        %919 = vrot.lane.b32.xlu0 %v872, 6
        %v920 = vpop.permute.xlu0 %919
        %921 = vrot.lane.b32.xlu0 %v874, 6
        %v922 = vpop.permute.xlu0 %921
        %923 = vrot.lane.b32.xlu0 %v876, 6
        %v924 = vpop.permute.xlu0 %923
        %925 = vrot.lane.b32.xlu0 %v878, 6
        %v926 = vpop.permute.xlu0 %925
        %927 = vrot.lane.b32.xlu0 %v880, 6
        %v928 = vpop.permute.xlu0 %927
        %929 = vrot.lane.b32.xlu0 %v882, 6
        %v930 = vpop.permute.xlu0 %929
        %931 = vrot.lane.b32.xlu0 %v884, 6
        %v932 = vpop.permute.xlu0 %931
        %933 = vrot.lane.b32.xlu0 %v886, 6
        %v934 = vpop.permute.xlu0 %933
        %935 = vrot.lane.b32.xlu0 %v888, 6
        %v936 = vpop.permute.xlu0 %935
        %vm953 = vcmask 56368
        %954 = vst.msk [vmem:[#allocation7] sm:$0xff] %vm953, %v906
        %955 = vst.msk [vmem:[#allocation7 + $0x10] sm:$0xff] %vm953, %v908
        %956 = vst.msk [vmem:[#allocation7 + $0x20] sm:$0xff] %vm953, %v910
        %957 = vst.msk [vmem:[#allocation7 + $0x30] sm:$0xff] %vm953, %v912
        %958 = vst.msk [vmem:[#allocation7 + $0x40] sm:$0xff] %vm953, %v914
        %959 = vst.msk [vmem:[#allocation7 + $0x50] sm:$0xff] %vm953, %v916
        %960 = vst.msk [vmem:[#allocation7 + $0x60] sm:$0xff] %vm953, %v918
        %961 = vst.msk [vmem:[#allocation7 + $0x70] sm:$0xff] %vm953, %v920
        %962 = vst.msk [vmem:[#allocation7 + $0x80] sm:$0xff] %vm953, %v922
        %963 = vst.msk [vmem:[#allocation7 + $0x90] sm:$0xff] %vm953, %v924
        %964 = vst.msk [vmem:[#allocation7 + $0xa0] sm:$0xff] %vm953, %v926
        %965 = vst.msk [vmem:[#allocation7 + $0xb0] sm:$0xff] %vm953, %v928
        %966 = vst.msk [vmem:[#allocation7 + $0xc0] sm:$0xff] %vm953, %v930
        %967 = vst.msk [vmem:[#allocation7 + $0xd0] sm:$0xff] %vm953, %v932
        %968 = vst.msk [vmem:[#allocation7 + $0xe0] sm:$0xff] %vm953, %v934
        %969 = vst.msk [vmem:[#allocation7 + $0xf0] sm:$0xff] %vm953, %v936
        %s970 = scalar_lea.vmem [#allocation2], 7
        %v971 = vld [vmem:[%s970] ss:$2 sm:$0xff]
        %s972 = scalar_lea.vmem [#allocation2], 23
        %v973 = vld [vmem:[%s972] ss:$2 sm:$0xff]
        %s974 = scalar_lea.vmem [#allocation2], 39
        %v975 = vld [vmem:[%s974] ss:$2 sm:$0xff]
        %s976 = scalar_lea.vmem [#allocation2], 55
        %v977 = vld [vmem:[%s976] ss:$2 sm:$0xff]
        %s978 = scalar_lea.vmem [#allocation2], 71
        %v979 = vld [vmem:[%s978] ss:$2 sm:$0xff]
        %s980 = scalar_lea.vmem [#allocation2], 87
        %v981 = vld [vmem:[%s980] ss:$2 sm:$0xff]
        %s982 = scalar_lea.vmem [#allocation2], 103
        %v983 = vld [vmem:[%s982] ss:$2 sm:$0xff]
        %s984 = scalar_lea.vmem [#allocation2], 119
        %v985 = vld [vmem:[%s984] ss:$2 sm:$0xff]
        %s986 = scalar_lea.vmem [#allocation2], 135
        %v987 = vld [vmem:[%s986] ss:$2 sm:$0xff]
        %s988 = scalar_lea.vmem [#allocation2], 151
        %v989 = vld [vmem:[%s988] ss:$2 sm:$0xff]
        %s990 = scalar_lea.vmem [#allocation2], 167
        %v991 = vld [vmem:[%s990] ss:$2 sm:$0xff]
        %s992 = scalar_lea.vmem [#allocation2], 183
        %v993 = vld [vmem:[%s992] ss:$2 sm:$0xff]
        %s994 = scalar_lea.vmem [#allocation2], 199
        %v995 = vld [vmem:[%s994] ss:$2 sm:$0xff]
        %s996 = scalar_lea.vmem [#allocation2], 215
        %v997 = vld [vmem:[%s996] ss:$2 sm:$0xff]
        %s998 = scalar_lea.vmem [#allocation2], 231
        %v999 = vld [vmem:[%s998] ss:$2 sm:$0xff]
        %s1000 = scalar_lea.vmem [#allocation2], 247
        %v1001 = vld [vmem:[%s1000] ss:$2 sm:$0xff]
        %1018 = vrot.lane.b32.xlu0 %v971, 7
        %v1019 = vpop.permute.xlu0 %1018
        %1020 = vrot.lane.b32.xlu0 %v973, 7
        %v1021 = vpop.permute.xlu0 %1020
        %1022 = vrot.lane.b32.xlu0 %v975, 7
        %v1023 = vpop.permute.xlu0 %1022
        %1024 = vrot.lane.b32.xlu0 %v977, 7
        %v1025 = vpop.permute.xlu0 %1024
        %1026 = vrot.lane.b32.xlu0 %v979, 7
        %v1027 = vpop.permute.xlu0 %1026
        %1028 = vrot.lane.b32.xlu0 %v981, 7
        %v1029 = vpop.permute.xlu0 %1028
        %1030 = vrot.lane.b32.xlu0 %v983, 7
        %v1031 = vpop.permute.xlu0 %1030
        %1032 = vrot.lane.b32.xlu0 %v985, 7
        %v1033 = vpop.permute.xlu0 %1032
        %1034 = vrot.lane.b32.xlu0 %v987, 7
        %v1035 = vpop.permute.xlu0 %1034
        %1036 = vrot.lane.b32.xlu0 %v989, 7
        %v1037 = vpop.permute.xlu0 %1036
        %1038 = vrot.lane.b32.xlu0 %v991, 7
        %v1039 = vpop.permute.xlu0 %1038
        %1040 = vrot.lane.b32.xlu0 %v993, 7
        %v1041 = vpop.permute.xlu0 %1040
        %1042 = vrot.lane.b32.xlu0 %v995, 7
        %v1043 = vpop.permute.xlu0 %1042
        %1044 = vrot.lane.b32.xlu0 %v997, 7
        %v1045 = vpop.permute.xlu0 %1044
        %1046 = vrot.lane.b32.xlu0 %v999, 7
        %v1047 = vpop.permute.xlu0 %1046
        %1048 = vrot.lane.b32.xlu0 %v1001, 7
        %v1049 = vpop.permute.xlu0 %1048
        %vm1066 = vcmask 64568
        %1067 = vst.msk [vmem:[#allocation7] sm:$0xff] %vm1066, %v1019
        %1068 = vst.msk [vmem:[#allocation7 + $0x10] sm:$0xff] %vm1066, %v1021
        %1069 = vst.msk [vmem:[#allocation7 + $0x20] sm:$0xff] %vm1066, %v1023
        %1070 = vst.msk [vmem:[#allocation7 + $0x30] sm:$0xff] %vm1066, %v1025
        %1071 = vst.msk [vmem:[#allocation7 + $0x40] sm:$0xff] %vm1066, %v1027
        %1072 = vst.msk [vmem:[#allocation7 + $0x50] sm:$0xff] %vm1066, %v1029
        %1073 = vst.msk [vmem:[#allocation7 + $0x60] sm:$0xff] %vm1066, %v1031
        %1074 = vst.msk [vmem:[#allocation7 + $0x70] sm:$0xff] %vm1066, %v1033
        %1075 = vst.msk [vmem:[#allocation7 + $0x80] sm:$0xff] %vm1066, %v1035
        %1076 = vst.msk [vmem:[#allocation7 + $0x90] sm:$0xff] %vm1066, %v1037
        %1077 = vst.msk [vmem:[#allocation7 + $0xa0] sm:$0xff] %vm1066, %v1039
        %1078 = vst.msk [vmem:[#allocation7 + $0xb0] sm:$0xff] %vm1066, %v1041
        %1079 = vst.msk [vmem:[#allocation7 + $0xc0] sm:$0xff] %vm1066, %v1043
        %1080 = vst.msk [vmem:[#allocation7 + $0xd0] sm:$0xff] %vm1066, %v1045
        %1081 = vst.msk [vmem:[#allocation7 + $0xe0] sm:$0xff] %vm1066, %v1047
        %1082 = vst.msk [vmem:[#allocation7 + $0xf0] sm:$0xff] %vm1066, %v1049
        %s1083 = scalar_lea.vmem [#allocation2], 8
        %v1084 = vld [vmem:[%s1083] ss:$2 sm:$0xff]
        %s1085 = scalar_lea.vmem [#allocation2], 24
        %v1086 = vld [vmem:[%s1085] ss:$2 sm:$0xff]
        %s1087 = scalar_lea.vmem [#allocation2], 40
        %v1088 = vld [vmem:[%s1087] ss:$2 sm:$0xff]
        %s1089 = scalar_lea.vmem [#allocation2], 56
        %v1090 = vld [vmem:[%s1089] ss:$2 sm:$0xff]
        %s1091 = scalar_lea.vmem [#allocation2], 72
        %v1092 = vld [vmem:[%s1091] ss:$2 sm:$0xff]
        %s1093 = scalar_lea.vmem [#allocation2], 88
        %v1094 = vld [vmem:[%s1093] ss:$2 sm:$0xff]
        %s1095 = scalar_lea.vmem [#allocation2], 104
        %v1096 = vld [vmem:[%s1095] ss:$2 sm:$0xff]
        %s1097 = scalar_lea.vmem [#allocation2], 120
        %v1098 = vld [vmem:[%s1097] ss:$2 sm:$0xff]
        %s1099 = scalar_lea.vmem [#allocation2], 136
        %v1100 = vld [vmem:[%s1099] ss:$2 sm:$0xff]
        %s1101 = scalar_lea.vmem [#allocation2], 152
        %v1102 = vld [vmem:[%s1101] ss:$2 sm:$0xff]
        %s1103 = scalar_lea.vmem [#allocation2], 168
        %v1104 = vld [vmem:[%s1103] ss:$2 sm:$0xff]
        %s1105 = scalar_lea.vmem [#allocation2], 184
        %v1106 = vld [vmem:[%s1105] ss:$2 sm:$0xff]
        %s1107 = scalar_lea.vmem [#allocation2], 200
        %v1108 = vld [vmem:[%s1107] ss:$2 sm:$0xff]
        %s1109 = scalar_lea.vmem [#allocation2], 216
        %v1110 = vld [vmem:[%s1109] ss:$2 sm:$0xff]
        %s1111 = scalar_lea.vmem [#allocation2], 232
        %v1112 = vld [vmem:[%s1111] ss:$2 sm:$0xff]
        %s1113 = scalar_lea.vmem [#allocation2], 248
        %v1114 = vld [vmem:[%s1113] ss:$2 sm:$0xff]
        %1131 = vrot.lane.b32.xlu0 %v1084, 8
        %v1132 = vpop.permute.xlu0 %1131
        %1133 = vrot.lane.b32.xlu0 %v1086, 8
        %v1134 = vpop.permute.xlu0 %1133
        %1135 = vrot.lane.b32.xlu0 %v1088, 8
        %v1136 = vpop.permute.xlu0 %1135
        %1137 = vrot.lane.b32.xlu0 %v1090, 8
        %v1138 = vpop.permute.xlu0 %1137
        %1139 = vrot.lane.b32.xlu0 %v1092, 8
        %v1140 = vpop.permute.xlu0 %1139
        %1141 = vrot.lane.b32.xlu0 %v1094, 8
        %v1142 = vpop.permute.xlu0 %1141
        %1143 = vrot.lane.b32.xlu0 %v1096, 8
        %v1144 = vpop.permute.xlu0 %1143
        %1145 = vrot.lane.b32.xlu0 %v1098, 8
        %v1146 = vpop.permute.xlu0 %1145
        %1147 = vrot.lane.b32.xlu0 %v1100, 8
        %v1148 = vpop.permute.xlu0 %1147
        %1149 = vrot.lane.b32.xlu0 %v1102, 8
        %v1150 = vpop.permute.xlu0 %1149
        %1151 = vrot.lane.b32.xlu0 %v1104, 8
        %v1152 = vpop.permute.xlu0 %1151
        %1153 = vrot.lane.b32.xlu0 %v1106, 8
        %v1154 = vpop.permute.xlu0 %1153
        %1155 = vrot.lane.b32.xlu0 %v1108, 8
        %v1156 = vpop.permute.xlu0 %1155
        %1157 = vrot.lane.b32.xlu0 %v1110, 8
        %v1158 = vpop.permute.xlu0 %1157
        %1159 = vrot.lane.b32.xlu0 %v1112, 8
        %v1160 = vpop.permute.xlu0 %1159
        %1161 = vrot.lane.b32.xlu0 %v1114, 8
        %v1162 = vpop.permute.xlu0 %1161
        %vm1179 = vcmask 72768
        %1180 = vst.msk [vmem:[#allocation7] sm:$0xff] %vm1179, %v1132
        %1181 = vst.msk [vmem:[#allocation7 + $0x10] sm:$0xff] %vm1179, %v1134
        %1182 = vst.msk [vmem:[#allocation7 + $0x20] sm:$0xff] %vm1179, %v1136
        %1183 = vst.msk [vmem:[#allocation7 + $0x30] sm:$0xff] %vm1179, %v1138
        %1184 = vst.msk [vmem:[#allocation7 + $0x40] sm:$0xff] %vm1179, %v1140
        %1185 = vst.msk [vmem:[#allocation7 + $0x50] sm:$0xff] %vm1179, %v1142
        %1186 = vst.msk [vmem:[#allocation7 + $0x60] sm:$0xff] %vm1179, %v1144
        %1187 = vst.msk [vmem:[#allocation7 + $0x70] sm:$0xff] %vm1179, %v1146
        %1188 = vst.msk [vmem:[#allocation7 + $0x80] sm:$0xff] %vm1179, %v1148
        %1189 = vst.msk [vmem:[#allocation7 + $0x90] sm:$0xff] %vm1179, %v1150
        %1190 = vst.msk [vmem:[#allocation7 + $0xa0] sm:$0xff] %vm1179, %v1152
        %1191 = vst.msk [vmem:[#allocation7 + $0xb0] sm:$0xff] %vm1179, %v1154
        %1192 = vst.msk [vmem:[#allocation7 + $0xc0] sm:$0xff] %vm1179, %v1156
        %1193 = vst.msk [vmem:[#allocation7 + $0xd0] sm:$0xff] %vm1179, %v1158
        %1194 = vst.msk [vmem:[#allocation7 + $0xe0] sm:$0xff] %vm1179, %v1160
        %1195 = vst.msk [vmem:[#allocation7 + $0xf0] sm:$0xff] %vm1179, %v1162
        %s1196 = scalar_lea.vmem [#allocation2], 9
        %v1197 = vld [vmem:[%s1196] ss:$2 sm:$0xff]
        %s1198 = scalar_lea.vmem [#allocation2], 25
        %v1199 = vld [vmem:[%s1198] ss:$2 sm:$0xff]
        %s1200 = scalar_lea.vmem [#allocation2], 41
        %v1201 = vld [vmem:[%s1200] ss:$2 sm:$0xff]
        %s1202 = scalar_lea.vmem [#allocation2], 57
        %v1203 = vld [vmem:[%s1202] ss:$2 sm:$0xff]
        %s1204 = scalar_lea.vmem [#allocation2], 73
        %v1205 = vld [vmem:[%s1204] ss:$2 sm:$0xff]
        %s1206 = scalar_lea.vmem [#allocation2], 89
        %v1207 = vld [vmem:[%s1206] ss:$2 sm:$0xff]
        %s1208 = scalar_lea.vmem [#allocation2], 105
        %v1209 = vld [vmem:[%s1208] ss:$2 sm:$0xff]
        %s1210 = scalar_lea.vmem [#allocation2], 121
        %v1211 = vld [vmem:[%s1210] ss:$2 sm:$0xff]
        %s1212 = scalar_lea.vmem [#allocation2], 137
        %v1213 = vld [vmem:[%s1212] ss:$2 sm:$0xff]
        %s1214 = scalar_lea.vmem [#allocation2], 153
        %v1215 = vld [vmem:[%s1214] ss:$2 sm:$0xff]
        %s1216 = scalar_lea.vmem [#allocation2], 169
        %v1217 = vld [vmem:[%s1216] ss:$2 sm:$0xff]
        %s1218 = scalar_lea.vmem [#allocation2], 185
        %v1219 = vld [vmem:[%s1218] ss:$2 sm:$0xff]
        %s1220 = scalar_lea.vmem [#allocation2], 201
        %v1221 = vld [vmem:[%s1220] ss:$2 sm:$0xff]
        %s1222 = scalar_lea.vmem [#allocation2], 217
        %v1223 = vld [vmem:[%s1222] ss:$2 sm:$0xff]
        %s1224 = scalar_lea.vmem [#allocation2], 233
        %v1225 = vld [vmem:[%s1224] ss:$2 sm:$0xff]
        %s1226 = scalar_lea.vmem [#allocation2], 249
        %v1227 = vld [vmem:[%s1226] ss:$2 sm:$0xff]
        %1244 = vrot.lane.b32.xlu0 %v1197, 9
        %v1245 = vpop.permute.xlu0 %1244
        %1246 = vrot.lane.b32.xlu0 %v1199, 9
        %v1247 = vpop.permute.xlu0 %1246
        %1248 = vrot.lane.b32.xlu0 %v1201, 9
        %v1249 = vpop.permute.xlu0 %1248
        %1250 = vrot.lane.b32.xlu0 %v1203, 9
        %v1251 = vpop.permute.xlu0 %1250
        %1252 = vrot.lane.b32.xlu0 %v1205, 9
        %v1253 = vpop.permute.xlu0 %1252
        %1254 = vrot.lane.b32.xlu0 %v1207, 9
        %v1255 = vpop.permute.xlu0 %1254
        %1256 = vrot.lane.b32.xlu0 %v1209, 9
        %v1257 = vpop.permute.xlu0 %1256
        %1258 = vrot.lane.b32.xlu0 %v1211, 9
        %v1259 = vpop.permute.xlu0 %1258
        %1260 = vrot.lane.b32.xlu0 %v1213, 9
        %v1261 = vpop.permute.xlu0 %1260
        %1262 = vrot.lane.b32.xlu0 %v1215, 9
        %v1263 = vpop.permute.xlu0 %1262
        %1264 = vrot.lane.b32.xlu0 %v1217, 9
        %v1265 = vpop.permute.xlu0 %1264
        %1266 = vrot.lane.b32.xlu0 %v1219, 9
        %v1267 = vpop.permute.xlu0 %1266
        %1268 = vrot.lane.b32.xlu0 %v1221, 9
        %v1269 = vpop.permute.xlu0 %1268
        %1270 = vrot.lane.b32.xlu0 %v1223, 9
        %v1271 = vpop.permute.xlu0 %1270
        %1272 = vrot.lane.b32.xlu0 %v1225, 9
        %v1273 = vpop.permute.xlu0 %1272
        %1274 = vrot.lane.b32.xlu0 %v1227, 9
        %v1275 = vpop.permute.xlu0 %1274
        %vm1292 = vcmask 80968
        %1293 = vst.msk [vmem:[#allocation7] sm:$0xff] %vm1292, %v1245
        %1294 = vst.msk [vmem:[#allocation7 + $0x10] sm:$0xff] %vm1292, %v1247
        %1295 = vst.msk [vmem:[#allocation7 + $0x20] sm:$0xff] %vm1292, %v1249
        %1296 = vst.msk [vmem:[#allocation7 + $0x30] sm:$0xff] %vm1292, %v1251
        %1297 = vst.msk [vmem:[#allocation7 + $0x40] sm:$0xff] %vm1292, %v1253
        %1298 = vst.msk [vmem:[#allocation7 + $0x50] sm:$0xff] %vm1292, %v1255
        %1299 = vst.msk [vmem:[#allocation7 + $0x60] sm:$0xff] %vm1292, %v1257
        %1300 = vst.msk [vmem:[#allocation7 + $0x70] sm:$0xff] %vm1292, %v1259
        %1301 = vst.msk [vmem:[#allocation7 + $0x80] sm:$0xff] %vm1292, %v1261
        %1302 = vst.msk [vmem:[#allocation7 + $0x90] sm:$0xff] %vm1292, %v1263
        %1303 = vst.msk [vmem:[#allocation7 + $0xa0] sm:$0xff] %vm1292, %v1265
        %1304 = vst.msk [vmem:[#allocation7 + $0xb0] sm:$0xff] %vm1292, %v1267
        %1305 = vst.msk [vmem:[#allocation7 + $0xc0] sm:$0xff] %vm1292, %v1269
        %1306 = vst.msk [vmem:[#allocation7 + $0xd0] sm:$0xff] %vm1292, %v1271
        %1307 = vst.msk [vmem:[#allocation7 + $0xe0] sm:$0xff] %vm1292, %v1273
        %1308 = vst.msk [vmem:[#allocation7 + $0xf0] sm:$0xff] %vm1292, %v1275
        %s1309 = scalar_lea.vmem [#allocation2], 10
        %v1310 = vld [vmem:[%s1309] ss:$2 sm:$0xff]
        %s1311 = scalar_lea.vmem [#allocation2], 26
        %v1312 = vld [vmem:[%s1311] ss:$2 sm:$0xff]
        %s1313 = scalar_lea.vmem [#allocation2], 42
        %v1314 = vld [vmem:[%s1313] ss:$2 sm:$0xff]
        %s1315 = scalar_lea.vmem [#allocation2], 58
        %v1316 = vld [vmem:[%s1315] ss:$2 sm:$0xff]
        %s1317 = scalar_lea.vmem [#allocation2], 74
        %v1318 = vld [vmem:[%s1317] ss:$2 sm:$0xff]
        %s1319 = scalar_lea.vmem [#allocation2], 90
        %v1320 = vld [vmem:[%s1319] ss:$2 sm:$0xff]
        %s1321 = scalar_lea.vmem [#allocation2], 106
        %v1322 = vld [vmem:[%s1321] ss:$2 sm:$0xff]
        %s1323 = scalar_lea.vmem [#allocation2], 122
        %v1324 = vld [vmem:[%s1323] ss:$2 sm:$0xff]
        %s1325 = scalar_lea.vmem [#allocation2], 138
        %v1326 = vld [vmem:[%s1325] ss:$2 sm:$0xff]
        %s1327 = scalar_lea.vmem [#allocation2], 154
        %v1328 = vld [vmem:[%s1327] ss:$2 sm:$0xff]
        %s1329 = scalar_lea.vmem [#allocation2], 170
        %v1330 = vld [vmem:[%s1329] ss:$2 sm:$0xff]
        %s1331 = scalar_lea.vmem [#allocation2], 186
        %v1332 = vld [vmem:[%s1331] ss:$2 sm:$0xff]
        %s1333 = scalar_lea.vmem [#allocation2], 202
        %v1334 = vld [vmem:[%s1333] ss:$2 sm:$0xff]
        %s1335 = scalar_lea.vmem [#allocation2], 218
        %v1336 = vld [vmem:[%s1335] ss:$2 sm:$0xff]
        %s1337 = scalar_lea.vmem [#allocation2], 234
        %v1338 = vld [vmem:[%s1337] ss:$2 sm:$0xff]
        %s1339 = scalar_lea.vmem [#allocation2], 250
        %v1340 = vld [vmem:[%s1339] ss:$2 sm:$0xff]
        %1357 = vrot.lane.b32.xlu0 %v1310, 10
        %v1358 = vpop.permute.xlu0 %1357
        %1359 = vrot.lane.b32.xlu0 %v1312, 10
        %v1360 = vpop.permute.xlu0 %1359
        %1361 = vrot.lane.b32.xlu0 %v1314, 10
        %v1362 = vpop.permute.xlu0 %1361
        %1363 = vrot.lane.b32.xlu0 %v1316, 10
        %v1364 = vpop.permute.xlu0 %1363
        %1365 = vrot.lane.b32.xlu0 %v1318, 10
        %v1366 = vpop.permute.xlu0 %1365
        %1367 = vrot.lane.b32.xlu0 %v1320, 10
        %v1368 = vpop.permute.xlu0 %1367
        %1369 = vrot.lane.b32.xlu0 %v1322, 10
        %v1370 = vpop.permute.xlu0 %1369
        %1371 = vrot.lane.b32.xlu0 %v1324, 10
        %v1372 = vpop.permute.xlu0 %1371
        %1373 = vrot.lane.b32.xlu0 %v1326, 10
        %v1374 = vpop.permute.xlu0 %1373
        %1375 = vrot.lane.b32.xlu0 %v1328, 10
        %v1376 = vpop.permute.xlu0 %1375
        %1377 = vrot.lane.b32.xlu0 %v1330, 10
        %v1378 = vpop.permute.xlu0 %1377
        %1379 = vrot.lane.b32.xlu0 %v1332, 10
        %v1380 = vpop.permute.xlu0 %1379
        %1381 = vrot.lane.b32.xlu0 %v1334, 10
        %v1382 = vpop.permute.xlu0 %1381
        %1383 = vrot.lane.b32.xlu0 %v1336, 10
        %v1384 = vpop.permute.xlu0 %1383
        %1385 = vrot.lane.b32.xlu0 %v1338, 10
        %v1386 = vpop.permute.xlu0 %1385
        %1387 = vrot.lane.b32.xlu0 %v1340, 10
        %v1388 = vpop.permute.xlu0 %1387
        %vm1405 = vcmask 89168
        %1406 = vst.msk [vmem:[#allocation7] sm:$0xff] %vm1405, %v1358
        %1407 = vst.msk [vmem:[#allocation7 + $0x10] sm:$0xff] %vm1405, %v1360
        %1408 = vst.msk [vmem:[#allocation7 + $0x20] sm:$0xff] %vm1405, %v1362
        %1409 = vst.msk [vmem:[#allocation7 + $0x30] sm:$0xff] %vm1405, %v1364
        %1410 = vst.msk [vmem:[#allocation7 + $0x40] sm:$0xff] %vm1405, %v1366
        %1411 = vst.msk [vmem:[#allocation7 + $0x50] sm:$0xff] %vm1405, %v1368
        %1412 = vst.msk [vmem:[#allocation7 + $0x60] sm:$0xff] %vm1405, %v1370
        %1413 = vst.msk [vmem:[#allocation7 + $0x70] sm:$0xff] %vm1405, %v1372
        %1414 = vst.msk [vmem:[#allocation7 + $0x80] sm:$0xff] %vm1405, %v1374
        %1415 = vst.msk [vmem:[#allocation7 + $0x90] sm:$0xff] %vm1405, %v1376
        %1416 = vst.msk [vmem:[#allocation7 + $0xa0] sm:$0xff] %vm1405, %v1378
        %1417 = vst.msk [vmem:[#allocation7 + $0xb0] sm:$0xff] %vm1405, %v1380
        %1418 = vst.msk [vmem:[#allocation7 + $0xc0] sm:$0xff] %vm1405, %v1382
        %1419 = vst.msk [vmem:[#allocation7 + $0xd0] sm:$0xff] %vm1405, %v1384
        %1420 = vst.msk [vmem:[#allocation7 + $0xe0] sm:$0xff] %vm1405, %v1386
        %1421 = vst.msk [vmem:[#allocation7 + $0xf0] sm:$0xff] %vm1405, %v1388
        %s1422 = scalar_lea.vmem [#allocation2], 11
        %v1423 = vld [vmem:[%s1422] ss:$2 sm:$0xff]
        %s1424 = scalar_lea.vmem [#allocation2], 27
        %v1425 = vld [vmem:[%s1424] ss:$2 sm:$0xff]
        %s1426 = scalar_lea.vmem [#allocation2], 43
        %v1427 = vld [vmem:[%s1426] ss:$2 sm:$0xff]
        %s1428 = scalar_lea.vmem [#allocation2], 59
        %v1429 = vld [vmem:[%s1428] ss:$2 sm:$0xff]
        %s1430 = scalar_lea.vmem [#allocation2], 75
        %v1431 = vld [vmem:[%s1430] ss:$2 sm:$0xff]
        %s1432 = scalar_lea.vmem [#allocation2], 91
        %v1433 = vld [vmem:[%s1432] ss:$2 sm:$0xff]
        %s1434 = scalar_lea.vmem [#allocation2], 107
        %v1435 = vld [vmem:[%s1434] ss:$2 sm:$0xff]
        %s1436 = scalar_lea.vmem [#allocation2], 123
        %v1437 = vld [vmem:[%s1436] ss:$2 sm:$0xff]
        %s1438 = scalar_lea.vmem [#allocation2], 139
        %v1439 = vld [vmem:[%s1438] ss:$2 sm:$0xff]
        %s1440 = scalar_lea.vmem [#allocation2], 155
        %v1441 = vld [vmem:[%s1440] ss:$2 sm:$0xff]
        %s1442 = scalar_lea.vmem [#allocation2], 171
        %v1443 = vld [vmem:[%s1442] ss:$2 sm:$0xff]
        %s1444 = scalar_lea.vmem [#allocation2], 187
        %v1445 = vld [vmem:[%s1444] ss:$2 sm:$0xff]
        %s1446 = scalar_lea.vmem [#allocation2], 203
        %v1447 = vld [vmem:[%s1446] ss:$2 sm:$0xff]
        %s1448 = scalar_lea.vmem [#allocation2], 219
        %v1449 = vld [vmem:[%s1448] ss:$2 sm:$0xff]
        %s1450 = scalar_lea.vmem [#allocation2], 235
        %v1451 = vld [vmem:[%s1450] ss:$2 sm:$0xff]
        %s1452 = scalar_lea.vmem [#allocation2], 251
        %v1453 = vld [vmem:[%s1452] ss:$2 sm:$0xff]
        %1470 = vrot.lane.b32.xlu0 %v1423, 11
        %v1471 = vpop.permute.xlu0 %1470
        %1472 = vrot.lane.b32.xlu0 %v1425, 11
        %v1473 = vpop.permute.xlu0 %1472
        %1474 = vrot.lane.b32.xlu0 %v1427, 11
        %v1475 = vpop.permute.xlu0 %1474
        %1476 = vrot.lane.b32.xlu0 %v1429, 11
        %v1477 = vpop.permute.xlu0 %1476
        %1478 = vrot.lane.b32.xlu0 %v1431, 11
        %v1479 = vpop.permute.xlu0 %1478
        %1480 = vrot.lane.b32.xlu0 %v1433, 11
        %v1481 = vpop.permute.xlu0 %1480
        %1482 = vrot.lane.b32.xlu0 %v1435, 11
        %v1483 = vpop.permute.xlu0 %1482
        %1484 = vrot.lane.b32.xlu0 %v1437, 11
        %v1485 = vpop.permute.xlu0 %1484
        %1486 = vrot.lane.b32.xlu0 %v1439, 11
        %v1487 = vpop.permute.xlu0 %1486
        %1488 = vrot.lane.b32.xlu0 %v1441, 11
        %v1489 = vpop.permute.xlu0 %1488
        %1490 = vrot.lane.b32.xlu0 %v1443, 11
        %v1491 = vpop.permute.xlu0 %1490
        %1492 = vrot.lane.b32.xlu0 %v1445, 11
        %v1493 = vpop.permute.xlu0 %1492
        %1494 = vrot.lane.b32.xlu0 %v1447, 11
        %v1495 = vpop.permute.xlu0 %1494
        %1496 = vrot.lane.b32.xlu0 %v1449, 11
        %v1497 = vpop.permute.xlu0 %1496
        %1498 = vrot.lane.b32.xlu0 %v1451, 11
        %v1499 = vpop.permute.xlu0 %1498
        %1500 = vrot.lane.b32.xlu0 %v1453, 11
        %v1501 = vpop.permute.xlu0 %1500
        %vm1518 = vcmask 97368
        %1519 = vst.msk [vmem:[#allocation7] sm:$0xff] %vm1518, %v1471
        %1520 = vst.msk [vmem:[#allocation7 + $0x10] sm:$0xff] %vm1518, %v1473
        %1521 = vst.msk [vmem:[#allocation7 + $0x20] sm:$0xff] %vm1518, %v1475
        %1522 = vst.msk [vmem:[#allocation7 + $0x30] sm:$0xff] %vm1518, %v1477
        %1523 = vst.msk [vmem:[#allocation7 + $0x40] sm:$0xff] %vm1518, %v1479
        %1524 = vst.msk [vmem:[#allocation7 + $0x50] sm:$0xff] %vm1518, %v1481
        %1525 = vst.msk [vmem:[#allocation7 + $0x60] sm:$0xff] %vm1518, %v1483
        %1526 = vst.msk [vmem:[#allocation7 + $0x70] sm:$0xff] %vm1518, %v1485
        %1527 = vst.msk [vmem:[#allocation7 + $0x80] sm:$0xff] %vm1518, %v1487
        %1528 = vst.msk [vmem:[#allocation7 + $0x90] sm:$0xff] %vm1518, %v1489
        %1529 = vst.msk [vmem:[#allocation7 + $0xa0] sm:$0xff] %vm1518, %v1491
        %1530 = vst.msk [vmem:[#allocation7 + $0xb0] sm:$0xff] %vm1518, %v1493
        %1531 = vst.msk [vmem:[#allocation7 + $0xc0] sm:$0xff] %vm1518, %v1495
        %1532 = vst.msk [vmem:[#allocation7 + $0xd0] sm:$0xff] %vm1518, %v1497
        %1533 = vst.msk [vmem:[#allocation7 + $0xe0] sm:$0xff] %vm1518, %v1499
        %1534 = vst.msk [vmem:[#allocation7 + $0xf0] sm:$0xff] %vm1518, %v1501
        %vm1535 = vcmask 105568
        %1536 = vst.msk [vmem:[#allocation7] sm:$0xff] %vm1535, 1.0
        %1537 = vst.msk [vmem:[#allocation7 + $0x10] sm:$0xff] %vm1535, 1.0
        %1538 = vst.msk [vmem:[#allocation7 + $0x20] sm:$0xff] %vm1535, 1.0
        %1539 = vst.msk [vmem:[#allocation7 + $0x30] sm:$0xff] %vm1535, 1.0
        %1540 = vst.msk [vmem:[#allocation7 + $0x40] sm:$0xff] %vm1535, 1.0
        %1541 = vst.msk [vmem:[#allocation7 + $0x50] sm:$0xff] %vm1535, 1.0
        %1542 = vst.msk [vmem:[#allocation7 + $0x60] sm:$0xff] %vm1535, 1.0
        %1543 = vst.msk [vmem:[#allocation7 + $0x70] sm:$0xff] %vm1535, 1.0
        %1544 = vst.msk [vmem:[#allocation7 + $0x80] sm:$0xff] %vm1535, 1.0
        %1545 = vst.msk [vmem:[#allocation7 + $0x90] sm:$0xff] %vm1535, 1.0
        %1546 = vst.msk [vmem:[#allocation7 + $0xa0] sm:$0xff] %vm1535, 1.0
        %1547 = vst.msk [vmem:[#allocation7 + $0xb0] sm:$0xff] %vm1535, 1.0
        %1548 = vst.msk [vmem:[#allocation7 + $0xc0] sm:$0xff] %vm1535, 1.0
        %1549 = vst.msk [vmem:[#allocation7 + $0xd0] sm:$0xff] %vm1535, 1.0
        %1550 = vst.msk [vmem:[#allocation7 + $0xe0] sm:$0xff] %vm1535, 1.0
        %1551 = vst.msk [vmem:[#allocation7 + $0xf0] sm:$0xff] %vm1535, 1.0
        %v1552 = vld [vmem:[#allocation8] sm:$0xff]
        %v1553 = vld [vmem:[#allocation8 + $0x8] sm:$0x1f]
        %v1554 = vld [vmem:[#allocation7] sm:$0xff]
        %v1555 = vld [vmem:[#allocation7 + $0x10] sm:$0xff]
        %v1556 = vld [vmem:[#allocation7 + $0x20] sm:$0xff]
        %v1557 = vld [vmem:[#allocation7 + $0x30] sm:$0xff]
        %v1558 = vld [vmem:[#allocation7 + $0x40] sm:$0xff]
        %v1559 = vld [vmem:[#allocation7 + $0x50] sm:$0xff]
        %v1560 = vld [vmem:[#allocation7 + $0x60] sm:$0xff]
        %v1561 = vld [vmem:[#allocation7 + $0x70] sm:$0xff]
        %v1562 = vld [vmem:[#allocation7 + $0x80] sm:$0xff]
        %v1563 = vld [vmem:[#allocation7 + $0x90] sm:$0xff]
        %v1564 = vld [vmem:[#allocation7 + $0xa0] sm:$0xff]
        %v1565 = vld [vmem:[#allocation7 + $0xb0] sm:$0xff]
        %v1566 = vld [vmem:[#allocation7 + $0xc0] sm:$0xff]
        %v1567 = vld [vmem:[#allocation7 + $0xd0] sm:$0xff]
        %v1568 = vld [vmem:[#allocation7 + $0xe0] sm:$0xff]
        %v1569 = vld [vmem:[#allocation7 + $0xf0] sm:$0xff]
        %vm1570 = vcmask 105472
        %v1572 = vsel %vm1570, %v1554, 0
        %v1575 = vsel %vm1570, %v1555, 0
        %v1578 = vsel %vm1570, %v1556, 0
        %v1581 = vsel %vm1570, %v1557, 0
        %v1584 = vsel %vm1570, %v1558, 0
        %v1587 = vsel %vm1570, %v1559, 0
        %v1590 = vsel %vm1570, %v1560, 0
        %v1593 = vsel %vm1570, %v1561, 0
        %v1596 = vsel %vm1570, %v1562, 0
        %v1599 = vsel %vm1570, %v1563, 0
        %v1602 = vsel %vm1570, %v1564, 0
        %v1605 = vsel %vm1570, %v1565, 0
        %v1608 = vsel %vm1570, %v1566, 0
        %v1611 = vsel %vm1570, %v1567, 0
        %v1614 = vsel %vm1570, %v1568, 0
        %v1617 = vsel %vm1570, %v1569, 0
        %vm1619 = vcmask 1044480
        %v1621 = vsel %vm1619, %v1553, 0
        %1623 = vmatprep.subr.mxu0 0.0
        %1624 = vmatpush1.msra.mxu0 0.0
        %1625 = vmatprep.subr.mxu0 0.0
        %1626 = vmatpush1.msra.mxu0 0.0
        %1627 = vmatprep.subr.mxu0 0.0
        %1628 = vmatpush1.msra.mxu0 0.0
        %1629 = vmatprep.subr.mxu0 0.0
        %1630 = vmatpush1.msra.mxu0 0.0
        %1631 = vmatprep.subr.mxu0 0.0
        %1632 = vmatpush1.msra.mxu0 0.0
        %1633 = vmatprep.subr.mxu0 0.0
        %1634 = vmatpush1.msra.mxu0 0.0
        %1635 = vmatprep.subr.mxu0 0.0
        %1636 = vmatpush1.msra.mxu0 0.0
        %1637 = vmatprep.subr.mxu0 0.0
        %1638 = vmatpush1.msra.mxu0 0.0
        %1639 = vmatprep.subr.mxu0 0.0
        %1640 = vmatpush1.msra.mxu0 0.0
        %1641 = vmatprep.subr.mxu0 0.0
        %1642 = vmatpush1.msra.mxu0 0.0
        %1643 = vmatprep.subr.mxu0 0.0
        %1644 = vmatpush1.msra.mxu0 0.0
        %1645 = vmatprep.subr.mxu0 0.0
        %1646 = vmatpush1.msra.mxu0 0.0
        %1647 = vmatprep.subr.mxu0 0.0
        %1648 = vmatpush1.msra.mxu0 0.0
        %1649 = vmatprep.subr.mxu0 0.0
        %1650 = vmatpush1.msra.mxu0 0.0
        %1651 = vmatprep.subr.mxu0 0.0
        %1652 = vmatpush1.msra.mxu0 %v1621
        %1653 = vmatprep.subr.mxu0 0.0
        %1654 = vmatpush1.msra.mxu0 %v1552
        %1655 = vmatprep.subr.mxu0 0.0
        %1656 = vmatpush2.msra.mxu0 0.0
        %1657 = vmatprep.subr.mxu0 0.0
        %1658 = vmatpush2.msra.mxu0 0.0
        %1659 = vmatprep.subr.mxu0 0.0
        %1660 = vmatpush2.msra.mxu0 0.0
        %1661 = vmatprep.subr.mxu0 0.0
        %1662 = vmatpush2.msra.mxu0 0.0
        %1663 = vmatprep.subr.mxu0 0.0
        %1664 = vmatpush2.msra.mxu0 0.0
        %1665 = vmatprep.subr.mxu0 0.0
        %1666 = vmatpush2.msra.mxu0 0.0
        %1667 = vmatprep.subr.mxu0 0.0
        %1668 = vmatpush2.msra.mxu0 0.0
        %1669 = vmatprep.subr.mxu0 0.0
        %1670 = vmatpush2.msra.mxu0 0.0
        %1671 = vmatprep.subr.mxu0 0.0
        %1672 = vmatpush2.msra.mxu0 0.0
        %1673 = vmatprep.subr.mxu0 0.0
        %1674 = vmatpush2.msra.mxu0 0.0
        %1675 = vmatprep.subr.mxu0 0.0
        %1676 = vmatpush2.msra.mxu0 0.0
        %1677 = vmatprep.subr.mxu0 0.0
        %1678 = vmatpush2.msra.mxu0 0.0
        %1679 = vmatprep.subr.mxu0 0.0
        %1680 = vmatpush2.msra.mxu0 0.0
        %1681 = vmatprep.subr.mxu0 0.0
        %1682 = vmatpush2.msra.mxu0 0.0
        %1683 = vmatprep.subr.mxu0 0.0
        %1684 = vmatpush2.msra.mxu0 0.0
        %1685 = vmatprep.subr.mxu0 0.0
        %1686 = vmatpush2.msra.mxu0 0.0
        %1687 = vmatprep.mubr.f32.mxu0 0.0
        %1688 = vmatmul.mubr.f32.gmra.mxu0 %v1572
        %v1689 = vpop.f32.mrf.mxu0
        %v1690 = vadd.f32 0.0, %v1689
        %v1691 = vpop.f32.mrf.mxu0
        %1692 = vmatprep.mubr.f32.mxu0 0.0
        %1693 = vmatmul.mubr.f32.gmra.mxu0 %v1575
        %v1694 = vpop.f32.mrf.mxu0
        %v1695 = vadd.f32 0.0, %v1694
        %v1696 = vpop.f32.mrf.mxu0
        %1697 = vmatprep.mubr.f32.mxu0 0.0
        %1698 = vmatmul.mubr.f32.gmra.mxu0 %v1578
        %v1699 = vpop.f32.mrf.mxu0
        %v1700 = vadd.f32 0.0, %v1699
        %v1701 = vpop.f32.mrf.mxu0
        %1702 = vmatprep.mubr.f32.mxu0 0.0
        %1703 = vmatmul.mubr.f32.gmra.mxu0 %v1581
        %v1704 = vpop.f32.mrf.mxu0
        %v1705 = vadd.f32 0.0, %v1704
        %v1706 = vpop.f32.mrf.mxu0
        %1707 = vmatprep.mubr.f32.mxu0 0.0
        %1708 = vmatmul.mubr.f32.gmra.mxu0 %v1584
        %v1709 = vpop.f32.mrf.mxu0
        %v1710 = vadd.f32 0.0, %v1709
        %v1711 = vpop.f32.mrf.mxu0
        %1712 = vmatprep.mubr.f32.mxu0 0.0
        %1713 = vmatmul.mubr.f32.gmra.mxu0 %v1587
        %v1714 = vpop.f32.mrf.mxu0
        %v1715 = vadd.f32 0.0, %v1714
        %v1716 = vpop.f32.mrf.mxu0
        %1717 = vmatprep.mubr.f32.mxu0 0.0
        %1718 = vmatmul.mubr.f32.gmra.mxu0 %v1590
        %v1719 = vpop.f32.mrf.mxu0
        %v1720 = vadd.f32 0.0, %v1719
        %v1721 = vpop.f32.mrf.mxu0
        %1722 = vmatprep.mubr.f32.mxu0 0.0
        %1723 = vmatmul.mubr.f32.gmra.mxu0 %v1593
        %v1724 = vpop.f32.mrf.mxu0
        %v1725 = vadd.f32 0.0, %v1724
        %v1726 = vpop.f32.mrf.mxu0
        %1727 = vmatprep.mubr.f32.mxu0 0.0
        %1728 = vmatmul.mubr.f32.gmra.mxu0 %v1596
        %v1729 = vpop.f32.mrf.mxu0
        %v1730 = vadd.f32 0.0, %v1729
        %v1731 = vpop.f32.mrf.mxu0
        %1732 = vmatprep.mubr.f32.mxu0 0.0
        %1733 = vmatmul.mubr.f32.gmra.mxu0 %v1599
        %v1734 = vpop.f32.mrf.mxu0
        %v1735 = vadd.f32 0.0, %v1734
        %v1736 = vpop.f32.mrf.mxu0
        %1737 = vmatprep.mubr.f32.mxu0 0.0
        %1738 = vmatmul.mubr.f32.gmra.mxu0 %v1602
        %v1739 = vpop.f32.mrf.mxu0
        %v1740 = vadd.f32 0.0, %v1739
        %v1741 = vpop.f32.mrf.mxu0
        %1742 = vmatprep.mubr.f32.mxu0 0.0
        %1743 = vmatmul.mubr.f32.gmra.mxu0 %v1605
        %v1744 = vpop.f32.mrf.mxu0
        %v1745 = vadd.f32 0.0, %v1744
        %v1746 = vpop.f32.mrf.mxu0
        %1747 = vmatprep.mubr.f32.mxu0 0.0
        %1748 = vmatmul.mubr.f32.gmra.mxu0 %v1608
        %v1749 = vpop.f32.mrf.mxu0
        %v1750 = vadd.f32 0.0, %v1749
        %v1751 = vpop.f32.mrf.mxu0
        %1752 = vmatprep.mubr.f32.mxu0 0.0
        %1753 = vmatmul.mubr.f32.gmra.mxu0 %v1611
        %v1754 = vpop.f32.mrf.mxu0
        %v1755 = vadd.f32 0.0, %v1754
        %v1756 = vpop.f32.mrf.mxu0
        %1757 = vmatprep.mubr.f32.mxu0 0.0
        %1758 = vmatmul.mubr.f32.gmra.mxu0 %v1614
        %v1759 = vpop.f32.mrf.mxu0
        %v1760 = vadd.f32 0.0, %v1759
        %v1761 = vpop.f32.mrf.mxu0
        %1762 = vmatprep.mubr.f32.mxu0 0.0
        %1763 = vmatmul.mubr.f32.gmra.mxu0 %v1617
        %v1764 = vpop.f32.mrf.mxu0
        %v1765 = vadd.f32 0.0, %v1764
        %v1766 = vpop.f32.mrf.mxu0
        %1767 = vdwg.mxu0
        %v1768 = vmax.f32 %v1690, 0.0
        %v1769 = vmax.f32 %v1695, 0.0
        %v1770 = vmax.f32 %v1700, 0.0
        %v1771 = vmax.f32 %v1705, 0.0
        %v1772 = vmax.f32 %v1710, 0.0
        %v1773 = vmax.f32 %v1715, 0.0
        %v1774 = vmax.f32 %v1720, 0.0
        %v1775 = vmax.f32 %v1725, 0.0
        %v1776 = vmax.f32 %v1730, 0.0
        %v1777 = vmax.f32 %v1735, 0.0
        %v1778 = vmax.f32 %v1740, 0.0
        %v1779 = vmax.f32 %v1745, 0.0
        %v1780 = vmax.f32 %v1750, 0.0
        %v1781 = vmax.f32 %v1755, 0.0
        %v1782 = vmax.f32 %v1760, 0.0
        %v1783 = vmax.f32 %v1765, 0.0
        %1784 = vst.msk [vmem:[#allocation3 + $0x5] sm:$0xff] %vm167, %v1768
        %1785 = vst.msk [vmem:[#allocation3 + $0xd] sm:$0xff] %vm167, %v1769
        %1786 = vst.msk [vmem:[#allocation3 + $0x15] sm:$0xff] %vm167, %v1770
        %1787 = vst.msk [vmem:[#allocation3 + $0x1d] sm:$0xff] %vm167, %v1771
        %1788 = vst.msk [vmem:[#allocation3 + $0x25] sm:$0xff] %vm167, %v1772
        %1789 = vst.msk [vmem:[#allocation3 + $0x2d] sm:$0xff] %vm167, %v1773
        %1790 = vst.msk [vmem:[#allocation3 + $0x35] sm:$0xff] %vm167, %v1774
        %1791 = vst.msk [vmem:[#allocation3 + $0x3d] sm:$0xff] %vm167, %v1775
        %1792 = vst.msk [vmem:[#allocation3 + $0x45] sm:$0xff] %vm167, %v1776
        %1793 = vst.msk [vmem:[#allocation3 + $0x4d] sm:$0xff] %vm167, %v1777
        %1794 = vst.msk [vmem:[#allocation3 + $0x55] sm:$0xff] %vm167, %v1778
        %1795 = vst.msk [vmem:[#allocation3 + $0x5d] sm:$0xff] %vm167, %v1779
        %1796 = vst.msk [vmem:[#allocation3 + $0x65] sm:$0xff] %vm167, %v1780
        %1797 = vst.msk [vmem:[#allocation3 + $0x6d] sm:$0xff] %vm167, %v1781
        %1798 = vst.msk [vmem:[#allocation3 + $0x75] sm:$0xff] %vm167, %v1782
        %1799 = vst.msk [vmem:[#allocation3 + $0x7d] sm:$0xff] %vm167, %v1783
        %v1800 = vld [vmem:[#allocation3] ss:$2 sm:$0xff]
        %s1801 = scalar_lea.vmem [#allocation3], 16
        %v1802 = vld [vmem:[%s1801] ss:$2 sm:$0xff]
        %s1803 = scalar_lea.vmem [#allocation3], 32
        %v1804 = vld [vmem:[%s1803] ss:$2 sm:$0xff]
        %s1805 = scalar_lea.vmem [#allocation3], 48
        %v1806 = vld [vmem:[%s1805] ss:$2 sm:$0xff]
        %s1807 = scalar_lea.vmem [#allocation3], 64
        %v1808 = vld [vmem:[%s1807] ss:$2 sm:$0xff]
        %s1809 = scalar_lea.vmem [#allocation3], 80
        %v1810 = vld [vmem:[%s1809] ss:$2 sm:$0xff]
        %s1811 = scalar_lea.vmem [#allocation3], 96
        %v1812 = vld [vmem:[%s1811] ss:$2 sm:$0xff]
        %s1813 = scalar_lea.vmem [#allocation3], 112
        %v1814 = vld [vmem:[%s1813] ss:$2 sm:$0xff]
        %1815 = vst.msk [vmem:[#allocation7] sm:$0xff] %vm167, %v1800
        %1816 = vst.msk [vmem:[#allocation7 + $0x10] sm:$0xff] %vm167, %v1802
        %1817 = vst.msk [vmem:[#allocation7 + $0x20] sm:$0xff] %vm167, %v1804
        %1818 = vst.msk [vmem:[#allocation7 + $0x30] sm:$0xff] %vm167, %v1806
        %1819 = vst.msk [vmem:[#allocation7 + $0x40] sm:$0xff] %vm167, %v1808
        %1820 = vst.msk [vmem:[#allocation7 + $0x50] sm:$0xff] %vm167, %v1810
        %1821 = vst.msk [vmem:[#allocation7 + $0x60] sm:$0xff] %vm167, %v1812
        %1822 = vst.msk [vmem:[#allocation7 + $0x70] sm:$0xff] %vm167, %v1814
        %s1823 = scalar_lea.vmem [#allocation3], 1
        %v1824 = vld [vmem:[%s1823] ss:$2 sm:$0xff]
        %s1825 = scalar_lea.vmem [#allocation3], 17
        %v1826 = vld [vmem:[%s1825] ss:$2 sm:$0xff]
        %s1827 = scalar_lea.vmem [#allocation3], 33
        %v1828 = vld [vmem:[%s1827] ss:$2 sm:$0xff]
        %s1829 = scalar_lea.vmem [#allocation3], 49
        %v1830 = vld [vmem:[%s1829] ss:$2 sm:$0xff]
        %s1831 = scalar_lea.vmem [#allocation3], 65
        %v1832 = vld [vmem:[%s1831] ss:$2 sm:$0xff]
        %s1833 = scalar_lea.vmem [#allocation3], 81
        %v1834 = vld [vmem:[%s1833] ss:$2 sm:$0xff]
        %s1835 = scalar_lea.vmem [#allocation3], 97
        %v1836 = vld [vmem:[%s1835] ss:$2 sm:$0xff]
        %s1837 = scalar_lea.vmem [#allocation3], 113
        %v1838 = vld [vmem:[%s1837] ss:$2 sm:$0xff]
        %1847 = vrot.lane.b32.xlu0 %v1824, 16
        %v1848 = vpop.permute.xlu0 %1847
        %1849 = vrot.lane.b32.xlu0 %v1826, 16
        %v1850 = vpop.permute.xlu0 %1849
        %1851 = vrot.lane.b32.xlu0 %v1828, 16
        %v1852 = vpop.permute.xlu0 %1851
        %1853 = vrot.lane.b32.xlu0 %v1830, 16
        %v1854 = vpop.permute.xlu0 %1853
        %1855 = vrot.lane.b32.xlu0 %v1832, 16
        %v1856 = vpop.permute.xlu0 %1855
        %1857 = vrot.lane.b32.xlu0 %v1834, 16
        %v1858 = vpop.permute.xlu0 %1857
        %1859 = vrot.lane.b32.xlu0 %v1836, 16
        %v1860 = vpop.permute.xlu0 %1859
        %1861 = vrot.lane.b32.xlu0 %v1838, 16
        %v1862 = vpop.permute.xlu0 %1861
        %vm1871 = vcmask 261248
        %1872 = vst.msk [vmem:[#allocation7] sm:$0xff] %vm1871, %v1848
        %1873 = vst.msk [vmem:[#allocation7 + $0x10] sm:$0xff] %vm1871, %v1850
        %1874 = vst.msk [vmem:[#allocation7 + $0x20] sm:$0xff] %vm1871, %v1852
        %1875 = vst.msk [vmem:[#allocation7 + $0x30] sm:$0xff] %vm1871, %v1854
        %1876 = vst.msk [vmem:[#allocation7 + $0x40] sm:$0xff] %vm1871, %v1856
        %1877 = vst.msk [vmem:[#allocation7 + $0x50] sm:$0xff] %vm1871, %v1858
        %1878 = vst.msk [vmem:[#allocation7 + $0x60] sm:$0xff] %vm1871, %v1860
        %1879 = vst.msk [vmem:[#allocation7 + $0x70] sm:$0xff] %vm1871, %v1862
        %s1880 = scalar_lea.vmem [#allocation3], 2
        %v1881 = vld [vmem:[%s1880] ss:$2 sm:$0xff]
        %s1882 = scalar_lea.vmem [#allocation3], 18
        %v1883 = vld [vmem:[%s1882] ss:$2 sm:$0xff]
        %s1884 = scalar_lea.vmem [#allocation3], 34
        %v1885 = vld [vmem:[%s1884] ss:$2 sm:$0xff]
        %s1886 = scalar_lea.vmem [#allocation3], 50
        %v1887 = vld [vmem:[%s1886] ss:$2 sm:$0xff]
        %s1888 = scalar_lea.vmem [#allocation3], 66
        %v1889 = vld [vmem:[%s1888] ss:$2 sm:$0xff]
        %s1890 = scalar_lea.vmem [#allocation3], 82
        %v1891 = vld [vmem:[%s1890] ss:$2 sm:$0xff]
        %s1892 = scalar_lea.vmem [#allocation3], 98
        %v1893 = vld [vmem:[%s1892] ss:$2 sm:$0xff]
        %s1894 = scalar_lea.vmem [#allocation3], 114
        %v1895 = vld [vmem:[%s1894] ss:$2 sm:$0xff]
        %1904 = vrot.lane.b32.xlu0 %v1881, 32
        %v1905 = vpop.permute.xlu0 %1904
        %1906 = vrot.lane.b32.xlu0 %v1883, 32
        %v1907 = vpop.permute.xlu0 %1906
        %1908 = vrot.lane.b32.xlu0 %v1885, 32
        %v1909 = vpop.permute.xlu0 %1908
        %1910 = vrot.lane.b32.xlu0 %v1887, 32
        %v1911 = vpop.permute.xlu0 %1910
        %1912 = vrot.lane.b32.xlu0 %v1889, 32
        %v1913 = vpop.permute.xlu0 %1912
        %1914 = vrot.lane.b32.xlu0 %v1891, 32
        %v1915 = vpop.permute.xlu0 %1914
        %1916 = vrot.lane.b32.xlu0 %v1893, 32
        %v1917 = vpop.permute.xlu0 %1916
        %1918 = vrot.lane.b32.xlu0 %v1895, 32
        %v1919 = vpop.permute.xlu0 %1918
        %vm1928 = vcmask 392448
        %1929 = vst.msk [vmem:[#allocation7] sm:$0xff] %vm1928, %v1905
        %1930 = vst.msk [vmem:[#allocation7 + $0x10] sm:$0xff] %vm1928, %v1907
        %1931 = vst.msk [vmem:[#allocation7 + $0x20] sm:$0xff] %vm1928, %v1909
        %1932 = vst.msk [vmem:[#allocation7 + $0x30] sm:$0xff] %vm1928, %v1911
        %1933 = vst.msk [vmem:[#allocation7 + $0x40] sm:$0xff] %vm1928, %v1913
        %1934 = vst.msk [vmem:[#allocation7 + $0x50] sm:$0xff] %vm1928, %v1915
        %1935 = vst.msk [vmem:[#allocation7 + $0x60] sm:$0xff] %vm1928, %v1917
        %1936 = vst.msk [vmem:[#allocation7 + $0x70] sm:$0xff] %vm1928, %v1919
        %s1937 = scalar_lea.vmem [#allocation3], 3
        %v1938 = vld [vmem:[%s1937] ss:$2 sm:$0xff]
        %s1939 = scalar_lea.vmem [#allocation3], 19
        %v1940 = vld [vmem:[%s1939] ss:$2 sm:$0xff]
        %s1941 = scalar_lea.vmem [#allocation3], 35
        %v1942 = vld [vmem:[%s1941] ss:$2 sm:$0xff]
        %s1943 = scalar_lea.vmem [#allocation3], 51
        %v1944 = vld [vmem:[%s1943] ss:$2 sm:$0xff]
        %s1945 = scalar_lea.vmem [#allocation3], 67
        %v1946 = vld [vmem:[%s1945] ss:$2 sm:$0xff]
        %s1947 = scalar_lea.vmem [#allocation3], 83
        %v1948 = vld [vmem:[%s1947] ss:$2 sm:$0xff]
        %s1949 = scalar_lea.vmem [#allocation3], 99
        %v1950 = vld [vmem:[%s1949] ss:$2 sm:$0xff]
        %s1951 = scalar_lea.vmem [#allocation3], 115
        %v1952 = vld [vmem:[%s1951] ss:$2 sm:$0xff]
        %1961 = vrot.lane.b32.xlu0 %v1938, 48
        %v1962 = vpop.permute.xlu0 %1961
        %1963 = vrot.lane.b32.xlu0 %v1940, 48
        %v1964 = vpop.permute.xlu0 %1963
        %1965 = vrot.lane.b32.xlu0 %v1942, 48
        %v1966 = vpop.permute.xlu0 %1965
        %1967 = vrot.lane.b32.xlu0 %v1944, 48
        %v1968 = vpop.permute.xlu0 %1967
        %1969 = vrot.lane.b32.xlu0 %v1946, 48
        %v1970 = vpop.permute.xlu0 %1969
        %1971 = vrot.lane.b32.xlu0 %v1948, 48
        %v1972 = vpop.permute.xlu0 %1971
        %1973 = vrot.lane.b32.xlu0 %v1950, 48
        %v1974 = vpop.permute.xlu0 %1973
        %1975 = vrot.lane.b32.xlu0 %v1952, 48
        %v1976 = vpop.permute.xlu0 %1975
        %vm1985 = vcmask 523648
        %1986 = vst.msk [vmem:[#allocation7] sm:$0xff] %vm1985, %v1962
        %1987 = vst.msk [vmem:[#allocation7 + $0x10] sm:$0xff] %vm1985, %v1964
        %1988 = vst.msk [vmem:[#allocation7 + $0x20] sm:$0xff] %vm1985, %v1966
        %1989 = vst.msk [vmem:[#allocation7 + $0x30] sm:$0xff] %vm1985, %v1968
        %1990 = vst.msk [vmem:[#allocation7 + $0x40] sm:$0xff] %vm1985, %v1970
        %1991 = vst.msk [vmem:[#allocation7 + $0x50] sm:$0xff] %vm1985, %v1972
        %1992 = vst.msk [vmem:[#allocation7 + $0x60] sm:$0xff] %vm1985, %v1974
        %1993 = vst.msk [vmem:[#allocation7 + $0x70] sm:$0xff] %vm1985, %v1976
        %s1994 = scalar_lea.vmem [#allocation3], 4
        %v1995 = vld [vmem:[%s1994] ss:$2 sm:$0xff]
        %s1996 = scalar_lea.vmem [#allocation3], 20
        %v1997 = vld [vmem:[%s1996] ss:$2 sm:$0xff]
        %s1998 = scalar_lea.vmem [#allocation3], 36
        %v1999 = vld [vmem:[%s1998] ss:$2 sm:$0xff]
        %s2000 = scalar_lea.vmem [#allocation3], 52
        %v2001 = vld [vmem:[%s2000] ss:$2 sm:$0xff]
        %s2002 = scalar_lea.vmem [#allocation3], 68
        %v2003 = vld [vmem:[%s2002] ss:$2 sm:$0xff]
        %s2004 = scalar_lea.vmem [#allocation3], 84
        %v2005 = vld [vmem:[%s2004] ss:$2 sm:$0xff]
        %s2006 = scalar_lea.vmem [#allocation3], 100
        %v2007 = vld [vmem:[%s2006] ss:$2 sm:$0xff]
        %s2008 = scalar_lea.vmem [#allocation3], 116
        %v2009 = vld [vmem:[%s2008] ss:$2 sm:$0xff]
        %2018 = vrot.lane.b32.xlu0 %v1995, 64
        %v2019 = vpop.permute.xlu0 %2018
        %2020 = vrot.lane.b32.xlu0 %v1997, 64
        %v2021 = vpop.permute.xlu0 %2020
        %2022 = vrot.lane.b32.xlu0 %v1999, 64
        %v2023 = vpop.permute.xlu0 %2022
        %2024 = vrot.lane.b32.xlu0 %v2001, 64
        %v2025 = vpop.permute.xlu0 %2024
        %2026 = vrot.lane.b32.xlu0 %v2003, 64
        %v2027 = vpop.permute.xlu0 %2026
        %2028 = vrot.lane.b32.xlu0 %v2005, 64
        %v2029 = vpop.permute.xlu0 %2028
        %2030 = vrot.lane.b32.xlu0 %v2007, 64
        %v2031 = vpop.permute.xlu0 %2030
        %2032 = vrot.lane.b32.xlu0 %v2009, 64
        %v2033 = vpop.permute.xlu0 %2032
        %vm2042 = vcmask 654848
        %2043 = vst.msk [vmem:[#allocation7] sm:$0xff] %vm2042, %v2019
        %2044 = vst.msk [vmem:[#allocation7 + $0x10] sm:$0xff] %vm2042, %v2021
        %2045 = vst.msk [vmem:[#allocation7 + $0x20] sm:$0xff] %vm2042, %v2023
        %2046 = vst.msk [vmem:[#allocation7 + $0x30] sm:$0xff] %vm2042, %v2025
        %2047 = vst.msk [vmem:[#allocation7 + $0x40] sm:$0xff] %vm2042, %v2027
        %2048 = vst.msk [vmem:[#allocation7 + $0x50] sm:$0xff] %vm2042, %v2029
        %2049 = vst.msk [vmem:[#allocation7 + $0x60] sm:$0xff] %vm2042, %v2031
        %2050 = vst.msk [vmem:[#allocation7 + $0x70] sm:$0xff] %vm2042, %v2033
        %s2051 = scalar_lea.vmem [#allocation3], 5
        %v2052 = vld [vmem:[%s2051] ss:$2 sm:$0xff]
        %s2053 = scalar_lea.vmem [#allocation3], 21
        %v2054 = vld [vmem:[%s2053] ss:$2 sm:$0xff]
        %s2055 = scalar_lea.vmem [#allocation3], 37
        %v2056 = vld [vmem:[%s2055] ss:$2 sm:$0xff]
        %s2057 = scalar_lea.vmem [#allocation3], 53
        %v2058 = vld [vmem:[%s2057] ss:$2 sm:$0xff]
        %s2059 = scalar_lea.vmem [#allocation3], 69
        %v2060 = vld [vmem:[%s2059] ss:$2 sm:$0xff]
        %s2061 = scalar_lea.vmem [#allocation3], 85
        %v2062 = vld [vmem:[%s2061] ss:$2 sm:$0xff]
        %s2063 = scalar_lea.vmem [#allocation3], 101
        %v2064 = vld [vmem:[%s2063] ss:$2 sm:$0xff]
        %s2065 = scalar_lea.vmem [#allocation3], 117
        %v2066 = vld [vmem:[%s2065] ss:$2 sm:$0xff]
        %2075 = vrot.lane.b32.xlu0 %v2052, 80
        %v2076 = vpop.permute.xlu0 %2075
        %2077 = vrot.lane.b32.xlu0 %v2054, 80
        %v2078 = vpop.permute.xlu0 %2077
        %2079 = vrot.lane.b32.xlu0 %v2056, 80
        %v2080 = vpop.permute.xlu0 %2079
        %2081 = vrot.lane.b32.xlu0 %v2058, 80
        %v2082 = vpop.permute.xlu0 %2081
        %2083 = vrot.lane.b32.xlu0 %v2060, 80
        %v2084 = vpop.permute.xlu0 %2083
        %2085 = vrot.lane.b32.xlu0 %v2062, 80
        %v2086 = vpop.permute.xlu0 %2085
        %2087 = vrot.lane.b32.xlu0 %v2064, 80
        %v2088 = vpop.permute.xlu0 %2087
        %2089 = vrot.lane.b32.xlu0 %v2066, 80
        %v2090 = vpop.permute.xlu0 %2089
        %vm2099 = vcmask 786048
        %2100 = vst.msk [vmem:[#allocation7] sm:$0xff] %vm2099, %v2076
        %2101 = vst.msk [vmem:[#allocation7 + $0x10] sm:$0xff] %vm2099, %v2078
        %2102 = vst.msk [vmem:[#allocation7 + $0x20] sm:$0xff] %vm2099, %v2080
        %2103 = vst.msk [vmem:[#allocation7 + $0x30] sm:$0xff] %vm2099, %v2082
        %2104 = vst.msk [vmem:[#allocation7 + $0x40] sm:$0xff] %vm2099, %v2084
        %2105 = vst.msk [vmem:[#allocation7 + $0x50] sm:$0xff] %vm2099, %v2086
        %2106 = vst.msk [vmem:[#allocation7 + $0x60] sm:$0xff] %vm2099, %v2088
        %2107 = vst.msk [vmem:[#allocation7 + $0x70] sm:$0xff] %vm2099, %v2090
        %s2108 = scalar_lea.vmem [#allocation3], 6
        %v2109 = vld [vmem:[%s2108] ss:$2 sm:$0xff]
        %s2110 = scalar_lea.vmem [#allocation3], 22
        %v2111 = vld [vmem:[%s2110] ss:$2 sm:$0xff]
        %s2112 = scalar_lea.vmem [#allocation3], 38
        %v2113 = vld [vmem:[%s2112] ss:$2 sm:$0xff]
        %s2114 = scalar_lea.vmem [#allocation3], 54
        %v2115 = vld [vmem:[%s2114] ss:$2 sm:$0xff]
        %s2116 = scalar_lea.vmem [#allocation3], 70
        %v2117 = vld [vmem:[%s2116] ss:$2 sm:$0xff]
        %s2118 = scalar_lea.vmem [#allocation3], 86
        %v2119 = vld [vmem:[%s2118] ss:$2 sm:$0xff]
        %s2120 = scalar_lea.vmem [#allocation3], 102
        %v2121 = vld [vmem:[%s2120] ss:$2 sm:$0xff]
        %s2122 = scalar_lea.vmem [#allocation3], 118
        %v2123 = vld [vmem:[%s2122] ss:$2 sm:$0xff]
        %2132 = vrot.lane.b32.xlu0 %v2109, 96
        %v2133 = vpop.permute.xlu0 %2132
        %2134 = vrot.lane.b32.xlu0 %v2111, 96
        %v2135 = vpop.permute.xlu0 %2134
        %2136 = vrot.lane.b32.xlu0 %v2113, 96
        %v2137 = vpop.permute.xlu0 %2136
        %2138 = vrot.lane.b32.xlu0 %v2115, 96
        %v2139 = vpop.permute.xlu0 %2138
        %2140 = vrot.lane.b32.xlu0 %v2117, 96
        %v2141 = vpop.permute.xlu0 %2140
        %2142 = vrot.lane.b32.xlu0 %v2119, 96
        %v2143 = vpop.permute.xlu0 %2142
        %2144 = vrot.lane.b32.xlu0 %v2121, 96
        %v2145 = vpop.permute.xlu0 %2144
        %2146 = vrot.lane.b32.xlu0 %v2123, 96
        %v2147 = vpop.permute.xlu0 %2146
        %vm2156 = vcmask 917248
        %2157 = vst.msk [vmem:[#allocation7] sm:$0xff] %vm2156, %v2133
        %2158 = vst.msk [vmem:[#allocation7 + $0x10] sm:$0xff] %vm2156, %v2135
        %2159 = vst.msk [vmem:[#allocation7 + $0x20] sm:$0xff] %vm2156, %v2137
        %2160 = vst.msk [vmem:[#allocation7 + $0x30] sm:$0xff] %vm2156, %v2139
        %2161 = vst.msk [vmem:[#allocation7 + $0x40] sm:$0xff] %vm2156, %v2141
        %2162 = vst.msk [vmem:[#allocation7 + $0x50] sm:$0xff] %vm2156, %v2143
        %2163 = vst.msk [vmem:[#allocation7 + $0x60] sm:$0xff] %vm2156, %v2145
        %2164 = vst.msk [vmem:[#allocation7 + $0x70] sm:$0xff] %vm2156, %v2147
        %s2165 = scalar_lea.vmem [#allocation3], 7
        %v2166 = vld [vmem:[%s2165] ss:$2 sm:$0xff]
        %s2167 = scalar_lea.vmem [#allocation3], 23
        %v2168 = vld [vmem:[%s2167] ss:$2 sm:$0xff]
        %s2169 = scalar_lea.vmem [#allocation3], 39
        %v2170 = vld [vmem:[%s2169] ss:$2 sm:$0xff]
        %s2171 = scalar_lea.vmem [#allocation3], 55
        %v2172 = vld [vmem:[%s2171] ss:$2 sm:$0xff]
        %s2173 = scalar_lea.vmem [#allocation3], 71
        %v2174 = vld [vmem:[%s2173] ss:$2 sm:$0xff]
        %s2175 = scalar_lea.vmem [#allocation3], 87
        %v2176 = vld [vmem:[%s2175] ss:$2 sm:$0xff]
        %s2177 = scalar_lea.vmem [#allocation3], 103
        %v2178 = vld [vmem:[%s2177] ss:$2 sm:$0xff]
        %s2179 = scalar_lea.vmem [#allocation3], 119
        %v2180 = vld [vmem:[%s2179] ss:$2 sm:$0xff]
        %2189 = vrot.lane.b32.xlu0 %v2166, 112
        %v2190 = vpop.permute.xlu0 %2189
        %2191 = vrot.lane.b32.xlu0 %v2168, 112
        %v2192 = vpop.permute.xlu0 %2191
        %2193 = vrot.lane.b32.xlu0 %v2170, 112
        %v2194 = vpop.permute.xlu0 %2193
        %2195 = vrot.lane.b32.xlu0 %v2172, 112
        %v2196 = vpop.permute.xlu0 %2195
        %2197 = vrot.lane.b32.xlu0 %v2174, 112
        %v2198 = vpop.permute.xlu0 %2197
        %2199 = vrot.lane.b32.xlu0 %v2176, 112
        %v2200 = vpop.permute.xlu0 %2199
        %2201 = vrot.lane.b32.xlu0 %v2178, 112
        %v2202 = vpop.permute.xlu0 %2201
        %2203 = vrot.lane.b32.xlu0 %v2180, 112
        %v2204 = vpop.permute.xlu0 %2203
        %vm2213 = vcmask 1048448
        %2214 = vst.msk [vmem:[#allocation7] sm:$0xff] %vm2213, %v2190
        %2215 = vst.msk [vmem:[#allocation7 + $0x10] sm:$0xff] %vm2213, %v2192
        %2216 = vst.msk [vmem:[#allocation7 + $0x20] sm:$0xff] %vm2213, %v2194
        %2217 = vst.msk [vmem:[#allocation7 + $0x30] sm:$0xff] %vm2213, %v2196
        %2218 = vst.msk [vmem:[#allocation7 + $0x40] sm:$0xff] %vm2213, %v2198
        %2219 = vst.msk [vmem:[#allocation7 + $0x50] sm:$0xff] %vm2213, %v2200
        %2220 = vst.msk [vmem:[#allocation7 + $0x60] sm:$0xff] %vm2213, %v2202
        %2221 = vst.msk [vmem:[#allocation7 + $0x70] sm:$0xff] %vm2213, %v2204
        %s2222 = scalar_lea.vmem [#allocation3], 8
        %v2223 = vld [vmem:[%s2222] ss:$2 sm:$0xff]
        %s2224 = scalar_lea.vmem [#allocation3], 24
        %v2225 = vld [vmem:[%s2224] ss:$2 sm:$0xff]
        %s2226 = scalar_lea.vmem [#allocation3], 40
        %v2227 = vld [vmem:[%s2226] ss:$2 sm:$0xff]
        %s2228 = scalar_lea.vmem [#allocation3], 56
        %v2229 = vld [vmem:[%s2228] ss:$2 sm:$0xff]
        %s2230 = scalar_lea.vmem [#allocation3], 72
        %v2231 = vld [vmem:[%s2230] ss:$2 sm:$0xff]
        %s2232 = scalar_lea.vmem [#allocation3], 88
        %v2233 = vld [vmem:[%s2232] ss:$2 sm:$0xff]
        %s2234 = scalar_lea.vmem [#allocation3], 104
        %v2235 = vld [vmem:[%s2234] ss:$2 sm:$0xff]
        %s2236 = scalar_lea.vmem [#allocation3], 120
        %v2237 = vld [vmem:[%s2236] ss:$2 sm:$0xff]
        %2238 = vst.msk [vmem:[#allocation7 + $0x8] sm:$0xff] %vm167, %v2223
        %2239 = vst.msk [vmem:[#allocation7 + $0x18] sm:$0xff] %vm167, %v2225
        %2240 = vst.msk [vmem:[#allocation7 + $0x28] sm:$0xff] %vm167, %v2227
        %2241 = vst.msk [vmem:[#allocation7 + $0x38] sm:$0xff] %vm167, %v2229
        %2242 = vst.msk [vmem:[#allocation7 + $0x48] sm:$0xff] %vm167, %v2231
        %2243 = vst.msk [vmem:[#allocation7 + $0x58] sm:$0xff] %vm167, %v2233
        %2244 = vst.msk [vmem:[#allocation7 + $0x68] sm:$0xff] %vm167, %v2235
        %2245 = vst.msk [vmem:[#allocation7 + $0x78] sm:$0xff] %vm167, %v2237
        %s2246 = scalar_lea.vmem [#allocation3], 9
        %v2247 = vld [vmem:[%s2246] ss:$2 sm:$0xff]
        %s2248 = scalar_lea.vmem [#allocation3], 25
        %v2249 = vld [vmem:[%s2248] ss:$2 sm:$0xff]
        %s2250 = scalar_lea.vmem [#allocation3], 41
        %v2251 = vld [vmem:[%s2250] ss:$2 sm:$0xff]
        %s2252 = scalar_lea.vmem [#allocation3], 57
        %v2253 = vld [vmem:[%s2252] ss:$2 sm:$0xff]
        %s2254 = scalar_lea.vmem [#allocation3], 73
        %v2255 = vld [vmem:[%s2254] ss:$2 sm:$0xff]
        %s2256 = scalar_lea.vmem [#allocation3], 89
        %v2257 = vld [vmem:[%s2256] ss:$2 sm:$0xff]
        %s2258 = scalar_lea.vmem [#allocation3], 105
        %v2259 = vld [vmem:[%s2258] ss:$2 sm:$0xff]
        %s2260 = scalar_lea.vmem [#allocation3], 121
        %v2261 = vld [vmem:[%s2260] ss:$2 sm:$0xff]
        %2270 = vrot.lane.b32.xlu0 %v2247, 16
        %v2271 = vpop.permute.xlu0 %2270
        %2272 = vrot.lane.b32.xlu0 %v2249, 16
        %v2273 = vpop.permute.xlu0 %2272
        %2274 = vrot.lane.b32.xlu0 %v2251, 16
        %v2275 = vpop.permute.xlu0 %2274
        %2276 = vrot.lane.b32.xlu0 %v2253, 16
        %v2277 = vpop.permute.xlu0 %2276
        %2278 = vrot.lane.b32.xlu0 %v2255, 16
        %v2279 = vpop.permute.xlu0 %2278
        %2280 = vrot.lane.b32.xlu0 %v2257, 16
        %v2281 = vpop.permute.xlu0 %2280
        %2282 = vrot.lane.b32.xlu0 %v2259, 16
        %v2283 = vpop.permute.xlu0 %2282
        %2284 = vrot.lane.b32.xlu0 %v2261, 16
        %v2285 = vpop.permute.xlu0 %2284
        %2294 = vst.msk [vmem:[#allocation7 + $0x8] sm:$0xff] %vm1871, %v2271
        %2295 = vst.msk [vmem:[#allocation7 + $0x18] sm:$0xff] %vm1871, %v2273
        %2296 = vst.msk [vmem:[#allocation7 + $0x28] sm:$0xff] %vm1871, %v2275
        %2297 = vst.msk [vmem:[#allocation7 + $0x38] sm:$0xff] %vm1871, %v2277
        %2298 = vst.msk [vmem:[#allocation7 + $0x48] sm:$0xff] %vm1871, %v2279
        %2299 = vst.msk [vmem:[#allocation7 + $0x58] sm:$0xff] %vm1871, %v2281
        %2300 = vst.msk [vmem:[#allocation7 + $0x68] sm:$0xff] %vm1871, %v2283
        %2301 = vst.msk [vmem:[#allocation7 + $0x78] sm:$0xff] %vm1871, %v2285
        %s2302 = scalar_lea.vmem [#allocation3], 10
        %v2303 = vld [vmem:[%s2302] ss:$2 sm:$0xff]
        %s2304 = scalar_lea.vmem [#allocation3], 26
        %v2305 = vld [vmem:[%s2304] ss:$2 sm:$0xff]
        %s2306 = scalar_lea.vmem [#allocation3], 42
        %v2307 = vld [vmem:[%s2306] ss:$2 sm:$0xff]
        %s2308 = scalar_lea.vmem [#allocation3], 58
        %v2309 = vld [vmem:[%s2308] ss:$2 sm:$0xff]
        %s2310 = scalar_lea.vmem [#allocation3], 74
        %v2311 = vld [vmem:[%s2310] ss:$2 sm:$0xff]
        %s2312 = scalar_lea.vmem [#allocation3], 90
        %v2313 = vld [vmem:[%s2312] ss:$2 sm:$0xff]
        %s2314 = scalar_lea.vmem [#allocation3], 106
        %v2315 = vld [vmem:[%s2314] ss:$2 sm:$0xff]
        %s2316 = scalar_lea.vmem [#allocation3], 122
        %v2317 = vld [vmem:[%s2316] ss:$2 sm:$0xff]
        %2326 = vrot.lane.b32.xlu0 %v2303, 32
        %v2327 = vpop.permute.xlu0 %2326
        %2328 = vrot.lane.b32.xlu0 %v2305, 32
        %v2329 = vpop.permute.xlu0 %2328
        %2330 = vrot.lane.b32.xlu0 %v2307, 32
        %v2331 = vpop.permute.xlu0 %2330
        %2332 = vrot.lane.b32.xlu0 %v2309, 32
        %v2333 = vpop.permute.xlu0 %2332
        %2334 = vrot.lane.b32.xlu0 %v2311, 32
        %v2335 = vpop.permute.xlu0 %2334
        %2336 = vrot.lane.b32.xlu0 %v2313, 32
        %v2337 = vpop.permute.xlu0 %2336
        %2338 = vrot.lane.b32.xlu0 %v2315, 32
        %v2339 = vpop.permute.xlu0 %2338
        %2340 = vrot.lane.b32.xlu0 %v2317, 32
        %v2341 = vpop.permute.xlu0 %2340
        %2350 = vst.msk [vmem:[#allocation7 + $0x8] sm:$0xff] %vm1928, %v2327
        %2351 = vst.msk [vmem:[#allocation7 + $0x18] sm:$0xff] %vm1928, %v2329
        %2352 = vst.msk [vmem:[#allocation7 + $0x28] sm:$0xff] %vm1928, %v2331
        %2353 = vst.msk [vmem:[#allocation7 + $0x38] sm:$0xff] %vm1928, %v2333
        %2354 = vst.msk [vmem:[#allocation7 + $0x48] sm:$0xff] %vm1928, %v2335
        %2355 = vst.msk [vmem:[#allocation7 + $0x58] sm:$0xff] %vm1928, %v2337
        %2356 = vst.msk [vmem:[#allocation7 + $0x68] sm:$0xff] %vm1928, %v2339
        %2357 = vst.msk [vmem:[#allocation7 + $0x78] sm:$0xff] %vm1928, %v2341
        %s2358 = scalar_lea.vmem [#allocation3], 11
        %v2359 = vld [vmem:[%s2358] ss:$2 sm:$0xff]
        %s2360 = scalar_lea.vmem [#allocation3], 27
        %v2361 = vld [vmem:[%s2360] ss:$2 sm:$0xff]
        %s2362 = scalar_lea.vmem [#allocation3], 43
        %v2363 = vld [vmem:[%s2362] ss:$2 sm:$0xff]
        %s2364 = scalar_lea.vmem [#allocation3], 59
        %v2365 = vld [vmem:[%s2364] ss:$2 sm:$0xff]
        %s2366 = scalar_lea.vmem [#allocation3], 75
        %v2367 = vld [vmem:[%s2366] ss:$2 sm:$0xff]
        %s2368 = scalar_lea.vmem [#allocation3], 91
        %v2369 = vld [vmem:[%s2368] ss:$2 sm:$0xff]
        %s2370 = scalar_lea.vmem [#allocation3], 107
        %v2371 = vld [vmem:[%s2370] ss:$2 sm:$0xff]
        %s2372 = scalar_lea.vmem [#allocation3], 123
        %v2373 = vld [vmem:[%s2372] ss:$2 sm:$0xff]
        %2382 = vrot.lane.b32.xlu0 %v2359, 48
        %v2383 = vpop.permute.xlu0 %2382
        %2384 = vrot.lane.b32.xlu0 %v2361, 48
        %v2385 = vpop.permute.xlu0 %2384
        %2386 = vrot.lane.b32.xlu0 %v2363, 48
        %v2387 = vpop.permute.xlu0 %2386
        %2388 = vrot.lane.b32.xlu0 %v2365, 48
        %v2389 = vpop.permute.xlu0 %2388
        %2390 = vrot.lane.b32.xlu0 %v2367, 48
        %v2391 = vpop.permute.xlu0 %2390
        %2392 = vrot.lane.b32.xlu0 %v2369, 48
        %v2393 = vpop.permute.xlu0 %2392
        %2394 = vrot.lane.b32.xlu0 %v2371, 48
        %v2395 = vpop.permute.xlu0 %2394
        %2396 = vrot.lane.b32.xlu0 %v2373, 48
        %v2397 = vpop.permute.xlu0 %2396
        %2406 = vst.msk [vmem:[#allocation7 + $0x8] sm:$0xff] %vm1985, %v2383
        %2407 = vst.msk [vmem:[#allocation7 + $0x18] sm:$0xff] %vm1985, %v2385
        %2408 = vst.msk [vmem:[#allocation7 + $0x28] sm:$0xff] %vm1985, %v2387
        %2409 = vst.msk [vmem:[#allocation7 + $0x38] sm:$0xff] %vm1985, %v2389
        %2410 = vst.msk [vmem:[#allocation7 + $0x48] sm:$0xff] %vm1985, %v2391
        %2411 = vst.msk [vmem:[#allocation7 + $0x58] sm:$0xff] %vm1985, %v2393
        %2412 = vst.msk [vmem:[#allocation7 + $0x68] sm:$0xff] %vm1985, %v2395
        %2413 = vst.msk [vmem:[#allocation7 + $0x78] sm:$0xff] %vm1985, %v2397
        %vm2414 = vcmask 531968
        %2415 = vst.msk [vmem:[#allocation7 + $0x8] sm:$0xff] %vm2414, 1.0
        %2416 = vst.msk [vmem:[#allocation7 + $0x18] sm:$0xff] %vm2414, 1.0
        %2417 = vst.msk [vmem:[#allocation7 + $0x28] sm:$0xff] %vm2414, 1.0
        %2418 = vst.msk [vmem:[#allocation7 + $0x38] sm:$0xff] %vm2414, 1.0
        %2419 = vst.msk [vmem:[#allocation7 + $0x48] sm:$0xff] %vm2414, 1.0
        %2420 = vst.msk [vmem:[#allocation7 + $0x58] sm:$0xff] %vm2414, 1.0
        %2421 = vst.msk [vmem:[#allocation7 + $0x68] sm:$0xff] %vm2414, 1.0
        %2422 = vst.msk [vmem:[#allocation7 + $0x78] sm:$0xff] %vm2414, 1.0
        %v2423 = vld [vmem:[#allocation8 + $0x10] sm:$0xff]
        %v2424 = vld [vmem:[#allocation8 + $0x18] sm:$0xff]
        %v2425 = vld [vmem:[#allocation8 + $0x20] sm:$0xff]
        %v2426 = vld [vmem:[#allocation8 + $0x28] sm:$0xff]
        %v2427 = vld [vmem:[#allocation8 + $0x30] sm:$0xff]
        %v2428 = vld [vmem:[#allocation8 + $0x38] sm:$0xff]
        %v2429 = vld [vmem:[#allocation8 + $0x40] sm:$0xff]
        %v2430 = vld [vmem:[#allocation8 + $0x48] sm:$0xff]
        %v2431 = vld [vmem:[#allocation8 + $0x50] sm:$0xff]
        %v2432 = vld [vmem:[#allocation8 + $0x58] sm:$0xff]
        %v2433 = vld [vmem:[#allocation8 + $0x60] sm:$0xff]
        %v2434 = vld [vmem:[#allocation8 + $0x68] sm:$0xff]
        %v2435 = vld [vmem:[#allocation8 + $0x70] sm:$0xff]
        %v2436 = vld [vmem:[#allocation8 + $0x78] sm:$0xff]
        %v2437 = vld [vmem:[#allocation8 + $0x80] sm:$0xff]
        %v2438 = vld [vmem:[#allocation8 + $0x88] sm:$0xff]
        %v2439 = vld [vmem:[#allocation8 + $0x90] sm:$0xff]
        %v2440 = vld [vmem:[#allocation8 + $0x98] sm:$0xff]
        %v2441 = vld [vmem:[#allocation8 + $0xa0] sm:$0xff]
        %v2442 = vld [vmem:[#allocation8 + $0xa8] sm:$0xff]
        %v2443 = vld [vmem:[#allocation8 + $0xb0] sm:$0xff]
        %v2444 = vld [vmem:[#allocation8 + $0xb8] sm:$0xff]
        %v2445 = vld [vmem:[#allocation8 + $0xc0] sm:$0xff]
        %v2446 = vld [vmem:[#allocation8 + $0xc8] sm:$0xff]
        %v2447 = vld [vmem:[#allocation8 + $0xd0] sm:$0x1]
        %v2448 = vld [vmem:[#allocation7] sm:$0xff]
        %v2449 = vld [vmem:[#allocation7 + $0x8] sm:$0xff]
        %v2450 = vld [vmem:[#allocation7 + $0x10] sm:$0xff]
        %v2451 = vld [vmem:[#allocation7 + $0x18] sm:$0xff]
        %v2452 = vld [vmem:[#allocation7 + $0x20] sm:$0xff]
        %v2453 = vld [vmem:[#allocation7 + $0x28] sm:$0xff]
        %v2454 = vld [vmem:[#allocation7 + $0x30] sm:$0xff]
        %v2455 = vld [vmem:[#allocation7 + $0x38] sm:$0xff]
        %v2456 = vld [vmem:[#allocation7 + $0x40] sm:$0xff]
        %v2457 = vld [vmem:[#allocation7 + $0x48] sm:$0xff]
        %v2458 = vld [vmem:[#allocation7 + $0x50] sm:$0xff]
        %v2459 = vld [vmem:[#allocation7 + $0x58] sm:$0xff]
        %v2460 = vld [vmem:[#allocation7 + $0x60] sm:$0xff]
        %v2461 = vld [vmem:[#allocation7 + $0x68] sm:$0xff]
        %v2462 = vld [vmem:[#allocation7 + $0x70] sm:$0xff]
        %v2463 = vld [vmem:[#allocation7 + $0x78] sm:$0xff]
        %vm2464 = vcmask 531456
        %v2466 = vsel %vm2464, %v2449, 0
        %v2469 = vsel %vm2464, %v2451, 0
        %v2472 = vsel %vm2464, %v2453, 0
        %v2475 = vsel %vm2464, %v2455, 0
        %v2478 = vsel %vm2464, %v2457, 0
        %v2481 = vsel %vm2464, %v2459, 0
        %v2484 = vsel %vm2464, %v2461, 0
        %v2487 = vsel %vm2464, %v2463, 0
        %vm2489 = vcmask 1040384
        %v2491 = vsel %vm2489, %v2447, 0
        %2493 = vmatprep.subr.mxu0 0.0
        %2494 = vmatpush1.msra.mxu0 %v2438
        %2495 = vmatprep.subr.mxu0 0.0
        %2496 = vmatpush1.msra.mxu0 %v2437
        %2497 = vmatprep.subr.mxu0 0.0
        %2498 = vmatpush1.msra.mxu0 %v2436
        %2499 = vmatprep.subr.mxu0 0.0
        %2500 = vmatpush1.msra.mxu0 %v2435
        %2501 = vmatprep.subr.mxu0 0.0
        %2502 = vmatpush1.msra.mxu0 %v2434
        %2503 = vmatprep.subr.mxu0 0.0
        %2504 = vmatpush1.msra.mxu0 %v2433
        %2505 = vmatprep.subr.mxu0 0.0
        %2506 = vmatpush1.msra.mxu0 %v2432
        %2507 = vmatprep.subr.mxu0 0.0
        %2508 = vmatpush1.msra.mxu0 %v2431
        %2509 = vmatprep.subr.mxu0 0.0
        %2510 = vmatpush1.msra.mxu0 %v2430
        %2511 = vmatprep.subr.mxu0 0.0
        %2512 = vmatpush1.msra.mxu0 %v2429
        %2513 = vmatprep.subr.mxu0 0.0
        %2514 = vmatpush1.msra.mxu0 %v2428
        %2515 = vmatprep.subr.mxu0 0.0
        %2516 = vmatpush1.msra.mxu0 %v2427
        %2517 = vmatprep.subr.mxu0 0.0
        %2518 = vmatpush1.msra.mxu0 %v2426
        %2519 = vmatprep.subr.mxu0 0.0
        %2520 = vmatpush1.msra.mxu0 %v2425
        %2521 = vmatprep.subr.mxu0 0.0
        %2522 = vmatpush1.msra.mxu0 %v2424
        %2523 = vmatprep.subr.mxu0 0.0
        %2524 = vmatpush1.msra.mxu0 %v2423
        %2525 = vmatprep.subr.mxu0 0.0
        %2526 = vmatpush2.msra.mxu0 0.0
        %2527 = vmatprep.subr.mxu0 0.0
        %2528 = vmatpush2.msra.mxu0 0.0
        %2529 = vmatprep.subr.mxu0 0.0
        %2530 = vmatpush2.msra.mxu0 0.0
        %2531 = vmatprep.subr.mxu0 0.0
        %2532 = vmatpush2.msra.mxu0 0.0
        %2533 = vmatprep.subr.mxu0 0.0
        %2534 = vmatpush2.msra.mxu0 0.0
        %2535 = vmatprep.subr.mxu0 0.0
        %2536 = vmatpush2.msra.mxu0 0.0
        %2537 = vmatprep.subr.mxu0 0.0
        %2538 = vmatpush2.msra.mxu0 0.0
        %2539 = vmatprep.subr.mxu0 0.0
        %2540 = vmatpush2.msra.mxu0 %v2491
        %2541 = vmatprep.subr.mxu0 0.0
        %2542 = vmatpush2.msra.mxu0 %v2446
        %2543 = vmatprep.subr.mxu0 0.0
        %2544 = vmatpush2.msra.mxu0 %v2445
        %2545 = vmatprep.subr.mxu0 0.0
        %2546 = vmatpush2.msra.mxu0 %v2444
        %2547 = vmatprep.subr.mxu0 0.0
        %2548 = vmatpush2.msra.mxu0 %v2443
        %2549 = vmatprep.subr.mxu0 0.0
        %2550 = vmatpush2.msra.mxu0 %v2442
        %2551 = vmatprep.subr.mxu0 0.0
        %2552 = vmatpush2.msra.mxu0 %v2441
        %2553 = vmatprep.subr.mxu0 0.0
        %2554 = vmatpush2.msra.mxu0 %v2440
        %2555 = vmatprep.subr.mxu0 0.0
        %2556 = vmatpush2.msra.mxu0 %v2439
        %2557 = vmatprep.mubr.f32.mxu0 %v2466
        %2558 = vmatmul.mubr.f32.gmra.mxu0 %v2448
        %v2559 = vpop.f32.mrf.mxu0
        %v2560 = vadd.f32 0.0, %v2559
        %v2561 = vpop.f32.mrf.mxu0
        %2562 = vmatprep.mubr.f32.mxu0 %v2469
        %2563 = vmatmul.mubr.f32.gmra.mxu0 %v2450
        %v2564 = vpop.f32.mrf.mxu0
        %v2565 = vadd.f32 0.0, %v2564
        %v2566 = vpop.f32.mrf.mxu0
        %2567 = vmatprep.mubr.f32.mxu0 %v2472
        %2568 = vmatmul.mubr.f32.gmra.mxu0 %v2452
        %v2569 = vpop.f32.mrf.mxu0
        %v2570 = vadd.f32 0.0, %v2569
        %v2571 = vpop.f32.mrf.mxu0
        %2572 = vmatprep.mubr.f32.mxu0 %v2475
        %2573 = vmatmul.mubr.f32.gmra.mxu0 %v2454
        %v2574 = vpop.f32.mrf.mxu0
        %v2575 = vadd.f32 0.0, %v2574
        %v2576 = vpop.f32.mrf.mxu0
        %2577 = vmatprep.mubr.f32.mxu0 %v2478
        %2578 = vmatmul.mubr.f32.gmra.mxu0 %v2456
        %v2579 = vpop.f32.mrf.mxu0
        %v2580 = vadd.f32 0.0, %v2579
        %v2581 = vpop.f32.mrf.mxu0
        %2582 = vmatprep.mubr.f32.mxu0 %v2481
        %2583 = vmatmul.mubr.f32.gmra.mxu0 %v2458
        %v2584 = vpop.f32.mrf.mxu0
        %v2585 = vadd.f32 0.0, %v2584
        %v2586 = vpop.f32.mrf.mxu0
        %2587 = vmatprep.mubr.f32.mxu0 %v2484
        %2588 = vmatmul.mubr.f32.gmra.mxu0 %v2460
        %v2589 = vpop.f32.mrf.mxu0
        %v2590 = vadd.f32 0.0, %v2589
        %v2591 = vpop.f32.mrf.mxu0
        %2592 = vmatprep.mubr.f32.mxu0 %v2487
        %2593 = vmatmul.mubr.f32.gmra.mxu0 %v2462
        %v2594 = vpop.f32.mrf.mxu0
        %v2595 = vadd.f32 0.0, %v2594
        %v2596 = vpop.f32.mrf.mxu0
        %2597 = vdwg.mxu0
        %v2598 = vmax.f32 %v2560, 0.0
        %v2599 = vmax.f32 %v2565, 0.0
        %v2600 = vmax.f32 %v2570, 0.0
        %v2601 = vmax.f32 %v2575, 0.0
        %v2602 = vmax.f32 %v2580, 0.0
        %v2603 = vmax.f32 %v2585, 0.0
        %v2604 = vmax.f32 %v2590, 0.0
        %v2605 = vmax.f32 %v2595, 0.0
        %2606 = vst.msk [vmem:[#allocation4 + $0x4] sm:$0xff] %vm167, %v2598
        %2607 = vst.msk [vmem:[#allocation4 + $0xc] sm:$0xff] %vm167, %v2599
        %2608 = vst.msk [vmem:[#allocation4 + $0x14] sm:$0xff] %vm167, %v2600
        %2609 = vst.msk [vmem:[#allocation4 + $0x1c] sm:$0xff] %vm167, %v2601
        %2610 = vst.msk [vmem:[#allocation4 + $0x24] sm:$0xff] %vm167, %v2602
        %2611 = vst.msk [vmem:[#allocation4 + $0x2c] sm:$0xff] %vm167, %v2603
        %2612 = vst.msk [vmem:[#allocation4 + $0x34] sm:$0xff] %vm167, %v2604
        %2613 = vst.msk [vmem:[#allocation4 + $0x3c] sm:$0xff] %vm167, %v2605
        %v2614 = vld [vmem:[#allocation4] ss:$2 sm:$0xff]
        %s2615 = scalar_lea.vmem [#allocation4], 16
        %v2616 = vld [vmem:[%s2615] ss:$2 sm:$0xff]
        %s2617 = scalar_lea.vmem [#allocation4], 32
        %v2618 = vld [vmem:[%s2617] ss:$2 sm:$0xff]
        %s2619 = scalar_lea.vmem [#allocation4], 48
        %v2620 = vld [vmem:[%s2619] ss:$2 sm:$0xff]
        %2621 = vst.msk [vmem:[#allocation7] sm:$0xff] %vm167, %v2614
        %2622 = vst.msk [vmem:[#allocation7 + $0x10] sm:$0xff] %vm167, %v2616
        %2623 = vst.msk [vmem:[#allocation7 + $0x20] sm:$0xff] %vm167, %v2618
        %2624 = vst.msk [vmem:[#allocation7 + $0x30] sm:$0xff] %vm167, %v2620
        %s2625 = scalar_lea.vmem [#allocation4], 1
        %v2626 = vld [vmem:[%s2625] ss:$2 sm:$0xff]
        %s2627 = scalar_lea.vmem [#allocation4], 17
        %v2628 = vld [vmem:[%s2627] ss:$2 sm:$0xff]
        %s2629 = scalar_lea.vmem [#allocation4], 33
        %v2630 = vld [vmem:[%s2629] ss:$2 sm:$0xff]
        %s2631 = scalar_lea.vmem [#allocation4], 49
        %v2632 = vld [vmem:[%s2631] ss:$2 sm:$0xff]
        %2637 = vrot.lane.b32.xlu0 %v2626, 16
        %v2638 = vpop.permute.xlu0 %2637
        %2639 = vrot.lane.b32.xlu0 %v2628, 16
        %v2640 = vpop.permute.xlu0 %2639
        %2641 = vrot.lane.b32.xlu0 %v2630, 16
        %v2642 = vpop.permute.xlu0 %2641
        %2643 = vrot.lane.b32.xlu0 %v2632, 16
        %v2644 = vpop.permute.xlu0 %2643
        %2649 = vst.msk [vmem:[#allocation7] sm:$0xff] %vm1871, %v2638
        %2650 = vst.msk [vmem:[#allocation7 + $0x10] sm:$0xff] %vm1871, %v2640
        %2651 = vst.msk [vmem:[#allocation7 + $0x20] sm:$0xff] %vm1871, %v2642
        %2652 = vst.msk [vmem:[#allocation7 + $0x30] sm:$0xff] %vm1871, %v2644
        %s2653 = scalar_lea.vmem [#allocation4], 2
        %v2654 = vld [vmem:[%s2653] ss:$2 sm:$0xff]
        %s2655 = scalar_lea.vmem [#allocation4], 18
        %v2656 = vld [vmem:[%s2655] ss:$2 sm:$0xff]
        %s2657 = scalar_lea.vmem [#allocation4], 34
        %v2658 = vld [vmem:[%s2657] ss:$2 sm:$0xff]
        %s2659 = scalar_lea.vmem [#allocation4], 50
        %v2660 = vld [vmem:[%s2659] ss:$2 sm:$0xff]
        %2665 = vrot.lane.b32.xlu0 %v2654, 32
        %v2666 = vpop.permute.xlu0 %2665
        %2667 = vrot.lane.b32.xlu0 %v2656, 32
        %v2668 = vpop.permute.xlu0 %2667
        %2669 = vrot.lane.b32.xlu0 %v2658, 32
        %v2670 = vpop.permute.xlu0 %2669
        %2671 = vrot.lane.b32.xlu0 %v2660, 32
        %v2672 = vpop.permute.xlu0 %2671
        %2677 = vst.msk [vmem:[#allocation7] sm:$0xff] %vm1928, %v2666
        %2678 = vst.msk [vmem:[#allocation7 + $0x10] sm:$0xff] %vm1928, %v2668
        %2679 = vst.msk [vmem:[#allocation7 + $0x20] sm:$0xff] %vm1928, %v2670
        %2680 = vst.msk [vmem:[#allocation7 + $0x30] sm:$0xff] %vm1928, %v2672
        %s2681 = scalar_lea.vmem [#allocation4], 3
        %v2682 = vld [vmem:[%s2681] ss:$2 sm:$0xff]
        %s2683 = scalar_lea.vmem [#allocation4], 19
        %v2684 = vld [vmem:[%s2683] ss:$2 sm:$0xff]
        %s2685 = scalar_lea.vmem [#allocation4], 35
        %v2686 = vld [vmem:[%s2685] ss:$2 sm:$0xff]
        %s2687 = scalar_lea.vmem [#allocation4], 51
        %v2688 = vld [vmem:[%s2687] ss:$2 sm:$0xff]
        %2693 = vrot.lane.b32.xlu0 %v2682, 48
        %v2694 = vpop.permute.xlu0 %2693
        %2695 = vrot.lane.b32.xlu0 %v2684, 48
        %v2696 = vpop.permute.xlu0 %2695
        %2697 = vrot.lane.b32.xlu0 %v2686, 48
        %v2698 = vpop.permute.xlu0 %2697
        %2699 = vrot.lane.b32.xlu0 %v2688, 48
        %v2700 = vpop.permute.xlu0 %2699
        %2705 = vst.msk [vmem:[#allocation7] sm:$0xff] %vm1985, %v2694
        %2706 = vst.msk [vmem:[#allocation7 + $0x10] sm:$0xff] %vm1985, %v2696
        %2707 = vst.msk [vmem:[#allocation7 + $0x20] sm:$0xff] %vm1985, %v2698
        %2708 = vst.msk [vmem:[#allocation7 + $0x30] sm:$0xff] %vm1985, %v2700
        %s2709 = scalar_lea.vmem [#allocation4], 4
        %v2710 = vld [vmem:[%s2709] ss:$2 sm:$0xff]
        %s2711 = scalar_lea.vmem [#allocation4], 20
        %v2712 = vld [vmem:[%s2711] ss:$2 sm:$0xff]
        %s2713 = scalar_lea.vmem [#allocation4], 36
        %v2714 = vld [vmem:[%s2713] ss:$2 sm:$0xff]
        %s2715 = scalar_lea.vmem [#allocation4], 52
        %v2716 = vld [vmem:[%s2715] ss:$2 sm:$0xff]
        %2721 = vrot.lane.b32.xlu0 %v2710, 64
        %v2722 = vpop.permute.xlu0 %2721
        %2723 = vrot.lane.b32.xlu0 %v2712, 64
        %v2724 = vpop.permute.xlu0 %2723
        %2725 = vrot.lane.b32.xlu0 %v2714, 64
        %v2726 = vpop.permute.xlu0 %2725
        %2727 = vrot.lane.b32.xlu0 %v2716, 64
        %v2728 = vpop.permute.xlu0 %2727
        %2733 = vst.msk [vmem:[#allocation7] sm:$0xff] %vm2042, %v2722
        %2734 = vst.msk [vmem:[#allocation7 + $0x10] sm:$0xff] %vm2042, %v2724
        %2735 = vst.msk [vmem:[#allocation7 + $0x20] sm:$0xff] %vm2042, %v2726
        %2736 = vst.msk [vmem:[#allocation7 + $0x30] sm:$0xff] %vm2042, %v2728
        %s2737 = scalar_lea.vmem [#allocation4], 5
        %v2738 = vld [vmem:[%s2737] ss:$2 sm:$0xff]
        %s2739 = scalar_lea.vmem [#allocation4], 21
        %v2740 = vld [vmem:[%s2739] ss:$2 sm:$0xff]
        %s2741 = scalar_lea.vmem [#allocation4], 37
        %v2742 = vld [vmem:[%s2741] ss:$2 sm:$0xff]
        %s2743 = scalar_lea.vmem [#allocation4], 53
        %v2744 = vld [vmem:[%s2743] ss:$2 sm:$0xff]
        %2749 = vrot.lane.b32.xlu0 %v2738, 80
        %v2750 = vpop.permute.xlu0 %2749
        %2751 = vrot.lane.b32.xlu0 %v2740, 80
        %v2752 = vpop.permute.xlu0 %2751
        %2753 = vrot.lane.b32.xlu0 %v2742, 80
        %v2754 = vpop.permute.xlu0 %2753
        %2755 = vrot.lane.b32.xlu0 %v2744, 80
        %v2756 = vpop.permute.xlu0 %2755
        %2761 = vst.msk [vmem:[#allocation7] sm:$0xff] %vm2099, %v2750
        %2762 = vst.msk [vmem:[#allocation7 + $0x10] sm:$0xff] %vm2099, %v2752
        %2763 = vst.msk [vmem:[#allocation7 + $0x20] sm:$0xff] %vm2099, %v2754
        %2764 = vst.msk [vmem:[#allocation7 + $0x30] sm:$0xff] %vm2099, %v2756
        %s2765 = scalar_lea.vmem [#allocation4], 6
        %v2766 = vld [vmem:[%s2765] ss:$2 sm:$0xff]
        %s2767 = scalar_lea.vmem [#allocation4], 22
        %v2768 = vld [vmem:[%s2767] ss:$2 sm:$0xff]
        %s2769 = scalar_lea.vmem [#allocation4], 38
        %v2770 = vld [vmem:[%s2769] ss:$2 sm:$0xff]
        %s2771 = scalar_lea.vmem [#allocation4], 54
        %v2772 = vld [vmem:[%s2771] ss:$2 sm:$0xff]
        %2777 = vrot.lane.b32.xlu0 %v2766, 96
        %v2778 = vpop.permute.xlu0 %2777
        %2779 = vrot.lane.b32.xlu0 %v2768, 96
        %v2780 = vpop.permute.xlu0 %2779
        %2781 = vrot.lane.b32.xlu0 %v2770, 96
        %v2782 = vpop.permute.xlu0 %2781
        %2783 = vrot.lane.b32.xlu0 %v2772, 96
        %v2784 = vpop.permute.xlu0 %2783
        %2789 = vst.msk [vmem:[#allocation7] sm:$0xff] %vm2156, %v2778
        %2790 = vst.msk [vmem:[#allocation7 + $0x10] sm:$0xff] %vm2156, %v2780
        %2791 = vst.msk [vmem:[#allocation7 + $0x20] sm:$0xff] %vm2156, %v2782
        %2792 = vst.msk [vmem:[#allocation7 + $0x30] sm:$0xff] %vm2156, %v2784
        %s2793 = scalar_lea.vmem [#allocation4], 7
        %v2794 = vld [vmem:[%s2793] ss:$2 sm:$0xff]
        %s2795 = scalar_lea.vmem [#allocation4], 23
        %v2796 = vld [vmem:[%s2795] ss:$2 sm:$0xff]
        %s2797 = scalar_lea.vmem [#allocation4], 39
        %v2798 = vld [vmem:[%s2797] ss:$2 sm:$0xff]
        %s2799 = scalar_lea.vmem [#allocation4], 55
        %v2800 = vld [vmem:[%s2799] ss:$2 sm:$0xff]
        %2805 = vrot.lane.b32.xlu0 %v2794, 112
        %v2806 = vpop.permute.xlu0 %2805
        %2807 = vrot.lane.b32.xlu0 %v2796, 112
        %v2808 = vpop.permute.xlu0 %2807
        %2809 = vrot.lane.b32.xlu0 %v2798, 112
        %v2810 = vpop.permute.xlu0 %2809
        %2811 = vrot.lane.b32.xlu0 %v2800, 112
        %v2812 = vpop.permute.xlu0 %2811
        %2817 = vst.msk [vmem:[#allocation7] sm:$0xff] %vm2213, %v2806
        %2818 = vst.msk [vmem:[#allocation7 + $0x10] sm:$0xff] %vm2213, %v2808
        %2819 = vst.msk [vmem:[#allocation7 + $0x20] sm:$0xff] %vm2213, %v2810
        %2820 = vst.msk [vmem:[#allocation7 + $0x30] sm:$0xff] %vm2213, %v2812
        %s2821 = scalar_lea.vmem [#allocation4], 8
        %v2822 = vld [vmem:[%s2821] ss:$2 sm:$0xff]
        %s2823 = scalar_lea.vmem [#allocation4], 24
        %v2824 = vld [vmem:[%s2823] ss:$2 sm:$0xff]
        %s2825 = scalar_lea.vmem [#allocation4], 40
        %v2826 = vld [vmem:[%s2825] ss:$2 sm:$0xff]
        %s2827 = scalar_lea.vmem [#allocation4], 56
        %v2828 = vld [vmem:[%s2827] ss:$2 sm:$0xff]
        %2829 = vst.msk [vmem:[#allocation7 + $0x8] sm:$0xff] %vm167, %v2822
        %2830 = vst.msk [vmem:[#allocation7 + $0x18] sm:$0xff] %vm167, %v2824
        %2831 = vst.msk [vmem:[#allocation7 + $0x28] sm:$0xff] %vm167, %v2826
        %2832 = vst.msk [vmem:[#allocation7 + $0x38] sm:$0xff] %vm167, %v2828
        %vm2833 = vcmask 138368
        %2834 = vst.msk [vmem:[#allocation7 + $0x8] sm:$0xff] %vm2833, 1.0
        %2835 = vst.msk [vmem:[#allocation7 + $0x18] sm:$0xff] %vm2833, 1.0
        %2836 = vst.msk [vmem:[#allocation7 + $0x28] sm:$0xff] %vm2833, 1.0
        %2837 = vst.msk [vmem:[#allocation7 + $0x38] sm:$0xff] %vm2833, 1.0
        %v2838 = vld [vmem:[#allocation8 + $0xd8] sm:$0xff]
        %v2839 = vld [vmem:[#allocation8 + $0xe0] sm:$0xff]
        %v2840 = vld [vmem:[#allocation8 + $0xe8] sm:$0xff]
        %v2841 = vld [vmem:[#allocation8 + $0xf0] sm:$0xff]
        %v2842 = vld [vmem:[#allocation8 + $0xf8] sm:$0xff]
        %v2843 = vld [vmem:[#allocation8 + $0x100] sm:$0xff]
        %v2844 = vld [vmem:[#allocation8 + $0x108] sm:$0xff]
        %v2845 = vld [vmem:[#allocation8 + $0x110] sm:$0xff]
        %v2846 = vld [vmem:[#allocation8 + $0x118] sm:$0xff]
        %v2847 = vld [vmem:[#allocation8 + $0x120] sm:$0xff]
        %v2848 = vld [vmem:[#allocation8 + $0x128] sm:$0xff]
        %v2849 = vld [vmem:[#allocation8 + $0x130] sm:$0xff]
        %v2850 = vld [vmem:[#allocation8 + $0x138] sm:$0xff]
        %v2851 = vld [vmem:[#allocation8 + $0x140] sm:$0xff]
        %v2852 = vld [vmem:[#allocation8 + $0x148] sm:$0xff]
        %v2853 = vld [vmem:[#allocation8 + $0x150] sm:$0xff]
        %v2854 = vld [vmem:[#allocation8 + $0x158] sm:$0xff]
        %v2855 = vld [vmem:[#allocation8 + $0x160] sm:$0xff]
        %v2856 = vld [vmem:[#allocation8 + $0x168] sm:$0x1]
        %v2857 = vld [vmem:[#allocation7] sm:$0xff]
        %v2858 = vld [vmem:[#allocation7 + $0x8] sm:$0xff]
        %v2859 = vld [vmem:[#allocation7 + $0x10] sm:$0xff]
        %v2860 = vld [vmem:[#allocation7 + $0x18] sm:$0xff]
        %v2861 = vld [vmem:[#allocation7 + $0x20] sm:$0xff]
        %v2862 = vld [vmem:[#allocation7 + $0x28] sm:$0xff]
        %v2863 = vld [vmem:[#allocation7 + $0x30] sm:$0xff]
        %v2864 = vld [vmem:[#allocation7 + $0x38] sm:$0xff]
        %vm2865 = vcmask 138240
        %v2867 = vsel %vm2865, %v2858, 0
        %v2870 = vsel %vm2865, %v2860, 0
        %v2873 = vsel %vm2865, %v2862, 0
        %v2876 = vsel %vm2865, %v2864, 0
        %v2879 = vsel %vm2489, %v2856, 0
        %2881 = vmatprep.subr.mxu0 0.0
        %2882 = vmatpush1.msra.mxu0 %v2853
        %2883 = vmatprep.subr.mxu0 0.0
        %2884 = vmatpush1.msra.mxu0 %v2852
        %2885 = vmatprep.subr.mxu0 0.0
        %2886 = vmatpush1.msra.mxu0 %v2851
        %2887 = vmatprep.subr.mxu0 0.0
        %2888 = vmatpush1.msra.mxu0 %v2850
        %2889 = vmatprep.subr.mxu0 0.0
        %2890 = vmatpush1.msra.mxu0 %v2849
        %2891 = vmatprep.subr.mxu0 0.0
        %2892 = vmatpush1.msra.mxu0 %v2848
        %2893 = vmatprep.subr.mxu0 0.0
        %2894 = vmatpush1.msra.mxu0 %v2847
        %2895 = vmatprep.subr.mxu0 0.0
        %2896 = vmatpush1.msra.mxu0 %v2846
        %2897 = vmatprep.subr.mxu0 0.0
        %2898 = vmatpush1.msra.mxu0 %v2845
        %2899 = vmatprep.subr.mxu0 0.0
        %2900 = vmatpush1.msra.mxu0 %v2844
        %2901 = vmatprep.subr.mxu0 0.0
        %2902 = vmatpush1.msra.mxu0 %v2843
        %2903 = vmatprep.subr.mxu0 0.0
        %2904 = vmatpush1.msra.mxu0 %v2842
        %2905 = vmatprep.subr.mxu0 0.0
        %2906 = vmatpush1.msra.mxu0 %v2841
        %2907 = vmatprep.subr.mxu0 0.0
        %2908 = vmatpush1.msra.mxu0 %v2840
        %2909 = vmatprep.subr.mxu0 0.0
        %2910 = vmatpush1.msra.mxu0 %v2839
        %2911 = vmatprep.subr.mxu0 0.0
        %2912 = vmatpush1.msra.mxu0 %v2838
        %2913 = vmatprep.subr.mxu0 0.0
        %2914 = vmatpush2.msra.mxu0 0.0
        %2915 = vmatprep.subr.mxu0 0.0
        %2916 = vmatpush2.msra.mxu0 0.0
        %2917 = vmatprep.subr.mxu0 0.0
        %2918 = vmatpush2.msra.mxu0 0.0
        %2919 = vmatprep.subr.mxu0 0.0
        %2920 = vmatpush2.msra.mxu0 0.0
        %2921 = vmatprep.subr.mxu0 0.0
        %2922 = vmatpush2.msra.mxu0 0.0
        %2923 = vmatprep.subr.mxu0 0.0
        %2924 = vmatpush2.msra.mxu0 0.0
        %2925 = vmatprep.subr.mxu0 0.0
        %2926 = vmatpush2.msra.mxu0 0.0
        %2927 = vmatprep.subr.mxu0 0.0
        %2928 = vmatpush2.msra.mxu0 0.0
        %2929 = vmatprep.subr.mxu0 0.0
        %2930 = vmatpush2.msra.mxu0 0.0
        %2931 = vmatprep.subr.mxu0 0.0
        %2932 = vmatpush2.msra.mxu0 0.0
        %2933 = vmatprep.subr.mxu0 0.0
        %2934 = vmatpush2.msra.mxu0 0.0
        %2935 = vmatprep.subr.mxu0 0.0
        %2936 = vmatpush2.msra.mxu0 0.0
        %2937 = vmatprep.subr.mxu0 0.0
        %2938 = vmatpush2.msra.mxu0 0.0
        %2939 = vmatprep.subr.mxu0 0.0
        %2940 = vmatpush2.msra.mxu0 %v2879
        %2941 = vmatprep.subr.mxu0 0.0
        %2942 = vmatpush2.msra.mxu0 %v2855
        %2943 = vmatprep.subr.mxu0 0.0
        %2944 = vmatpush2.msra.mxu0 %v2854
        %2945 = vmatprep.mubr.f32.mxu0 %v2867
        %2946 = vmatmul.mubr.f32.gmra.mxu0 %v2857
        %v2947 = vpop.f32.mrf.mxu0
        %v2948 = vadd.f32 0.0, %v2947
        %v2949 = vpop.f32.mrf.mxu0
        %2950 = vmatprep.mubr.f32.mxu0 %v2870
        %2951 = vmatmul.mubr.f32.gmra.mxu0 %v2859
        %v2952 = vpop.f32.mrf.mxu0
        %v2953 = vadd.f32 0.0, %v2952
        %v2954 = vpop.f32.mrf.mxu0
        %2955 = vmatprep.mubr.f32.mxu0 %v2873
        %2956 = vmatmul.mubr.f32.gmra.mxu0 %v2861
        %v2957 = vpop.f32.mrf.mxu0
        %v2958 = vadd.f32 0.0, %v2957
        %v2959 = vpop.f32.mrf.mxu0
        %2960 = vmatprep.mubr.f32.mxu0 %v2876
        %2961 = vmatmul.mubr.f32.gmra.mxu0 %v2863
        %v2962 = vpop.f32.mrf.mxu0
        %v2963 = vadd.f32 0.0, %v2962
        %v2964 = vpop.f32.mrf.mxu0
        %2965 = vdwg.mxu0
        %v2966 = vmax.f32 %v2948, 0.0
        %v2967 = vmax.f32 %v2953, 0.0
        %v2968 = vmax.f32 %v2958, 0.0
        %v2969 = vmax.f32 %v2963, 0.0
        %vm2970 = vcmask 195584
        %2971 = vst.msk [vmem:[#allocation5 + $0x4] sm:$0xff] %vm2970, %v2966
        %2972 = vst.msk [vmem:[#allocation5 + $0xc] sm:$0xff] %vm2970, %v2967
        %2973 = vst.msk [vmem:[#allocation5 + $0x14] sm:$0xff] %vm2970, %v2968
        %2974 = vst.msk [vmem:[#allocation5 + $0x1c] sm:$0xff] %vm2970, %v2969
        %v2975 = vld [vmem:[#allocation5] ss:$2 sm:$0xff]
        %s2976 = scalar_lea.vmem [#allocation5], 16
        %v2977 = vld [vmem:[%s2976] ss:$2 sm:$0xff]
        %2978 = vst.msk [vmem:[#allocation7] sm:$0xff] %vm2970, %v2975
        %2979 = vst.msk [vmem:[#allocation7 + $0x10] sm:$0xff] %vm2970, %v2977
        %s2980 = scalar_lea.vmem [#allocation5], 1
        %v2981 = vld [vmem:[%s2980] ss:$2 sm:$0xff]
        %s2982 = scalar_lea.vmem [#allocation5], 17
        %v2983 = vld [vmem:[%s2982] ss:$2 sm:$0xff]
        %2986 = vrot.lane.b32.xlu0 %v2981, 24
        %v2987 = vpop.permute.xlu0 %2986
        %2988 = vrot.lane.b32.xlu0 %v2983, 24
        %v2989 = vpop.permute.xlu0 %2988
        %vm2992 = vcmask 392384
        %2993 = vst.msk [vmem:[#allocation7] sm:$0xff] %vm2992, %v2987
        %2994 = vst.msk [vmem:[#allocation7 + $0x10] sm:$0xff] %vm2992, %v2989
        %s2995 = scalar_lea.vmem [#allocation5], 2
        %v2996 = vld [vmem:[%s2995] ss:$2 sm:$0xff]
        %s2997 = scalar_lea.vmem [#allocation5], 18
        %v2998 = vld [vmem:[%s2997] ss:$2 sm:$0xff]
        %3001 = vrot.lane.b32.xlu0 %v2996, 48
        %v3002 = vpop.permute.xlu0 %3001
        %3003 = vrot.lane.b32.xlu0 %v2998, 48
        %v3004 = vpop.permute.xlu0 %3003
        %vm3007 = vcmask 589184
        %3008 = vst.msk [vmem:[#allocation7] sm:$0xff] %vm3007, %v3002
        %3009 = vst.msk [vmem:[#allocation7 + $0x10] sm:$0xff] %vm3007, %v3004
        %s3010 = scalar_lea.vmem [#allocation5], 3
        %v3011 = vld [vmem:[%s3010] ss:$2 sm:$0xff]
        %s3012 = scalar_lea.vmem [#allocation5], 19
        %v3013 = vld [vmem:[%s3012] ss:$2 sm:$0xff]
        %3016 = vrot.lane.b32.xlu0 %v3011, 72
        %v3017 = vpop.permute.xlu0 %3016
        %3018 = vrot.lane.b32.xlu0 %v3013, 72
        %v3019 = vpop.permute.xlu0 %3018
        %vm3022 = vcmask 785984
        %3023 = vst.msk [vmem:[#allocation7] sm:$0xff] %vm3022, %v3017
        %3024 = vst.msk [vmem:[#allocation7 + $0x10] sm:$0xff] %vm3022, %v3019
        %s3025 = scalar_lea.vmem [#allocation5], 4
        %v3026 = vld [vmem:[%s3025] ss:$2 sm:$0xff]
        %s3027 = scalar_lea.vmem [#allocation5], 20
        %v3028 = vld [vmem:[%s3027] ss:$2 sm:$0xff]
        %3031 = vrot.lane.b32.xlu0 %v3026, 96
        %v3032 = vpop.permute.xlu0 %3031
        %3033 = vrot.lane.b32.xlu0 %v3028, 96
        %v3034 = vpop.permute.xlu0 %3033
        %vm3037 = vcmask 982784
        %3038 = vst.msk [vmem:[#allocation7] sm:$0xff] %vm3037, %v3032
        %3039 = vst.msk [vmem:[#allocation7 + $0x10] sm:$0xff] %vm3037, %v3034
        %s3040 = scalar_lea.vmem [#allocation5], 5
        %v3041 = vld [vmem:[%s3040] ss:$2 sm:$0xff]
        %s3042 = scalar_lea.vmem [#allocation5], 21
        %v3043 = vld [vmem:[%s3042] ss:$2 sm:$0xff]
        %3046 = vrot.lane.b32.xlu0 %v3041, 120
        %v3047 = vpop.permute.xlu0 %3046
        %3048 = vrot.lane.b32.xlu0 %v3043, 120
        %v3049 = vpop.permute.xlu0 %3048
        %vm3052 = vcmask 1048512
        %3053 = vst.msk [vmem:[#allocation7] sm:$0xff] %vm3052, %v3047
        %3054 = vst.msk [vmem:[#allocation7 + $0x8] sm:$0xff] %vm167, %v3047
        %3055 = vst.msk [vmem:[#allocation7 + $0x10] sm:$0xff] %vm3052, %v3049
        %3056 = vst.msk [vmem:[#allocation7 + $0x18] sm:$0xff] %vm167, %v3049
        %s3057 = scalar_lea.vmem [#allocation5], 6
        %v3058 = vld [vmem:[%s3057] ss:$2 sm:$0xff]
        %s3059 = scalar_lea.vmem [#allocation5], 22
        %v3060 = vld [vmem:[%s3059] ss:$2 sm:$0xff]
        %3063 = vrot.lane.b32.xlu0 %v3058, 16
        %v3064 = vpop.permute.xlu0 %3063
        %3065 = vrot.lane.b32.xlu0 %v3060, 16
        %v3066 = vpop.permute.xlu0 %3065
        %vm3069 = vcmask 326784
        %3070 = vst.msk [vmem:[#allocation7 + $0x8] sm:$0xff] %vm3069, %v3064
        %3071 = vst.msk [vmem:[#allocation7 + $0x18] sm:$0xff] %vm3069, %v3066
        %s3072 = scalar_lea.vmem [#allocation5], 7
        %v3073 = vld [vmem:[%s3072] ss:$2 sm:$0xff]
        %s3074 = scalar_lea.vmem [#allocation5], 23
        %v3075 = vld [vmem:[%s3074] ss:$2 sm:$0xff]
        %3078 = vrot.lane.b32.xlu0 %v3073, 40
        %v3079 = vpop.permute.xlu0 %3078
        %3080 = vrot.lane.b32.xlu0 %v3075, 40
        %v3081 = vpop.permute.xlu0 %3080
        %vm3084 = vcmask 523584
        %3085 = vst.msk [vmem:[#allocation7 + $0x8] sm:$0xff] %vm3084, %v3079
        %3086 = vst.msk [vmem:[#allocation7 + $0x18] sm:$0xff] %vm3084, %v3081
        %s3087 = scalar_lea.vmem [#allocation5], 8
        %v3088 = vld [vmem:[%s3087] ss:$2 sm:$0xff]
        %s3089 = scalar_lea.vmem [#allocation5], 24
        %v3090 = vld [vmem:[%s3089] ss:$2 sm:$0xff]
        %3093 = vrot.lane.b32.xlu0 %v3088, 64
        %v3094 = vpop.permute.xlu0 %3093
        %3095 = vrot.lane.b32.xlu0 %v3090, 64
        %v3096 = vpop.permute.xlu0 %3095
        %vm3099 = vcmask 720384
        %3100 = vst.msk [vmem:[#allocation7 + $0x8] sm:$0xff] %vm3099, %v3094
        %3101 = vst.msk [vmem:[#allocation7 + $0x18] sm:$0xff] %vm3099, %v3096
        %vm3102 = vcmask 728768
        %3103 = vst.msk [vmem:[#allocation7 + $0x8] sm:$0xff] %vm3102, 1.0
        %3104 = vst.msk [vmem:[#allocation7 + $0x18] sm:$0xff] %vm3102, 1.0
        %v3105 = vld [vmem:[#allocation8 + $0x170] sm:$0xff]
        %v3106 = vld [vmem:[#allocation8 + $0x178] sm:$0xff]
        %v3107 = vld [vmem:[#allocation8 + $0x180] sm:$0xff]
        %v3108 = vld [vmem:[#allocation8 + $0x188] sm:$0xff]
        %v3109 = vld [vmem:[#allocation8 + $0x190] sm:$0xff]
        %v3110 = vld [vmem:[#allocation8 + $0x198] sm:$0xff]
        %v3111 = vld [vmem:[#allocation8 + $0x1a0] sm:$0xff]
        %v3112 = vld [vmem:[#allocation8 + $0x1a8] sm:$0xff]
        %v3113 = vld [vmem:[#allocation8 + $0x1b0] sm:$0xff]
        %v3114 = vld [vmem:[#allocation8 + $0x1b8] sm:$0xff]
        %v3115 = vld [vmem:[#allocation8 + $0x1c0] sm:$0xff]
        %v3116 = vld [vmem:[#allocation8 + $0x1c8] sm:$0xff]
        %v3117 = vld [vmem:[#allocation8 + $0x1d0] sm:$0xff]
        %v3118 = vld [vmem:[#allocation8 + $0x1d8] sm:$0xff]
        %v3119 = vld [vmem:[#allocation8 + $0x1e0] sm:$0xff]
        %v3120 = vld [vmem:[#allocation8 + $0x1e8] sm:$0xff]
        %v3121 = vld [vmem:[#allocation8 + $0x1f0] sm:$0xff]
        %v3122 = vld [vmem:[#allocation8 + $0x1f8] sm:$0xff]
        %v3123 = vld [vmem:[#allocation8 + $0x200] sm:$0xff]
        %v3124 = vld [vmem:[#allocation8 + $0x208] sm:$0xff]
        %v3125 = vld [vmem:[#allocation8 + $0x210] sm:$0xff]
        %v3126 = vld [vmem:[#allocation8 + $0x218] sm:$0xff]
        %v3127 = vld [vmem:[#allocation8 + $0x220] sm:$0xff]
        %v3128 = vld [vmem:[#allocation8 + $0x228] sm:$0xff]
        %v3129 = vld [vmem:[#allocation8 + $0x230] sm:$0xff]
        %v3130 = vld [vmem:[#allocation8 + $0x238] sm:$0xff]
        %v3131 = vld [vmem:[#allocation8 + $0x240] sm:$0xff]
        %v3132 = vld [vmem:[#allocation8 + $0x248] sm:$0x1]
        %v3133 = vld [vmem:[#allocation7] sm:$0xff]
        %v3134 = vld [vmem:[#allocation7 + $0x8] sm:$0xff]
        %v3135 = vld [vmem:[#allocation7 + $0x10] sm:$0xff]
        %v3136 = vld [vmem:[#allocation7 + $0x18] sm:$0xff]
        %vm3137 = vcmask 728064
        %v3139 = vsel %vm3137, %v3134, 0
        %v3142 = vsel %vm3137, %v3136, 0
        %v3145 = vsel %vm2489, %v3132, 0
        %3147 = vmatprep.subr.mxu0 0.0
        %3148 = vmatpush1.msra.mxu0 %v3120
        %3149 = vmatprep.subr.mxu0 0.0
        %3150 = vmatpush1.msra.mxu0 %v3119
        %3151 = vmatprep.subr.mxu0 0.0
        %3152 = vmatpush1.msra.mxu0 %v3118
        %3153 = vmatprep.subr.mxu0 0.0
        %3154 = vmatpush1.msra.mxu0 %v3117
        %3155 = vmatprep.subr.mxu0 0.0
        %3156 = vmatpush1.msra.mxu0 %v3116
        %3157 = vmatprep.subr.mxu0 0.0
        %3158 = vmatpush1.msra.mxu0 %v3115
        %3159 = vmatprep.subr.mxu0 0.0
        %3160 = vmatpush1.msra.mxu0 %v3114
        %3161 = vmatprep.subr.mxu0 0.0
        %3162 = vmatpush1.msra.mxu0 %v3113
        %3163 = vmatprep.subr.mxu0 0.0
        %3164 = vmatpush1.msra.mxu0 %v3112
        %3165 = vmatprep.subr.mxu0 0.0
        %3166 = vmatpush1.msra.mxu0 %v3111
        %3167 = vmatprep.subr.mxu0 0.0
        %3168 = vmatpush1.msra.mxu0 %v3110
        %3169 = vmatprep.subr.mxu0 0.0
        %3170 = vmatpush1.msra.mxu0 %v3109
        %3171 = vmatprep.subr.mxu0 0.0
        %3172 = vmatpush1.msra.mxu0 %v3108
        %3173 = vmatprep.subr.mxu0 0.0
        %3174 = vmatpush1.msra.mxu0 %v3107
        %3175 = vmatprep.subr.mxu0 0.0
        %3176 = vmatpush1.msra.mxu0 %v3106
        %3177 = vmatprep.subr.mxu0 0.0
        %3178 = vmatpush1.msra.mxu0 %v3105
        %3179 = vmatprep.subr.mxu0 0.0
        %3180 = vmatpush2.msra.mxu0 0.0
        %3181 = vmatprep.subr.mxu0 0.0
        %3182 = vmatpush2.msra.mxu0 0.0
        %3183 = vmatprep.subr.mxu0 0.0
        %3184 = vmatpush2.msra.mxu0 0.0
        %3185 = vmatprep.subr.mxu0 0.0
        %3186 = vmatpush2.msra.mxu0 0.0
        %3187 = vmatprep.subr.mxu0 0.0
        %3188 = vmatpush2.msra.mxu0 %v3145
        %3189 = vmatprep.subr.mxu0 0.0
        %3190 = vmatpush2.msra.mxu0 %v3131
        %3191 = vmatprep.subr.mxu0 0.0
        %3192 = vmatpush2.msra.mxu0 %v3130
        %3193 = vmatprep.subr.mxu0 0.0
        %3194 = vmatpush2.msra.mxu0 %v3129
        %3195 = vmatprep.subr.mxu0 0.0
        %3196 = vmatpush2.msra.mxu0 %v3128
        %3197 = vmatprep.subr.mxu0 0.0
        %3198 = vmatpush2.msra.mxu0 %v3127
        %3199 = vmatprep.subr.mxu0 0.0
        %3200 = vmatpush2.msra.mxu0 %v3126
        %3201 = vmatprep.subr.mxu0 0.0
        %3202 = vmatpush2.msra.mxu0 %v3125
        %3203 = vmatprep.subr.mxu0 0.0
        %3204 = vmatpush2.msra.mxu0 %v3124
        %3205 = vmatprep.subr.mxu0 0.0
        %3206 = vmatpush2.msra.mxu0 %v3123
        %3207 = vmatprep.subr.mxu0 0.0
        %3208 = vmatpush2.msra.mxu0 %v3122
        %3209 = vmatprep.subr.mxu0 0.0
        %3210 = vmatpush2.msra.mxu0 %v3121
        %3211 = vmatprep.mubr.f32.mxu0 %v3139
        %3212 = vmatmul.mubr.f32.gmra.mxu0 %v3133
        %v3213 = vpop.f32.mrf.mxu0
        %v3214 = vadd.f32 0.0, %v3213
        %v3215 = vpop.f32.mrf.mxu0
        %3216 = vmatprep.mubr.f32.mxu0 %v3142
        %3217 = vmatmul.mubr.f32.gmra.mxu0 %v3135
        %v3218 = vpop.f32.mrf.mxu0
        %v3219 = vadd.f32 0.0, %v3218
        %v3220 = vpop.f32.mrf.mxu0
        %3221 = vdwg.mxu0
        %v3222 = vmax.f32 %v3214, 0.0
        %v3223 = vmax.f32 %v3219, 0.0
        %3224 = vst.msk [vmem:[#allocation6 + $0x2] sm:$0xff] %vm2970, %v3222
        %3225 = vst.msk [vmem:[#allocation6 + $0xa] sm:$0xff] %vm2970, %v3223
        %v3226 = vld [vmem:[#allocation6] ss:$2 sm:$0xff]
        %3227 = vst.msk [vmem:[#allocation7] sm:$0xff] %vm2970, %v3226
        %s3228 = scalar_lea.vmem [#allocation6], 1
        %v3229 = vld [vmem:[%s3228] ss:$2 sm:$0xff]
        %3231 = vrot.lane.b32.xlu0 %v3229, 24
        %v3232 = vpop.permute.xlu0 %3231
        %3234 = vst.msk [vmem:[#allocation7] sm:$0xff] %vm2992, %v3232
        %s3235 = scalar_lea.vmem [#allocation6], 2
        %v3236 = vld [vmem:[%s3235] ss:$2 sm:$0xff]
        %3238 = vrot.lane.b32.xlu0 %v3236, 48
        %v3239 = vpop.permute.xlu0 %3238
        %3241 = vst.msk [vmem:[#allocation7] sm:$0xff] %vm3007, %v3239
        %s3242 = scalar_lea.vmem [#allocation6], 3
        %v3243 = vld [vmem:[%s3242] ss:$2 sm:$0xff]
        %3245 = vrot.lane.b32.xlu0 %v3243, 72
        %v3246 = vpop.permute.xlu0 %3245
        %3248 = vst.msk [vmem:[#allocation7] sm:$0xff] %vm3022, %v3246
        %s3249 = scalar_lea.vmem [#allocation6], 4
        %v3250 = vld [vmem:[%s3249] ss:$2 sm:$0xff]
        %3252 = vrot.lane.b32.xlu0 %v3250, 96
        %v3253 = vpop.permute.xlu0 %3252
        %3255 = vst.msk [vmem:[#allocation7] sm:$0xff] %vm3037, %v3253
        %s3256 = scalar_lea.vmem [#allocation6], 5
        %v3257 = vld [vmem:[%s3256] ss:$2 sm:$0xff]
        %3259 = vrot.lane.b32.xlu0 %v3257, 120
        %v3260 = vpop.permute.xlu0 %3259
        %3262 = vst.msk [vmem:[#allocation7] sm:$0xff] %vm3052, %v3260
        %3263 = vst.msk [vmem:[#allocation7 + $0x8] sm:$0xff] %vm167, %v3260
        %3264 = vst.msk [vmem:[#allocation7 + $0x8] sm:$0xff] %vm2833, 1.0
        %v3265 = vld [vmem:[#allocation8 + $0x250] sm:$0xff]
        %v3266 = vld [vmem:[#allocation8 + $0x258] sm:$0xff]
        %v3267 = vld [vmem:[#allocation8 + $0x260] sm:$0xff]
        %v3268 = vld [vmem:[#allocation8 + $0x268] sm:$0xff]
        %v3269 = vld [vmem:[#allocation8 + $0x270] sm:$0xff]
        %v3270 = vld [vmem:[#allocation8 + $0x278] sm:$0xff]
        %v3271 = vld [vmem:[#allocation8 + $0x280] sm:$0xff]
        %v3272 = vld [vmem:[#allocation8 + $0x288] sm:$0xff]
        %v3273 = vld [vmem:[#allocation8 + $0x290] sm:$0xff]
        %v3274 = vld [vmem:[#allocation8 + $0x298] sm:$0xff]
        %v3275 = vld [vmem:[#allocation8 + $0x2a0] sm:$0xff]
        %v3276 = vld [vmem:[#allocation8 + $0x2a8] sm:$0xff]
        %v3277 = vld [vmem:[#allocation8 + $0x2b0] sm:$0xff]
        %v3278 = vld [vmem:[#allocation8 + $0x2b8] sm:$0xff]
        %v3279 = vld [vmem:[#allocation8 + $0x2c0] sm:$0xff]
        %v3280 = vld [vmem:[#allocation8 + $0x2c8] sm:$0xff]
        %v3281 = vld [vmem:[#allocation8 + $0x2d0] sm:$0xff]
        %v3282 = vld [vmem:[#allocation8 + $0x2d8] sm:$0xff]
        %v3283 = vld [vmem:[#allocation8 + $0x2e0] sm:$0x1]
        %v3284 = vld [vmem:[#allocation7] sm:$0xff]
        %v3285 = vld [vmem:[#allocation7 + $0x8] sm:$0xff]
        %v3287 = vsel %vm2865, %v3285, 0
        %v3290 = vsel %vm2489, %v3283, 0
        %3292 = vmatprep.subr.mxu0 0.0
        %3293 = vmatpush1.msra.mxu0 %v3280
        %3294 = vmatprep.subr.mxu0 0.0
        %3295 = vmatpush1.msra.mxu0 %v3279
        %3296 = vmatprep.subr.mxu0 0.0
        %3297 = vmatpush1.msra.mxu0 %v3278
        %3298 = vmatprep.subr.mxu0 0.0
        %3299 = vmatpush1.msra.mxu0 %v3277
        %3300 = vmatprep.subr.mxu0 0.0
        %3301 = vmatpush1.msra.mxu0 %v3276
        %3302 = vmatprep.subr.mxu0 0.0
        %3303 = vmatpush1.msra.mxu0 %v3275
        %3304 = vmatprep.subr.mxu0 0.0
        %3305 = vmatpush1.msra.mxu0 %v3274
        %3306 = vmatprep.subr.mxu0 0.0
        %3307 = vmatpush1.msra.mxu0 %v3273
        %3308 = vmatprep.subr.mxu0 0.0
        %3309 = vmatpush1.msra.mxu0 %v3272
        %3310 = vmatprep.subr.mxu0 0.0
        %3311 = vmatpush1.msra.mxu0 %v3271
        %3312 = vmatprep.subr.mxu0 0.0
        %3313 = vmatpush1.msra.mxu0 %v3270
        %3314 = vmatprep.subr.mxu0 0.0
        %3315 = vmatpush1.msra.mxu0 %v3269
        %3316 = vmatprep.subr.mxu0 0.0
        %3317 = vmatpush1.msra.mxu0 %v3268
        %3318 = vmatprep.subr.mxu0 0.0
        %3319 = vmatpush1.msra.mxu0 %v3267
        %3320 = vmatprep.subr.mxu0 0.0
        %3321 = vmatpush1.msra.mxu0 %v3266
        %3322 = vmatprep.subr.mxu0 0.0
        %3323 = vmatpush1.msra.mxu0 %v3265
        %3324 = vmatprep.subr.mxu0 0.0
        %3325 = vmatpush2.msra.mxu0 0.0
        %3326 = vmatprep.subr.mxu0 0.0
        %3327 = vmatpush2.msra.mxu0 0.0
        %3328 = vmatprep.subr.mxu0 0.0
        %3329 = vmatpush2.msra.mxu0 0.0
        %3330 = vmatprep.subr.mxu0 0.0
        %3331 = vmatpush2.msra.mxu0 0.0
        %3332 = vmatprep.subr.mxu0 0.0
        %3333 = vmatpush2.msra.mxu0 0.0
        %3334 = vmatprep.subr.mxu0 0.0
        %3335 = vmatpush2.msra.mxu0 0.0
        %3336 = vmatprep.subr.mxu0 0.0
        %3337 = vmatpush2.msra.mxu0 0.0
        %3338 = vmatprep.subr.mxu0 0.0
        %3339 = vmatpush2.msra.mxu0 0.0
        %3340 = vmatprep.subr.mxu0 0.0
        %3341 = vmatpush2.msra.mxu0 0.0
        %3342 = vmatprep.subr.mxu0 0.0
        %3343 = vmatpush2.msra.mxu0 0.0
        %3344 = vmatprep.subr.mxu0 0.0
        %3345 = vmatpush2.msra.mxu0 0.0
        %3346 = vmatprep.subr.mxu0 0.0
        %3347 = vmatpush2.msra.mxu0 0.0
        %3348 = vmatprep.subr.mxu0 0.0
        %3349 = vmatpush2.msra.mxu0 0.0
        %3350 = vmatprep.subr.mxu0 0.0
        %3351 = vmatpush2.msra.mxu0 %v3290
        %3352 = vmatprep.subr.mxu0 0.0
        %3353 = vmatpush2.msra.mxu0 %v3282
        %3354 = vmatprep.subr.mxu0 0.0
        %3355 = vmatpush2.msra.mxu0 %v3281
        %3356 = vmatprep.mubr.f32.mxu0 %v3287
        %3357 = vmatmul.mubr.f32.gmra.mxu0 %v3284
        %v3358 = vpop.f32.mrf.mxu0
        %v3359 = vadd.f32 0.0, %v3358
        %v3360 = vpop.f32.mrf.mxu0
        %3361 = vdwg.mxu0
        %v3362 = vmax.f32 %v3359, 0.0
        %3363 = vxpose.xlu0.b32.start [1/16] %v3362, 128
        %3364 = vxpose.xlu0.b32.cont [2/16] 0.0, 128
        %3365 = vxpose.xlu0.b32.cont [3/16] 0.0, 128
        %3366 = vxpose.xlu0.b32.cont [4/16] 0.0, 128
        %3367 = vxpose.xlu0.b32.cont [5/16] 0.0, 128
        %3368 = vxpose.xlu0.b32.cont [6/16] 0.0, 128
        %3369 = vxpose.xlu0.b32.cont [7/16] 0.0, 128
        %3370 = vxpose.xlu0.b32.cont [8/16] 0.0, 128
        %3371 = vxpose.xlu0.b32.cont [9/16] 0.0, 128
        %3372 = vxpose.xlu0.b32.cont [10/16] 0.0, 128
        %3373 = vxpose.xlu0.b32.cont [11/16] 0.0, 128
        %3374 = vxpose.xlu0.b32.cont [12/16] 0.0, 128
        %3375 = vxpose.xlu0.b32.cont [13/16] 0.0, 128
        %3376 = vxpose.xlu0.b32.cont [14/16] 0.0, 128
        %3377 = vxpose.xlu0.b32.cont [15/16] 0.0, 128
        %3378 = vxpose.xlu0.b32.end [16/16] 0.0, 128
        %v3379 = vpop.trf.xlu0
        %v3380 = vpop.trf.xlu0
        %v3381 = vpop.trf.xlu0
        %v3382 = vpop.trf.xlu0
        %v3383 = vpop.trf.xlu0
        %v3384 = vpop.trf.xlu0
        %v3385 = vpop.trf.xlu0
        %v3386 = vpop.trf.xlu0
        %v3387 = vpop.trf.xlu0
        %v3388 = vpop.trf.xlu0
        %v3389 = vpop.trf.xlu0
        %v3390 = vpop.trf.xlu0
        %v3391 = vpop.trf.xlu0
        %v3392 = vpop.trf.xlu0
        %v3393 = vpop.trf.xlu0
        %v3394 = vpop.trf.xlu0
        %vm3395 = vcmask 64512
        %3396 = vst.msk [vmem:[%s158] sm:$0xff] %vm3395, %v3379
        %3397 = vst.msk [vmem:[%s158 + $0x8] sm:$0xff] %vm3395, %v3380
        %3398 = vst.msk [vmem:[%s158 + $0x10] sm:$0xff] %vm3395, %v3381
        %3399 = vst.msk [vmem:[%s158 + $0x18] sm:$0xff] %vm3395, %v3382
        %p3400 = scmp.lt.s32.totalorder %s14, 1
        %s3401 = scalar_select %p3400, %s14, 1
        %s3402 = smul.addr %s3401, 4
        %s3403 = smul.addr %s3402, 8
        %s3404 = scalar_lea.vmem %s2, %s3403
        // Predicated region
        $region33: #{_lambda_.1} parent=27 // pred_check
          %p3405 = pneg %p79
        $region34: #{_lambda_.1} parent=27 // pred_check_branch
          %3407 = sbr.rel (%p3405) target = $region36
        $region35: #{_lambda_.1} parent=27 // pred_region
          _
        $region36: #{_lambda_.1} parent=27 // pred_fallthru
          _
      $region28: #{_lambda_.1} parent=5 // pred_fallthru
        _
      %p3408 = scmp.le.s32.totalorder 2, %s9
      // Predicated region
      $region37: #{_lambda_.1} parent=5 // pred_check
        %p3409 = pneg %p3408
      $region38: #{_lambda_.1} parent=5 // pred_check_branch
        %3411 = sbr.rel (%p3409) target = $region40
      $region39: #{_lambda_.1} parent=5 // pred_region
        %s3412 = ssub.s32 %s9, 2
        // Predicated region
        $region41: #{_lambda_.1} parent=39 // pred_check
          %p3413 = pneg %p85
        $region42: #{_lambda_.1} parent=39 // pred_check_branch
          %3415 = sbr.rel (%p3413) target = $region44
        $region43: #{_lambda_.1} parent=39 // pred_region
          %p3416 = scmp.lt.s32.totalorder %s15, 1
          %s3417 = scalar_select %p3416, %s15, 1
          %s3418 = smul.addr %s3417, 4
          %s3419 = smul.addr %s3418, 8
          %s3420 = scalar_lea.vmem %s2, %s3419
        $region44: #{_lambda_.1} parent=39 // pred_fallthru
          _
      $region40: #{_lambda_.1} parent=5 // pred_fallthru
        _
    $region6: #{_lambda_.1} parent=1 // loop_footer
      %s13 = sadd.s32 1, %s9
    $region7: #{_lambda_.1} parent=1 // loop_footer_branch
      %8 = sbr.rel target = $region3
    $region8: #{_lambda_.1} parent=1 // loop_exit
      _
    %3421 = vsyncpa [#allocation9], 1
    %s3422 = scalar_lea.sflag [#allocation9], 1
    %3423 = vsyncpa %s3422, 1

</llo_original>
